<compile_context>
chip_gen: v5e
topology: v5e:2x2
jax: 0.10.0
libtpu: 0.0.40
codegen_flags: <defaults>
</compile_context>

<pallas_src>
import math
import functools

import jax
import jax.numpy as jnp
from jax.experimental import pallas as pl
from jax.experimental.pallas import tpu as pltpu

N_VEC_ROWS = 18  # packed (1, .) parameter rows per TimesFormerLayer


def pack_params(layer_params, D, K, compute_dtype):
    """Pack all per-layer parameters into 3 dense arrays (wrapper side, free)."""
    attn_blocks = []      # per attention: [Wq | Wk | Wv | Wo]  -> (D, 4D)
    convff_blocks = []    # per layer: [conv_w (K*D,D) ; ff_w (D,D)] -> ((K+1)*D, D)
    vec_rows = []         # per layer: 18 rows of width 3D (D-wide rows zero padded)

    def pad_row(v):
        w = v.shape[-1]
        if w < 3 * D:
            v = jnp.pad(v, ((0, 0), (0, 3 * D - w)))
        return v

    for p in layer_params:
        for name in ("m1", "c1", "c2"):
            attn_blocks.append(jnp.concatenate([p[f"{name}_w"], p[f"{name}_ow"]], axis=-1))
        convff_blocks.append(
            jnp.concatenate([p["conv_w"].reshape(K * D, D), p["ff_w"]], axis=0))
        vec_rows += [pad_row(p["conv_b"]), pad_row(p["g_tcn"]), pad_row(p["b_tcn"])]
        for name in ("m1", "c1", "c2"):
            vec_rows += [pad_row(p[f"{name}_b"]), pad_row(p[f"{name}_ob"])]
        vec_rows += [pad_row(p[k]) for k in
                     ("g1", "b1", "ff_b", "g_ff", "b_ff", "g2", "b2", "g3", "b3")]

    attn_w = jnp.stack(attn_blocks).astype(compute_dtype)      # (3*n_layers, D, 4D)
    convff_w = jnp.stack(convff_blocks).astype(compute_dtype)  # (n_layers, (K+1)*D, D)
    vecs = jnp.concatenate(vec_rows, axis=0)                   # (18*n_layers, 3D) f32
    return attn_w, convff_w, vecs


def make_kernel(B, L, D, H, K, dilations, compute_dtype=jnp.float32, eps=1e-5):
    N = B * L
    Dh = D // H
    scale = 1.0 / math.sqrt(Dh)

    def cast(a):
        return a.astype(compute_dtype)

    def mm(a, b):
        return jnp.dot(cast(a), cast(b), preferred_element_type=jnp.float32)

    def layernorm(x, g, b):
        mu = jnp.mean(x, axis=-1, keepdims=True)
        xc = x - mu
        var = jnp.mean(xc * xc, axis=-1, keepdims=True)
        return xc * jax.lax.rsqrt(var + eps) * g + b

    def kernel(x_ref, attn_ref, convff_ref, vec_ref, out_ref):
        # All activations live as a (N = B*L, D) sublane stack; row r = b*L + l.
        x = x_ref[...].astype(jnp.float32)

        # Compile-time position / batch masks (iota + splat constants only, hoisted).
        pos = jnp.concatenate(
            [jax.lax.broadcasted_iota(jnp.int32, (L, D), 0)] * B, axis=0)      # (N, D)
        row_b = jnp.concatenate(
            [jnp.full((L, 1), b, jnp.int32) for b in range(B)], axis=0)        # (N, 1)
        col_b = jnp.concatenate(
            [jnp.full((1, L), b, jnp.int32) for b in range(B)], axis=1)        # (1, N)
        same_batch = row_b == col_b                                            # (N, N)

        def mha(q_in, kv_in, a_idx, brow):
            # Fused lane-major projections: one Q matmul + one KV matmul + one out matmul.
            wq = attn_ref[a_idx, :, 0:D]
            wkv = attn_ref[a_idx, :, D:3 * D]
            wo = attn_ref[a_idx, :, 3 * D:4 * D]
            bq = vec_ref[brow:brow + 1, 0:D]
            bkv = vec_ref[brow:brow + 1, D:3 * D]
            bo = vec_ref[brow + 1:brow + 2, 0:D]
            q = mm(q_in, wq) + bq                      # (N, D)
            kv = mm(kv_in, wkv) + bkv                  # (N, 2D): [K | V]
            heads = []
            for h in range(H):
                qh = q[:, h * Dh:(h + 1) * Dh] * scale
                kh = kv[:, h * Dh:(h + 1) * Dh]
                vh = kv[:, D + h * Dh:D + (h + 1) * Dh]
                s = jnp.einsum("qe,ke->qk", cast(qh), cast(kh),
                               preferred_element_type=jnp.float32)             # (N, N)
                s = jnp.where(same_batch, s, -1e30)    # no cross-batch attention
                s = s - jnp.max(s, axis=-1, keepdims=True)
                e = jnp.exp(s)
                p = e / jnp.sum(e, axis=-1, keepdims=True)   # exact divide (torch parity)
                heads.append(mm(p, vh))                # (N, Dh)
            o = jnp.concatenate(heads, axis=-1)        # (N, D) lane-concat heads
            return mm(o, wo) + bo

        def conv_same(xin, li, dil, conv_b):
            # im2col: K rolled+masked copies lane-concatenated, one (N,K*D)@(K*D,D) matmul.
            total = dil * (K - 1)
            left = total // 2
            cols = []
            for k in range(K):
                s = k * dil - left                     # y[l] = x[l + s] (zero outside)
                if s == 0:
                    cols.append(xin)
                else:
                    rolled = pltpu.roll(xin, shift=(-s) % N, axis=0)
                    ok = jnp.logical_and(pos + s >= 0, pos + s < L)
                    cols.append(jnp.where(ok, rolled, 0.0))
            xim = jnp.concatenate(cols, axis=-1)       # (N, K*D)
            w = convff_ref[li, 0:K * D, :]             # (K*D, D)
            return mm(xim, w) + conv_b

        tcn = x
        trans = x
        for li, dil in enumerate(dilations):
            vb = li * N_VEC_ROWS

            def vrow(i, w=D, _vb=vb):
                return vec_ref[_vb + i:_vb + i + 1, 0:w]

            # ---- TCN branch: dilated 'same' conv -> ReLU -> LayerNorm ------------
            tcn_h = layernorm(jnp.maximum(conv_same(tcn, li, dil, vrow(0)), 0.0),
                              vrow(1), vrow(2))
            # dropout == identity (eval mode)

            # ---- Transformer branch: self-attn -> add&norm -> FF -> norm ----------
            x_att = mha(trans, trans, li * 3 + 0, vb + 3)
            x1 = layernorm(x_att + trans, vrow(9), vrow(10))
            ff_w = convff_ref[li, K * D:(K + 1) * D, :]
            x_ff = jnp.maximum(mm(x1, ff_w) + vrow(11), 0.0)
            x_ff = layernorm(x_ff, vrow(12), vrow(13))
            trans_h = x_ff + x1

            # ---- Cross attentions --------------------------------------------------
            ca1 = mha(trans_h, tcn_h, li * 3 + 1, vb + 5)
            new_trans = layernorm(ca1 + trans_h, vrow(14), vrow(15))
            ca2 = mha(tcn_h, trans_h, li * 3 + 2, vb + 7)
            new_tcn = layernorm(ca2 + tcn_h, vrow(16), vrow(17))
            tcn, trans = new_tcn, new_trans

        out_ref[...] = jnp.concatenate([tcn, trans], axis=-1).astype(out_ref.dtype)

    return kernel


def timesformer_decoder(x, layer_params, final_w_t, final_b, *,
                        dilations, num_heads, k_size, use_bf16=False):
    """TimesFormerDecoder forward: one fused pallas_call + one XLA GEMM for the final Linear."""
    B, L, D = x.shape
    out_dim = final_w_t.shape[1]                    # ts_len * 10
    compute_dtype = jnp.bfloat16 if use_bf16 else jnp.float32

    attn_w, convff_w, vecs = pack_params(layer_params, D, k_size, compute_dtype)
    kernel = make_kernel(B, L, D, num_heads, k_size, tuple(dilations),
                         compute_dtype=compute_dtype)

    N = B * L
    x2 = x.reshape(N, D)                            # stack batch rows on sublanes (free, in XLA)

    def fs(shape):
        nd = len(shape)
        return pl.BlockSpec(shape, lambda i, _nd=nd: (0,) * _nd)

    # Single grid step: weights staged once, whole batch processed together.
    # TODO(synk): for realistic L/D, re-introduce a batch-chunk grid axis and
    #             pipeline_mode=pl.Buffered(1) on the constant weight specs (v7x 64 MiB VMEM).
    cat = pl.pallas_call(
        kernel,
        grid=(1,),
        in_specs=[fs((N, D)), fs(tuple(attn_w.shape)),
                  fs(tuple(convff_w.shape)), fs(tuple(vecs.shape))],
        out_specs=fs((N, 2 * D)),
        out_shape=jax.ShapeDtypeStruct((N, 2 * D), jnp.float32),
        compiler_params=pltpu.CompilerParams(dimension_semantics=("arbitrary",)),
    )(x2, attn_w, convff_w, vecs)

    # Flatten(cat([tcn, trans], -1)) -> Linear -> Unflatten as one lane-dense GEMM.
    flat = cat.reshape(B, L * 2 * D)
    out = flat @ final_w_t + final_b                # (B, L*10)
    return out.reshape(B, L, out_dim // L)


def init_layer_params(key, D, K):
    ks = iter(jax.random.split(key, 24))

    def rnd(shape, scale=0.05):
        return jax.random.normal(next(ks), shape, jnp.float32) * scale

    p = {}
    # conv weight stored pre-transposed as (K, D_in, D_out); all biases/affines as (1, .)
    p["conv_w"] = rnd((K, D, D))
    p["conv_b"] = rnd((1, D))
    p["g_tcn"] = jnp.ones((1, D), jnp.float32)
    p["b_tcn"] = jnp.zeros((1, D), jnp.float32)
    for name in ("m1", "c1", "c2"):                 # mha1 / cross1 / cross2
        p[f"{name}_w"] = rnd((D, 3 * D))            # in_proj_weight.T = [Wq|Wk|Wv]
        p[f"{name}_b"] = rnd((1, 3 * D))            # in_proj_bias
        p[f"{name}_ow"] = rnd((D, D))               # out_proj.weight.T
        p[f"{name}_ob"] = rnd((1, D))               # out_proj.bias
    p["g1"] = jnp.ones((1, D), jnp.float32)
    p["b1"] = jnp.zeros((1, D), jnp.float32)
    p["ff_w"] = rnd((D, D))                         # ff_conv (1x1 conv) weight.T
    p["ff_b"] = rnd((1, D))
    p["g_ff"] = jnp.ones((1, D), jnp.float32)
    p["b_ff"] = jnp.zeros((1, D), jnp.float32)
    p["g2"] = jnp.ones((1, D), jnp.float32)
    p["b2"] = jnp.zeros((1, D), jnp.float32)
    p["g3"] = jnp.ones((1, D), jnp.float32)
    p["b3"] = jnp.zeros((1, D), jnp.float32)
    return p


if __name__ == "__main__":
    # Small shape-consistent config: ts_shape=(8, 32), 4 heads, kernel 3, dilations (1, 2)
    B, L, D = 2, 8, 32
    H, K = 4, 3
    dilations = (1, 2)

    key = jax.random.PRNGKey(0)
    kx, kp, kfw = jax.random.split(key, 3)
    x = jax.random.normal(kx, (B, L, D), jnp.float32)

    layer_keys = jax.random.split(kp, len(dilations))
    layer_params = [init_layer_params(k, D, K) for k in layer_keys]

    final_w_t = jax.random.normal(kfw, (L * D * 2, L * 10), jnp.float32) * 0.02
    final_b = jnp.zeros((1, L * 10), jnp.float32)

    fwd = jax.jit(functools.partial(
        timesformer_decoder, dilations=dilations, num_heads=H, k_size=K))
    out = jax.block_until_ready(fwd(x, layer_params, final_w_t, final_b))
    assert out.shape == (B, L, 10) and out.dtype == jnp.float32
    print("KERNEL_OK")
</pallas_src>

<mosaic_0001>
module attributes {stable_mosaic.version = 11 : i64} {
  func.func @kernel(%arg0: i32, %arg1: memref<16x32xf32, #tpu.memory_space<vmem>>, %arg2: memref<6x32x128xf32, #tpu.memory_space<vmem>>, %arg3: memref<2x128x32xf32, #tpu.memory_space<vmem>>, %arg4: memref<36x96xf32, #tpu.memory_space<vmem>>, %arg5: memref<16x64xf32, #tpu.memory_space<vmem>>) attributes {dimension_semantics = [#tpu.dimension_semantics<arbitrary>], iteration_bounds = array<i64: 1>, scalar_prefetch = 0 : i64, scratch_operands = 0 : i64, tpu.core_type = #tpu.core_type<tc>, window_params = [{pipeline_mode = #tpu.pipeline_mode<synchronous>, transform_indices = @transform_0, window_bounds = array<i64: 16, 32>}, {pipeline_mode = #tpu.pipeline_mode<synchronous>, transform_indices = @transform_1, window_bounds = array<i64: 6, 32, 128>}, {pipeline_mode = #tpu.pipeline_mode<synchronous>, transform_indices = @transform_2, window_bounds = array<i64: 2, 128, 32>}, {pipeline_mode = #tpu.pipeline_mode<synchronous>, transform_indices = @transform_3, window_bounds = array<i64: 36, 96>}, {pipeline_mode = #tpu.pipeline_mode<synchronous>, transform_indices = @transform_4, window_bounds = array<i64: 16, 64>}]} {
    %c0 = arith.constant 0 : index
    %c0_0 = arith.constant 0 : index
    %0 = vector.load %arg1[%c0, %c0_0] : memref<16x32xf32, #tpu.memory_space<vmem>>, vector<16x32xf32>
    %1 = tpu.iota {dimensions = array<i32: 0>} : vector<8x32xi32>
    %2 = tpu.concatenate %1, %1 in 0 : vector<8x32xi32>, vector<8x32xi32> -> vector<16x32xi32>
    %c0_i32 = arith.constant 0 : i32
    %3 = vector.broadcast %c0_i32 : i32 to vector<8x1xi32>
    %c1_i32 = arith.constant 1 : i32
    %4 = vector.broadcast %c1_i32 : i32 to vector<8x1xi32>
    %5 = tpu.concatenate %3, %4 in 0 : vector<8x1xi32>, vector<8x1xi32> -> vector<16x1xi32>
    %c0_i32_1 = arith.constant 0 : i32
    %6 = vector.broadcast %c0_i32_1 : i32 to vector<1x8xi32>
    %c1_i32_2 = arith.constant 1 : i32
    %7 = vector.broadcast %c1_i32_2 : i32 to vector<1x8xi32>
    %8 = tpu.concatenate %6, %7 in 1 : vector<1x8xi32>, vector<1x8xi32> -> vector<1x16xi32>
    %9 = vector.broadcast %5 : vector<16x1xi32> to vector<16x16xi32>
    %10 = vector.broadcast %8 : vector<1x16xi32> to vector<16x16xi32>
    %11 = arith.cmpi eq, %9, %10 : vector<16x16xi32>
    %c0_3 = arith.constant 0 : index
    %c0_4 = arith.constant 0 : index
    %12 = vector.load %arg4[%c0_3, %c0_4] : memref<36x96xf32, #tpu.memory_space<vmem>>, vector<1x32xf32>
    %c1_i32_5 = arith.constant 1 : i32
    %13 = tpu.dynamic_rotate %0 by %c1_i32_5 dim 0 : vector<16x32xf32>, i32 -> vector<16x32xf32>
    %c-1_i32 = arith.constant -1 : i32
    %14 = vector.broadcast %c-1_i32 : i32 to vector<16x32xi32>
    %15 = arith.addi %2, %14 : vector<16x32xi32>
    %c0_i32_6 = arith.constant 0 : i32
    %16 = vector.broadcast %c0_i32_6 : i32 to vector<16x32xi32>
    %17 = arith.cmpi sge, %15, %16 : vector<16x32xi32>
    %c-1_i32_7 = arith.constant -1 : i32
    %18 = vector.broadcast %c-1_i32_7 : i32 to vector<16x32xi32>
    %19 = arith.addi %2, %18 : vector<16x32xi32>
    %c8_i32 = arith.constant 8 : i32
    %20 = vector.broadcast %c8_i32 : i32 to vector<16x32xi32>
    %21 = arith.cmpi slt, %19, %20 : vector<16x32xi32>
    %22 = arith.andi %17, %21 : vector<16x32xi1>
    %cst = arith.constant 0.000000e+00 : f32
    %23 = vector.broadcast %cst : f32 to vector<16x32xf32>
    %24 = arith.select %22, %13, %23 : vector<16x32xi1>, vector<16x32xf32>
    %c15_i32 = arith.constant 15 : i32
    %25 = tpu.dynamic_rotate %0 by %c15_i32 dim 0 : vector<16x32xf32>, i32 -> vector<16x32xf32>
    %c1_i32_8 = arith.constant 1 : i32
    %26 = vector.broadcast %c1_i32_8 : i32 to vector<16x32xi32>
    %27 = arith.addi %2, %26 : vector<16x32xi32>
    %c0_i32_9 = arith.constant 0 : i32
    %28 = vector.broadcast %c0_i32_9 : i32 to vector<16x32xi32>
    %29 = arith.cmpi sge, %27, %28 : vector<16x32xi32>
    %c1_i32_10 = arith.constant 1 : i32
    %30 = vector.broadcast %c1_i32_10 : i32 to vector<16x32xi32>
    %31 = arith.addi %2, %30 : vector<16x32xi32>
    %c8_i32_11 = arith.constant 8 : i32
    %32 = vector.broadcast %c8_i32_11 : i32 to vector<16x32xi32>
    %33 = arith.cmpi slt, %31, %32 : vector<16x32xi32>
    %34 = arith.andi %29, %33 : vector<16x32xi1>
    %cst_12 = arith.constant 0.000000e+00 : f32
    %35 = vector.broadcast %cst_12 : f32 to vector<16x32xf32>
    %36 = arith.select %34, %25, %35 : vector<16x32xi1>, vector<16x32xf32>
    %37 = tpu.concatenate %24, %0, %36 in 1 : vector<16x32xf32>, vector<16x32xf32>, vector<16x32xf32> -> vector<16x96xf32>
    %c0_13 = arith.constant 0 : index
    %c0_14 = arith.constant 0 : index
    %c0_15 = arith.constant 0 : index
    %38 = vector.load %arg3[%c0_13, %c0_14, %c0_15] : memref<2x128x32xf32, #tpu.memory_space<vmem>>, vector<1x96x32xf32>
    %39 = vector.shape_cast %38 : vector<1x96x32xf32> to vector<96x32xf32>
    %cst_16 = arith.constant dense<0.000000e+00> : vector<16x32xf32>
    %40 = tpu.matmul %37, %39, %cst_16 {dimension_numbers = #tpu.dot_dimension_numbers<[1], [0], [0], [1], [0, 0, 1, 1], [], []>} : vector<16x96xf32>, vector<96x32xf32>, vector<16x32xf32> -> vector<16x32xf32>
    %41 = vector.broadcast %12 : vector<1x32xf32> to vector<16x32xf32>
    %42 = arith.addf %40, %41 : vector<16x32xf32>
    %cst_17 = arith.constant 0.000000e+00 : f32
    %43 = vector.broadcast %cst_17 : f32 to vector<16x32xf32>
    %44 = arith.maximumf %42, %43 : vector<16x32xf32>
    %c1 = arith.constant 1 : index
    %c0_18 = arith.constant 0 : index
    %45 = vector.load %arg4[%c1, %c0_18] : memref<36x96xf32, #tpu.memory_space<vmem>>, vector<1x32xf32>
    %c2 = arith.constant 2 : index
    %c0_19 = arith.constant 0 : index
    %46 = vector.load %arg4[%c2, %c0_19] : memref<36x96xf32, #tpu.memory_space<vmem>>, vector<1x32xf32>
    %cst_20 = arith.constant dense<0.000000e+00> : vector<16xf32>
    %47 = vector.multi_reduction <add>, %44, %cst_20 [1] : vector<16x32xf32> to vector<16xf32>
    %48 = vector.shape_cast %47 : vector<16xf32> to vector<16x1xf32>
    %cst_21 = arith.constant 3.200000e+01 : f32
    %49 = vector.broadcast %cst_21 : f32 to vector<16x1xf32>
    %50 = arith.divf %48, %49 : vector<16x1xf32>
    %51 = vector.broadcast %50 : vector<16x1xf32> to vector<16x32xf32>
    %52 = arith.subf %44, %51 : vector<16x32xf32>
    %53 = arith.mulf %52, %52 : vector<16x32xf32>
    %cst_22 = arith.constant dense<0.000000e+00> : vector<16xf32>
    %54 = vector.multi_reduction <add>, %53, %cst_22 [1] : vector<16x32xf32> to vector<16xf32>
    %55 = vector.shape_cast %54 : vector<16xf32> to vector<16x1xf32>
    %cst_23 = arith.constant 3.200000e+01 : f32
    %56 = vector.broadcast %cst_23 : f32 to vector<16x1xf32>
    %57 = arith.divf %55, %56 : vector<16x1xf32>
    %cst_24 = arith.constant 9.99999974E-6 : f32
    %58 = vector.broadcast %cst_24 : f32 to vector<16x1xf32>
    %59 = arith.addf %57, %58 : vector<16x1xf32>
    %60 = math.rsqrt %59 : vector<16x1xf32>
    %61 = vector.broadcast %60 : vector<16x1xf32> to vector<16x32xf32>
    %62 = arith.mulf %52, %61 : vector<16x32xf32>
    %63 = vector.broadcast %45 : vector<1x32xf32> to vector<16x32xf32>
    %64 = arith.mulf %62, %63 : vector<16x32xf32>
    %65 = vector.broadcast %46 : vector<1x32xf32> to vector<16x32xf32>
    %66 = arith.addf %64, %65 : vector<16x32xf32>
    %c0_25 = arith.constant 0 : index
    %c0_26 = arith.constant 0 : index
    %c0_27 = arith.constant 0 : index
    %67 = vector.load %arg2[%c0_25, %c0_26, %c0_27] : memref<6x32x128xf32, #tpu.memory_space<vmem>>, vector<1x32x32xf32>
    %68 = vector.shape_cast %67 : vector<1x32x32xf32> to vector<32x32xf32>
    %c0_28 = arith.constant 0 : index
    %c0_29 = arith.constant 0 : index
    %c32 = arith.constant 32 : index
    %69 = vector.load %arg2[%c0_28, %c0_29, %c32] : memref<6x32x128xf32, #tpu.memory_space<vmem>>, vector<1x32x64xf32>
    %70 = vector.shape_cast %69 : vector<1x32x64xf32> to vector<32x64xf32>
    %c0_30 = arith.constant 0 : index
    %c0_31 = arith.constant 0 : index
    %c96 = arith.constant 96 : index
    %71 = vector.load %arg2[%c0_30, %c0_31, %c96] : memref<6x32x128xf32, #tpu.memory_space<vmem>>, vector<1x32x32xf32>
    %72 = vector.shape_cast %71 : vector<1x32x32xf32> to vector<32x32xf32>
    %c3 = arith.constant 3 : index
    %c0_32 = arith.constant 0 : index
    %73 = vector.load %arg4[%c3, %c0_32] : memref<36x96xf32, #tpu.memory_space<vmem>>, vector<1x32xf32>
    %c3_33 = arith.constant 3 : index
    %c32_34 = arith.constant 32 : index
    %74 = vector.load %arg4[%c3_33, %c32_34] : memref<36x96xf32, #tpu.memory_space<vmem>>, vector<1x64xf32>
    %c4 = arith.constant 4 : index
    %c0_35 = arith.constant 0 : index
    %75 = vector.load %arg4[%c4, %c0_35] : memref<36x96xf32, #tpu.memory_space<vmem>>, vector<1x32xf32>
    %cst_36 = arith.constant dense<0.000000e+00> : vector<16x32xf32>
    %76 = tpu.matmul %0, %68, %cst_36 {dimension_numbers = #tpu.dot_dimension_numbers<[1], [0], [0], [1], [0, 0, 1, 1], [], []>} : vector<16x32xf32>, vector<32x32xf32>, vector<16x32xf32> -> vector<16x32xf32>
    %77 = vector.broadcast %73 : vector<1x32xf32> to vector<16x32xf32>
    %78 = arith.addf %76, %77 : vector<16x32xf32>
    %cst_37 = arith.constant dense<0.000000e+00> : vector<16x64xf32>
    %79 = tpu.matmul %0, %70, %cst_37 {dimension_numbers = #tpu.dot_dimension_numbers<[1], [0], [0], [1], [0, 0, 1, 1], [], []>} : vector<16x32xf32>, vector<32x64xf32>, vector<16x64xf32> -> vector<16x64xf32>
    %80 = vector.broadcast %74 : vector<1x64xf32> to vector<16x64xf32>
    %81 = arith.addf %79, %80 : vector<16x64xf32>
    %82 = vector.extract_strided_slice %78 {offsets = [0, 0], sizes = [16, 8], strides = [1, 1]} : vector<16x32xf32> to vector<16x8xf32>
    %cst_38 = arith.constant 0.353553385 : f32
    %83 = vector.broadcast %cst_38 : f32 to vector<16x8xf32>
    %84 = arith.mulf %82, %83 : vector<16x8xf32>
    %85 = vector.extract_strided_slice %81 {offsets = [0, 0], sizes = [16, 8], strides = [1, 1]} : vector<16x64xf32> to vector<16x8xf32>
    %86 = vector.extract_strided_slice %81 {offsets = [0, 32], sizes = [16, 8], strides = [1, 1]} : vector<16x64xf32> to vector<16x8xf32>
    "tpu.trace_start"() <{level = 10 : i32, message = "qe,ke->qk"}> : () -> ()
    %cst_39 = arith.constant dense<0.000000e+00> : vector<16x16xf32>
    %87 = tpu.matmul %84, %85, %cst_39 {dimension_numbers = #tpu.dot_dimension_numbers<[1], [1], [0], [0], [0, 0, 1, 0], [], []>} : vector<16x8xf32>, vector<16x8xf32>, vector<16x16xf32> -> vector<16x16xf32>
    %cst_40 = arith.constant -1.000000e+30 : f32
    "tpu.trace_stop"() : () -> ()
    %88 = vector.broadcast %cst_40 : f32 to vector<16x16xf32>
    %89 = arith.select %11, %87, %88 : vector<16x16xi1>, vector<16x16xf32>
    %cst_41 = arith.constant dense<0xFF800000> : vector<16xf32>
    %90 = vector.multi_reduction <maximumf>, %89, %cst_41 [1] : vector<16x16xf32> to vector<16xf32>
    %91 = vector.shape_cast %90 : vector<16xf32> to vector<16x1xf32>
    %92 = vector.broadcast %91 : vector<16x1xf32> to vector<16x16xf32>
    %93 = arith.subf %89, %92 : vector<16x16xf32>
    %94 = math.exp %93 : vector<16x16xf32>
    %cst_42 = arith.constant dense<0.000000e+00> : vector<16xf32>
    %95 = vector.multi_reduction <add>, %94, %cst_42 [1] : vector<16x16xf32> to vector<16xf32>
    %96 = vector.shape_cast %95 : vector<16xf32> to vector<16x1xf32>
    %97 = vector.broadcast %96 : vector<16x1xf32> to vector<16x16xf32>
    %98 = arith.divf %94, %97 : vector<16x16xf32>
    %cst_43 = arith.constant dense<0.000000e+00> : vector<16x8xf32>
    %99 = tpu.matmul %98, %86, %cst_43 {dimension_numbers = #tpu.dot_dimension_numbers<[1], [0], [0], [1], [0, 0, 1, 1], [], []>} : vector<16x16xf32>, vector<16x8xf32>, vector<16x8xf32> -> vector<16x8xf32>
    %100 = vector.extract_strided_slice %78 {offsets = [0, 8], sizes = [16, 8], strides = [1, 1]} : vector<16x32xf32> to vector<16x8xf32>
    %cst_44 = arith.constant 0.353553385 : f32
    %101 = vector.broadcast %cst_44 : f32 to vector<16x8xf32>
    %102 = arith.mulf %100, %101 : vector<16x8xf32>
    %103 = vector.extract_strided_slice %81 {offsets = [0, 8], sizes = [16, 8], strides = [1, 1]} : vector<16x64xf32> to vector<16x8xf32>
    %104 = vector.extract_strided_slice %81 {offsets = [0, 40], sizes = [16, 8], strides = [1, 1]} : vector<16x64xf32> to vector<16x8xf32>
    "tpu.trace_start"() <{level = 10 : i32, message = "qe,ke->qk"}> : () -> ()
    %cst_45 = arith.constant dense<0.000000e+00> : vector<16x16xf32>
    %105 = tpu.matmul %102, %103, %cst_45 {dimension_numbers = #tpu.dot_dimension_numbers<[1], [1], [0], [0], [0, 0, 1, 0], [], []>} : vector<16x8xf32>, vector<16x8xf32>, vector<16x16xf32> -> vector<16x16xf32>
    %cst_46 = arith.constant -1.000000e+30 : f32
    "tpu.trace_stop"() : () -> ()
    %106 = vector.broadcast %cst_46 : f32 to vector<16x16xf32>
    %107 = arith.select %11, %105, %106 : vector<16x16xi1>, vector<16x16xf32>
    %cst_47 = arith.constant dense<0xFF800000> : vector<16xf32>
    %108 = vector.multi_reduction <maximumf>, %107, %cst_47 [1] : vector<16x16xf32> to vector<16xf32>
    %109 = vector.shape_cast %108 : vector<16xf32> to vector<16x1xf32>
    %110 = vector.broadcast %109 : vector<16x1xf32> to vector<16x16xf32>
    %111 = arith.subf %107, %110 : vector<16x16xf32>
    %112 = math.exp %111 : vector<16x16xf32>
    %cst_48 = arith.constant dense<0.000000e+00> : vector<16xf32>
    %113 = vector.multi_reduction <add>, %112, %cst_48 [1] : vector<16x16xf32> to vector<16xf32>
    %114 = vector.shape_cast %113 : vector<16xf32> to vector<16x1xf32>
    %115 = vector.broadcast %114 : vector<16x1xf32> to vector<16x16xf32>
    %116 = arith.divf %112, %115 : vector<16x16xf32>
    %cst_49 = arith.constant dense<0.000000e+00> : vector<16x8xf32>
    %117 = tpu.matmul %116, %104, %cst_49 {dimension_numbers = #tpu.dot_dimension_numbers<[1], [0], [0], [1], [0, 0, 1, 1], [], []>} : vector<16x16xf32>, vector<16x8xf32>, vector<16x8xf32> -> vector<16x8xf32>
    %118 = vector.extract_strided_slice %78 {offsets = [0, 16], sizes = [16, 8], strides = [1, 1]} : vector<16x32xf32> to vector<16x8xf32>
    %cst_50 = arith.constant 0.353553385 : f32
    %119 = vector.broadcast %cst_50 : f32 to vector<16x8xf32>
    %120 = arith.mulf %118, %119 : vector<16x8xf32>
    %121 = vector.extract_strided_slice %81 {offsets = [0, 16], sizes = [16, 8], strides = [1, 1]} : vector<16x64xf32> to vector<16x8xf32>
    %122 = vector.extract_strided_slice %81 {offsets = [0, 48], sizes = [16, 8], strides = [1, 1]} : vector<16x64xf32> to vector<16x8xf32>
    "tpu.trace_start"() <{level = 10 : i32, message = "qe,ke->qk"}> : () -> ()
    %cst_51 = arith.constant dense<0.000000e+00> : vector<16x16xf32>
    %123 = tpu.matmul %120, %121, %cst_51 {dimension_numbers = #tpu.dot_dimension_numbers<[1], [1], [0], [0], [0, 0, 1, 0], [], []>} : vector<16x8xf32>, vector<16x8xf32>, vector<16x16xf32> -> vector<16x16xf32>
    %cst_52 = arith.constant -1.000000e+30 : f32
    "tpu.trace_stop"() : () -> ()
    %124 = vector.broadcast %cst_52 : f32 to vector<16x16xf32>
    %125 = arith.select %11, %123, %124 : vector<16x16xi1>, vector<16x16xf32>
    %cst_53 = arith.constant dense<0xFF800000> : vector<16xf32>
    %126 = vector.multi_reduction <maximumf>, %125, %cst_53 [1] : vector<16x16xf32> to vector<16xf32>
    %127 = vector.shape_cast %126 : vector<16xf32> to vector<16x1xf32>
    %128 = vector.broadcast %127 : vector<16x1xf32> to vector<16x16xf32>
    %129 = arith.subf %125, %128 : vector<16x16xf32>
    %130 = math.exp %129 : vector<16x16xf32>
    %cst_54 = arith.constant dense<0.000000e+00> : vector<16xf32>
    %131 = vector.multi_reduction <add>, %130, %cst_54 [1] : vector<16x16xf32> to vector<16xf32>
    %132 = vector.shape_cast %131 : vector<16xf32> to vector<16x1xf32>
    %133 = vector.broadcast %132 : vector<16x1xf32> to vector<16x16xf32>
    %134 = arith.divf %130, %133 : vector<16x16xf32>
    %cst_55 = arith.constant dense<0.000000e+00> : vector<16x8xf32>
    %135 = tpu.matmul %134, %122, %cst_55 {dimension_numbers = #tpu.dot_dimension_numbers<[1], [0], [0], [1], [0, 0, 1, 1], [], []>} : vector<16x16xf32>, vector<16x8xf32>, vector<16x8xf32> -> vector<16x8xf32>
    %136 = vector.extract_strided_slice %78 {offsets = [0, 24], sizes = [16, 8], strides = [1, 1]} : vector<16x32xf32> to vector<16x8xf32>
    %cst_56 = arith.constant 0.353553385 : f32
    %137 = vector.broadcast %cst_56 : f32 to vector<16x8xf32>
    %138 = arith.mulf %136, %137 : vector<16x8xf32>
    %139 = vector.extract_strided_slice %81 {offsets = [0, 24], sizes = [16, 8], strides = [1, 1]} : vector<16x64xf32> to vector<16x8xf32>
    %140 = vector.extract_strided_slice %81 {offsets = [0, 56], sizes = [16, 8], strides = [1, 1]} : vector<16x64xf32> to vector<16x8xf32>
    "tpu.trace_start"() <{level = 10 : i32, message = "qe,ke->qk"}> : () -> ()
    %cst_57 = arith.constant dense<0.000000e+00> : vector<16x16xf32>
    %141 = tpu.matmul %138, %139, %cst_57 {dimension_numbers = #tpu.dot_dimension_numbers<[1], [1], [0], [0], [0, 0, 1, 0], [], []>} : vector<16x8xf32>, vector<16x8xf32>, vector<16x16xf32> -> vector<16x16xf32>
    %cst_58 = arith.constant -1.000000e+30 : f32
    "tpu.trace_stop"() : () -> ()
    %142 = vector.broadcast %cst_58 : f32 to vector<16x16xf32>
    %143 = arith.select %11, %141, %142 : vector<16x16xi1>, vector<16x16xf32>
    %cst_59 = arith.constant dense<0xFF800000> : vector<16xf32>
    %144 = vector.multi_reduction <maximumf>, %143, %cst_59 [1] : vector<16x16xf32> to vector<16xf32>
    %145 = vector.shape_cast %144 : vector<16xf32> to vector<16x1xf32>
    %146 = vector.broadcast %145 : vector<16x1xf32> to vector<16x16xf32>
    %147 = arith.subf %143, %146 : vector<16x16xf32>
    %148 = math.exp %147 : vector<16x16xf32>
    %cst_60 = arith.constant dense<0.000000e+00> : vector<16xf32>
    %149 = vector.multi_reduction <add>, %148, %cst_60 [1] : vector<16x16xf32> to vector<16xf32>
    %150 = vector.shape_cast %149 : vector<16xf32> to vector<16x1xf32>
    %151 = vector.broadcast %150 : vector<16x1xf32> to vector<16x16xf32>
    %152 = arith.divf %148, %151 : vector<16x16xf32>
    %cst_61 = arith.constant dense<0.000000e+00> : vector<16x8xf32>
    %153 = tpu.matmul %152, %140, %cst_61 {dimension_numbers = #tpu.dot_dimension_numbers<[1], [0], [0], [1], [0, 0, 1, 1], [], []>} : vector<16x16xf32>, vector<16x8xf32>, vector<16x8xf32> -> vector<16x8xf32>
    %154 = tpu.concatenate %99, %117, %135, %153 in 1 : vector<16x8xf32>, vector<16x8xf32>, vector<16x8xf32>, vector<16x8xf32> -> vector<16x32xf32>
    %cst_62 = arith.constant dense<0.000000e+00> : vector<16x32xf32>
    %155 = tpu.matmul %154, %72, %cst_62 {dimension_numbers = #tpu.dot_dimension_numbers<[1], [0], [0], [1], [0, 0, 1, 1], [], []>} : vector<16x32xf32>, vector<32x32xf32>, vector<16x32xf32> -> vector<16x32xf32>
    %156 = vector.broadcast %75 : vector<1x32xf32> to vector<16x32xf32>
    %157 = arith.addf %155, %156 : vector<16x32xf32>
    %158 = arith.addf %157, %0 : vector<16x32xf32>
    %c9 = arith.constant 9 : index
    %c0_63 = arith.constant 0 : index
    %159 = vector.load %arg4[%c9, %c0_63] : memref<36x96xf32, #tpu.memory_space<vmem>>, vector<1x32xf32>
    %c10 = arith.constant 10 : index
    %c0_64 = arith.constant 0 : index
    %160 = vector.load %arg4[%c10, %c0_64] : memref<36x96xf32, #tpu.memory_space<vmem>>, vector<1x32xf32>
    %cst_65 = arith.constant dense<0.000000e+00> : vector<16xf32>
    %161 = vector.multi_reduction <add>, %158, %cst_65 [1] : vector<16x32xf32> to vector<16xf32>
    %162 = vector.shape_cast %161 : vector<16xf32> to vector<16x1xf32>
    %cst_66 = arith.constant 3.200000e+01 : f32
    %163 = vector.broadcast %cst_66 : f32 to vector<16x1xf32>
    %164 = arith.divf %162, %163 : vector<16x1xf32>
    %165 = vector.broadcast %164 : vector<16x1xf32> to vector<16x32xf32>
    %166 = arith.subf %158, %165 : vector<16x32xf32>
    %167 = arith.mulf %166, %166 : vector<16x32xf32>
    %cst_67 = arith.constant dense<0.000000e+00> : vector<16xf32>
    %168 = vector.multi_reduction <add>, %167, %cst_67 [1] : vector<16x32xf32> to vector<16xf32>
    %169 = vector.shape_cast %168 : vector<16xf32> to vector<16x1xf32>
    %cst_68 = arith.constant 3.200000e+01 : f32
    %170 = vector.broadcast %cst_68 : f32 to vector<16x1xf32>
    %171 = arith.divf %169, %170 : vector<16x1xf32>
    %cst_69 = arith.constant 9.99999974E-6 : f32
    %172 = vector.broadcast %cst_69 : f32 to vector<16x1xf32>
    %173 = arith.addf %171, %172 : vector<16x1xf32>
    %174 = math.rsqrt %173 : vector<16x1xf32>
    %175 = vector.broadcast %174 : vector<16x1xf32> to vector<16x32xf32>
    %176 = arith.mulf %166, %175 : vector<16x32xf32>
    %177 = vector.broadcast %159 : vector<1x32xf32> to vector<16x32xf32>
    %178 = arith.mulf %176, %177 : vector<16x32xf32>
    %179 = vector.broadcast %160 : vector<1x32xf32> to vector<16x32xf32>
    %180 = arith.addf %178, %179 : vector<16x32xf32>
    %c0_70 = arith.constant 0 : index
    %c96_71 = arith.constant 96 : index
    %c0_72 = arith.constant 0 : index
    %181 = vector.load %arg3[%c0_70, %c96_71, %c0_72] : memref<2x128x32xf32, #tpu.memory_space<vmem>>, vector<1x32x32xf32>
    %182 = vector.shape_cast %181 : vector<1x32x32xf32> to vector<32x32xf32>
    %cst_73 = arith.constant dense<0.000000e+00> : vector<16x32xf32>
    %183 = tpu.matmul %180, %182, %cst_73 {dimension_numbers = #tpu.dot_dimension_numbers<[1], [0], [0], [1], [0, 0, 1, 1], [], []>} : vector<16x32xf32>, vector<32x32xf32>, vector<16x32xf32> -> vector<16x32xf32>
    %c11 = arith.constant 11 : index
    %c0_74 = arith.constant 0 : index
    %184 = vector.load %arg4[%c11, %c0_74] : memref<36x96xf32, #tpu.memory_space<vmem>>, vector<1x32xf32>
    %185 = vector.broadcast %184 : vector<1x32xf32> to vector<16x32xf32>
    %186 = arith.addf %183, %185 : vector<16x32xf32>
    %cst_75 = arith.constant 0.000000e+00 : f32
    %187 = vector.broadcast %cst_75 : f32 to vector<16x32xf32>
    %188 = arith.maximumf %186, %187 : vector<16x32xf32>
    %c12 = arith.constant 12 : index
    %c0_76 = arith.constant 0 : index
    %189 = vector.load %arg4[%c12, %c0_76] : memref<36x96xf32, #tpu.memory_space<vmem>>, vector<1x32xf32>
    %c13 = arith.constant 13 : index
    %c0_77 = arith.constant 0 : index
    %190 = vector.load %arg4[%c13, %c0_77] : memref<36x96xf32, #tpu.memory_space<vmem>>, vector<1x32xf32>
    %cst_78 = arith.constant dense<0.000000e+00> : vector<16xf32>
    %191 = vector.multi_reduction <add>, %188, %cst_78 [1] : vector<16x32xf32> to vector<16xf32>
    %192 = vector.shape_cast %191 : vector<16xf32> to vector<16x1xf32>
    %cst_79 = arith.constant 3.200000e+01 : f32
    %193 = vector.broadcast %cst_79 : f32 to vector<16x1xf32>
    %194 = arith.divf %192, %193 : vector<16x1xf32>
    %195 = vector.broadcast %194 : vector<16x1xf32> to vector<16x32xf32>
    %196 = arith.subf %188, %195 : vector<16x32xf32>
    %197 = arith.mulf %196, %196 : vector<16x32xf32>
    %cst_80 = arith.constant dense<0.000000e+00> : vector<16xf32>
    %198 = vector.multi_reduction <add>, %197, %cst_80 [1] : vector<16x32xf32> to vector<16xf32>
    %199 = vector.shape_cast %198 : vector<16xf32> to vector<16x1xf32>
    %cst_81 = arith.constant 3.200000e+01 : f32
    %200 = vector.broadcast %cst_81 : f32 to vector<16x1xf32>
    %201 = arith.divf %199, %200 : vector<16x1xf32>
    %cst_82 = arith.constant 9.99999974E-6 : f32
    %202 = vector.broadcast %cst_82 : f32 to vector<16x1xf32>
    %203 = arith.addf %201, %202 : vector<16x1xf32>
    %204 = math.rsqrt %203 : vector<16x1xf32>
    %205 = vector.broadcast %204 : vector<16x1xf32> to vector<16x32xf32>
    %206 = arith.mulf %196, %205 : vector<16x32xf32>
    %207 = vector.broadcast %189 : vector<1x32xf32> to vector<16x32xf32>
    %208 = arith.mulf %206, %207 : vector<16x32xf32>
    %209 = vector.broadcast %190 : vector<1x32xf32> to vector<16x32xf32>
    %210 = arith.addf %208, %209 : vector<16x32xf32>
    %211 = arith.addf %210, %180 : vector<16x32xf32>
    %c1_83 = arith.constant 1 : index
    %c0_84 = arith.constant 0 : index
    %c0_85 = arith.constant 0 : index
    %212 = vector.load %arg2[%c1_83, %c0_84, %c0_85] : memref<6x32x128xf32, #tpu.memory_space<vmem>>, vector<1x32x32xf32>
    %213 = vector.shape_cast %212 : vector<1x32x32xf32> to vector<32x32xf32>
    %c1_86 = arith.constant 1 : index
    %c0_87 = arith.constant 0 : index
    %c32_88 = arith.constant 32 : index
    %214 = vector.load %arg2[%c1_86, %c0_87, %c32_88] : memref<6x32x128xf32, #tpu.memory_space<vmem>>, vector<1x32x64xf32>
    %215 = vector.shape_cast %214 : vector<1x32x64xf32> to vector<32x64xf32>
    %c1_89 = arith.constant 1 : index
    %c0_90 = arith.constant 0 : index
    %c96_91 = arith.constant 96 : index
    %216 = vector.load %arg2[%c1_89, %c0_90, %c96_91] : memref<6x32x128xf32, #tpu.memory_space<vmem>>, vector<1x32x32xf32>
    %217 = vector.shape_cast %216 : vector<1x32x32xf32> to vector<32x32xf32>
    %c5 = arith.constant 5 : index
    %c0_92 = arith.constant 0 : index
    %218 = vector.load %arg4[%c5, %c0_92] : memref<36x96xf32, #tpu.memory_space<vmem>>, vector<1x32xf32>
    %c5_93 = arith.constant 5 : index
    %c32_94 = arith.constant 32 : index
    %219 = vector.load %arg4[%c5_93, %c32_94] : memref<36x96xf32, #tpu.memory_space<vmem>>, vector<1x64xf32>
    %c6 = arith.constant 6 : index
    %c0_95 = arith.constant 0 : index
    %220 = vector.load %arg4[%c6, %c0_95] : memref<36x96xf32, #tpu.memory_space<vmem>>, vector<1x32xf32>
    %cst_96 = arith.constant dense<0.000000e+00> : vector<16x32xf32>
    %221 = tpu.matmul %211, %213, %cst_96 {dimension_numbers = #tpu.dot_dimension_numbers<[1], [0], [0], [1], [0, 0, 1, 1], [], []>} : vector<16x32xf32>, vector<32x32xf32>, vector<16x32xf32> -> vector<16x32xf32>
    %222 = vector.broadcast %218 : vector<1x32xf32> to vector<16x32xf32>
    %223 = arith.addf %221, %222 : vector<16x32xf32>
    %cst_97 = arith.constant dense<0.000000e+00> : vector<16x64xf32>
    %224 = tpu.matmul %66, %215, %cst_97 {dimension_numbers = #tpu.dot_dimension_numbers<[1], [0], [0], [1], [0, 0, 1, 1], [], []>} : vector<16x32xf32>, vector<32x64xf32>, vector<16x64xf32> -> vector<16x64xf32>
    %225 = vector.broadcast %219 : vector<1x64xf32> to vector<16x64xf32>
    %226 = arith.addf %224, %225 : vector<16x64xf32>
    %227 = vector.extract_strided_slice %223 {offsets = [0, 0], sizes = [16, 8], strides = [1, 1]} : vector<16x32xf32> to vector<16x8xf32>
    %cst_98 = arith.constant 0.353553385 : f32
    %228 = vector.broadcast %cst_98 : f32 to vector<16x8xf32>
    %229 = arith.mulf %227, %228 : vector<16x8xf32>
    %230 = vector.extract_strided_slice %226 {offsets = [0, 0], sizes = [16, 8], strides = [1, 1]} : vector<16x64xf32> to vector<16x8xf32>
    %231 = vector.extract_strided_slice %226 {offsets = [0, 32], sizes = [16, 8], strides = [1, 1]} : vector<16x64xf32> to vector<16x8xf32>
    "tpu.trace_start"() <{level = 10 : i32, message = "qe,ke->qk"}> : () -> ()
    %cst_99 = arith.constant dense<0.000000e+00> : vector<16x16xf32>
    %232 = tpu.matmul %229, %230, %cst_99 {dimension_numbers = #tpu.dot_dimension_numbers<[1], [1], [0], [0], [0, 0, 1, 0], [], []>} : vector<16x8xf32>, vector<16x8xf32>, vector<16x16xf32> -> vector<16x16xf32>
    %cst_100 = arith.constant -1.000000e+30 : f32
    "tpu.trace_stop"() : () -> ()
    %233 = vector.broadcast %cst_100 : f32 to vector<16x16xf32>
    %234 = arith.select %11, %232, %233 : vector<16x16xi1>, vector<16x16xf32>
    %cst_101 = arith.constant dense<0xFF800000> : vector<16xf32>
    %235 = vector.multi_reduction <maximumf>, %234, %cst_101 [1] : vector<16x16xf32> to vector<16xf32>
    %236 = vector.shape_cast %235 : vector<16xf32> to vector<16x1xf32>
    %237 = vector.broadcast %236 : vector<16x1xf32> to vector<16x16xf32>
    %238 = arith.subf %234, %237 : vector<16x16xf32>
    %239 = math.exp %238 : vector<16x16xf32>
    %cst_102 = arith.constant dense<0.000000e+00> : vector<16xf32>
    %240 = vector.multi_reduction <add>, %239, %cst_102 [1] : vector<16x16xf32> to vector<16xf32>
    %241 = vector.shape_cast %240 : vector<16xf32> to vector<16x1xf32>
    %242 = vector.broadcast %241 : vector<16x1xf32> to vector<16x16xf32>
    %243 = arith.divf %239, %242 : vector<16x16xf32>
    %cst_103 = arith.constant dense<0.000000e+00> : vector<16x8xf32>
    %244 = tpu.matmul %243, %231, %cst_103 {dimension_numbers = #tpu.dot_dimension_numbers<[1], [0], [0], [1], [0, 0, 1, 1], [], []>} : vector<16x16xf32>, vector<16x8xf32>, vector<16x8xf32> -> vector<16x8xf32>
    %245 = vector.extract_strided_slice %223 {offsets = [0, 8], sizes = [16, 8], strides = [1, 1]} : vector<16x32xf32> to vector<16x8xf32>
    %cst_104 = arith.constant 0.353553385 : f32
    %246 = vector.broadcast %cst_104 : f32 to vector<16x8xf32>
    %247 = arith.mulf %245, %246 : vector<16x8xf32>
    %248 = vector.extract_strided_slice %226 {offsets = [0, 8], sizes = [16, 8], strides = [1, 1]} : vector<16x64xf32> to vector<16x8xf32>
    %249 = vector.extract_strided_slice %226 {offsets = [0, 40], sizes = [16, 8], strides = [1, 1]} : vector<16x64xf32> to vector<16x8xf32>
    "tpu.trace_start"() <{level = 10 : i32, message = "qe,ke->qk"}> : () -> ()
    %cst_105 = arith.constant dense<0.000000e+00> : vector<16x16xf32>
    %250 = tpu.matmul %247, %248, %cst_105 {dimension_numbers = #tpu.dot_dimension_numbers<[1], [1], [0], [0], [0, 0, 1, 0], [], []>} : vector<16x8xf32>, vector<16x8xf32>, vector<16x16xf32> -> vector<16x16xf32>
    %cst_106 = arith.constant -1.000000e+30 : f32
    "tpu.trace_stop"() : () -> ()
    %251 = vector.broadcast %cst_106 : f32 to vector<16x16xf32>
    %252 = arith.select %11, %250, %251 : vector<16x16xi1>, vector<16x16xf32>
    %cst_107 = arith.constant dense<0xFF800000> : vector<16xf32>
    %253 = vector.multi_reduction <maximumf>, %252, %cst_107 [1] : vector<16x16xf32> to vector<16xf32>
    %254 = vector.shape_cast %253 : vector<16xf32> to vector<16x1xf32>
    %255 = vector.broadcast %254 : vector<16x1xf32> to vector<16x16xf32>
    %256 = arith.subf %252, %255 : vector<16x16xf32>
    %257 = math.exp %256 : vector<16x16xf32>
    %cst_108 = arith.constant dense<0.000000e+00> : vector<16xf32>
    %258 = vector.multi_reduction <add>, %257, %cst_108 [1] : vector<16x16xf32> to vector<16xf32>
    %259 = vector.shape_cast %258 : vector<16xf32> to vector<16x1xf32>
    %260 = vector.broadcast %259 : vector<16x1xf32> to vector<16x16xf32>
    %261 = arith.divf %257, %260 : vector<16x16xf32>
    %cst_109 = arith.constant dense<0.000000e+00> : vector<16x8xf32>
    %262 = tpu.matmul %261, %249, %cst_109 {dimension_numbers = #tpu.dot_dimension_numbers<[1], [0], [0], [1], [0, 0, 1, 1], [], []>} : vector<16x16xf32>, vector<16x8xf32>, vector<16x8xf32> -> vector<16x8xf32>
    %263 = vector.extract_strided_slice %223 {offsets = [0, 16], sizes = [16, 8], strides = [1, 1]} : vector<16x32xf32> to vector<16x8xf32>
    %cst_110 = arith.constant 0.353553385 : f32
    %264 = vector.broadcast %cst_110 : f32 to vector<16x8xf32>
    %265 = arith.mulf %263, %264 : vector<16x8xf32>
    %266 = vector.extract_strided_slice %226 {offsets = [0, 16], sizes = [16, 8], strides = [1, 1]} : vector<16x64xf32> to vector<16x8xf32>
    %267 = vector.extract_strided_slice %226 {offsets = [0, 48], sizes = [16, 8], strides = [1, 1]} : vector<16x64xf32> to vector<16x8xf32>
    "tpu.trace_start"() <{level = 10 : i32, message = "qe,ke->qk"}> : () -> ()
    %cst_111 = arith.constant dense<0.000000e+00> : vector<16x16xf32>
    %268 = tpu.matmul %265, %266, %cst_111 {dimension_numbers = #tpu.dot_dimension_numbers<[1], [1], [0], [0], [0, 0, 1, 0], [], []>} : vector<16x8xf32>, vector<16x8xf32>, vector<16x16xf32> -> vector<16x16xf32>
    %cst_112 = arith.constant -1.000000e+30 : f32
    "tpu.trace_stop"() : () -> ()
    %269 = vector.broadcast %cst_112 : f32 to vector<16x16xf32>
    %270 = arith.select %11, %268, %269 : vector<16x16xi1>, vector<16x16xf32>
    %cst_113 = arith.constant dense<0xFF800000> : vector<16xf32>
    %271 = vector.multi_reduction <maximumf>, %270, %cst_113 [1] : vector<16x16xf32> to vector<16xf32>
    %272 = vector.shape_cast %271 : vector<16xf32> to vector<16x1xf32>
    %273 = vector.broadcast %272 : vector<16x1xf32> to vector<16x16xf32>
    %274 = arith.subf %270, %273 : vector<16x16xf32>
    %275 = math.exp %274 : vector<16x16xf32>
    %cst_114 = arith.constant dense<0.000000e+00> : vector<16xf32>
    %276 = vector.multi_reduction <add>, %275, %cst_114 [1] : vector<16x16xf32> to vector<16xf32>
    %277 = vector.shape_cast %276 : vector<16xf32> to vector<16x1xf32>
    %278 = vector.broadcast %277 : vector<16x1xf32> to vector<16x16xf32>
    %279 = arith.divf %275, %278 : vector<16x16xf32>
    %cst_115 = arith.constant dense<0.000000e+00> : vector<16x8xf32>
    %280 = tpu.matmul %279, %267, %cst_115 {dimension_numbers = #tpu.dot_dimension_numbers<[1], [0], [0], [1], [0, 0, 1, 1], [], []>} : vector<16x16xf32>, vector<16x8xf32>, vector<16x8xf32> -> vector<16x8xf32>
    %281 = vector.extract_strided_slice %223 {offsets = [0, 24], sizes = [16, 8], strides = [1, 1]} : vector<16x32xf32> to vector<16x8xf32>
    %cst_116 = arith.constant 0.353553385 : f32
    %282 = vector.broadcast %cst_116 : f32 to vector<16x8xf32>
    %283 = arith.mulf %281, %282 : vector<16x8xf32>
    %284 = vector.extract_strided_slice %226 {offsets = [0, 24], sizes = [16, 8], strides = [1, 1]} : vector<16x64xf32> to vector<16x8xf32>
    %285 = vector.extract_strided_slice %226 {offsets = [0, 56], sizes = [16, 8], strides = [1, 1]} : vector<16x64xf32> to vector<16x8xf32>
    "tpu.trace_start"() <{level = 10 : i32, message = "qe,ke->qk"}> : () -> ()
    %cst_117 = arith.constant dense<0.000000e+00> : vector<16x16xf32>
    %286 = tpu.matmul %283, %284, %cst_117 {dimension_numbers = #tpu.dot_dimension_numbers<[1], [1], [0], [0], [0, 0, 1, 0], [], []>} : vector<16x8xf32>, vector<16x8xf32>, vector<16x16xf32> -> vector<16x16xf32>
    %cst_118 = arith.constant -1.000000e+30 : f32
    "tpu.trace_stop"() : () -> ()
    %287 = vector.broadcast %cst_118 : f32 to vector<16x16xf32>
    %288 = arith.select %11, %286, %287 : vector<16x16xi1>, vector<16x16xf32>
    %cst_119 = arith.constant dense<0xFF800000> : vector<16xf32>
    %289 = vector.multi_reduction <maximumf>, %288, %cst_119 [1] : vector<16x16xf32> to vector<16xf32>
    %290 = vector.shape_cast %289 : vector<16xf32> to vector<16x1xf32>
    %291 = vector.broadcast %290 : vector<16x1xf32> to vector<16x16xf32>
    %292 = arith.subf %288, %291 : vector<16x16xf32>
    %293 = math.exp %292 : vector<16x16xf32>
    %cst_120 = arith.constant dense<0.000000e+00> : vector<16xf32>
    %294 = vector.multi_reduction <add>, %293, %cst_120 [1] : vector<16x16xf32> to vector<16xf32>
    %295 = vector.shape_cast %294 : vector<16xf32> to vector<16x1xf32>
    %296 = vector.broadcast %295 : vector<16x1xf32> to vector<16x16xf32>
    %297 = arith.divf %293, %296 : vector<16x16xf32>
    %cst_121 = arith.constant dense<0.000000e+00> : vector<16x8xf32>
    %298 = tpu.matmul %297, %285, %cst_121 {dimension_numbers = #tpu.dot_dimension_numbers<[1], [0], [0], [1], [0, 0, 1, 1], [], []>} : vector<16x16xf32>, vector<16x8xf32>, vector<16x8xf32> -> vector<16x8xf32>
    %299 = tpu.concatenate %244, %262, %280, %298 in 1 : vector<16x8xf32>, vector<16x8xf32>, vector<16x8xf32>, vector<16x8xf32> -> vector<16x32xf32>
    %cst_122 = arith.constant dense<0.000000e+00> : vector<16x32xf32>
    %300 = tpu.matmul %299, %217, %cst_122 {dimension_numbers = #tpu.dot_dimension_numbers<[1], [0], [0], [1], [0, 0, 1, 1], [], []>} : vector<16x32xf32>, vector<32x32xf32>, vector<16x32xf32> -> vector<16x32xf32>
    %301 = vector.broadcast %220 : vector<1x32xf32> to vector<16x32xf32>
    %302 = arith.addf %300, %301 : vector<16x32xf32>
    %303 = arith.addf %302, %211 : vector<16x32xf32>
    %c14 = arith.constant 14 : index
    %c0_123 = arith.constant 0 : index
    %304 = vector.load %arg4[%c14, %c0_123] : memref<36x96xf32, #tpu.memory_space<vmem>>, vector<1x32xf32>
    %c15 = arith.constant 15 : index
    %c0_124 = arith.constant 0 : index
    %305 = vector.load %arg4[%c15, %c0_124] : memref<36x96xf32, #tpu.memory_space<vmem>>, vector<1x32xf32>
    %cst_125 = arith.constant dense<0.000000e+00> : vector<16xf32>
    %306 = vector.multi_reduction <add>, %303, %cst_125 [1] : vector<16x32xf32> to vector<16xf32>
    %307 = vector.shape_cast %306 : vector<16xf32> to vector<16x1xf32>
    %cst_126 = arith.constant 3.200000e+01 : f32
    %308 = vector.broadcast %cst_126 : f32 to vector<16x1xf32>
    %309 = arith.divf %307, %308 : vector<16x1xf32>
    %310 = vector.broadcast %309 : vector<16x1xf32> to vector<16x32xf32>
    %311 = arith.subf %303, %310 : vector<16x32xf32>
    %312 = arith.mulf %311, %311 : vector<16x32xf32>
    %cst_127 = arith.constant dense<0.000000e+00> : vector<16xf32>
    %313 = vector.multi_reduction <add>, %312, %cst_127 [1] : vector<16x32xf32> to vector<16xf32>
    %314 = vector.shape_cast %313 : vector<16xf32> to vector<16x1xf32>
    %cst_128 = arith.constant 3.200000e+01 : f32
    %315 = vector.broadcast %cst_128 : f32 to vector<16x1xf32>
    %316 = arith.divf %314, %315 : vector<16x1xf32>
    %cst_129 = arith.constant 9.99999974E-6 : f32
    %317 = vector.broadcast %cst_129 : f32 to vector<16x1xf32>
    %318 = arith.addf %316, %317 : vector<16x1xf32>
    %319 = math.rsqrt %318 : vector<16x1xf32>
    %320 = vector.broadcast %319 : vector<16x1xf32> to vector<16x32xf32>
    %321 = arith.mulf %311, %320 : vector<16x32xf32>
    %322 = vector.broadcast %304 : vector<1x32xf32> to vector<16x32xf32>
    %323 = arith.mulf %321, %322 : vector<16x32xf32>
    %324 = vector.broadcast %305 : vector<1x32xf32> to vector<16x32xf32>
    %325 = arith.addf %323, %324 : vector<16x32xf32>
    %c2_130 = arith.constant 2 : index
    %c0_131 = arith.constant 0 : index
    %c0_132 = arith.constant 0 : index
    %326 = vector.load %arg2[%c2_130, %c0_131, %c0_132] : memref<6x32x128xf32, #tpu.memory_space<vmem>>, vector<1x32x32xf32>
    %327 = vector.shape_cast %326 : vector<1x32x32xf32> to vector<32x32xf32>
    %c2_133 = arith.constant 2 : index
    %c0_134 = arith.constant 0 : index
    %c32_135 = arith.constant 32 : index
    %328 = vector.load %arg2[%c2_133, %c0_134, %c32_135] : memref<6x32x128xf32, #tpu.memory_space<vmem>>, vector<1x32x64xf32>
    %329 = vector.shape_cast %328 : vector<1x32x64xf32> to vector<32x64xf32>
    %c2_136 = arith.constant 2 : index
    %c0_137 = arith.constant 0 : index
    %c96_138 = arith.constant 96 : index
    %330 = vector.load %arg2[%c2_136, %c0_137, %c96_138] : memref<6x32x128xf32, #tpu.memory_space<vmem>>, vector<1x32x32xf32>
    %331 = vector.shape_cast %330 : vector<1x32x32xf32> to vector<32x32xf32>
    %c7 = arith.constant 7 : index
    %c0_139 = arith.constant 0 : index
    %332 = vector.load %arg4[%c7, %c0_139] : memref<36x96xf32, #tpu.memory_space<vmem>>, vector<1x32xf32>
    %c7_140 = arith.constant 7 : index
    %c32_141 = arith.constant 32 : index
    %333 = vector.load %arg4[%c7_140, %c32_141] : memref<36x96xf32, #tpu.memory_space<vmem>>, vector<1x64xf32>
    %c8 = arith.constant 8 : index
    %c0_142 = arith.constant 0 : index
    %334 = vector.load %arg4[%c8, %c0_142] : memref<36x96xf32, #tpu.memory_space<vmem>>, vector<1x32xf32>
    %cst_143 = arith.constant dense<0.000000e+00> : vector<16x32xf32>
    %335 = tpu.matmul %66, %327, %cst_143 {dimension_numbers = #tpu.dot_dimension_numbers<[1], [0], [0], [1], [0, 0, 1, 1], [], []>} : vector<16x32xf32>, vector<32x32xf32>, vector<16x32xf32> -> vector<16x32xf32>
    %336 = vector.broadcast %332 : vector<1x32xf32> to vector<16x32xf32>
    %337 = arith.addf %335, %336 : vector<16x32xf32>
    %cst_144 = arith.constant dense<0.000000e+00> : vector<16x64xf32>
    %338 = tpu.matmul %211, %329, %cst_144 {dimension_numbers = #tpu.dot_dimension_numbers<[1], [0], [0], [1], [0, 0, 1, 1], [], []>} : vector<16x32xf32>, vector<32x64xf32>, vector<16x64xf32> -> vector<16x64xf32>
    %339 = vector.broadcast %333 : vector<1x64xf32> to vector<16x64xf32>
    %340 = arith.addf %338, %339 : vector<16x64xf32>
    %341 = vector.extract_strided_slice %337 {offsets = [0, 0], sizes = [16, 8], strides = [1, 1]} : vector<16x32xf32> to vector<16x8xf32>
    %cst_145 = arith.constant 0.353553385 : f32
    %342 = vector.broadcast %cst_145 : f32 to vector<16x8xf32>
    %343 = arith.mulf %341, %342 : vector<16x8xf32>
    %344 = vector.extract_strided_slice %340 {offsets = [0, 0], sizes = [16, 8], strides = [1, 1]} : vector<16x64xf32> to vector<16x8xf32>
    %345 = vector.extract_strided_slice %340 {offsets = [0, 32], sizes = [16, 8], strides = [1, 1]} : vector<16x64xf32> to vector<16x8xf32>
    "tpu.trace_start"() <{level = 10 : i32, message = "qe,ke->qk"}> : () -> ()
    %cst_146 = arith.constant dense<0.000000e+00> : vector<16x16xf32>
    %346 = tpu.matmul %343, %344, %cst_146 {dimension_numbers = #tpu.dot_dimension_numbers<[1], [1], [0], [0], [0, 0, 1, 0], [], []>} : vector<16x8xf32>, vector<16x8xf32>, vector<16x16xf32> -> vector<16x16xf32>
    %cst_147 = arith.constant -1.000000e+30 : f32
    "tpu.trace_stop"() : () -> ()
    %347 = vector.broadcast %cst_147 : f32 to vector<16x16xf32>
    %348 = arith.select %11, %346, %347 : vector<16x16xi1>, vector<16x16xf32>
    %cst_148 = arith.constant dense<0xFF800000> : vector<16xf32>
    %349 = vector.multi_reduction <maximumf>, %348, %cst_148 [1] : vector<16x16xf32> to vector<16xf32>
    %350 = vector.shape_cast %349 : vector<16xf32> to vector<16x1xf32>
    %351 = vector.broadcast %350 : vector<16x1xf32> to vector<16x16xf32>
    %352 = arith.subf %348, %351 : vector<16x16xf32>
    %353 = math.exp %352 : vector<16x16xf32>
    %cst_149 = arith.constant dense<0.000000e+00> : vector<16xf32>
    %354 = vector.multi_reduction <add>, %353, %cst_149 [1] : vector<16x16xf32> to vector<16xf32>
    %355 = vector.shape_cast %354 : vector<16xf32> to vector<16x1xf32>
    %356 = vector.broadcast %355 : vector<16x1xf32> to vector<16x16xf32>
    %357 = arith.divf %353, %356 : vector<16x16xf32>
    %cst_150 = arith.constant dense<0.000000e+00> : vector<16x8xf32>
    %358 = tpu.matmul %357, %345, %cst_150 {dimension_numbers = #tpu.dot_dimension_numbers<[1], [0], [0], [1], [0, 0, 1, 1], [], []>} : vector<16x16xf32>, vector<16x8xf32>, vector<16x8xf32> -> vector<16x8xf32>
    %359 = vector.extract_strided_slice %337 {offsets = [0, 8], sizes = [16, 8], strides = [1, 1]} : vector<16x32xf32> to vector<16x8xf32>
    %cst_151 = arith.constant 0.353553385 : f32
    %360 = vector.broadcast %cst_151 : f32 to vector<16x8xf32>
    %361 = arith.mulf %359, %360 : vector<16x8xf32>
    %362 = vector.extract_strided_slice %340 {offsets = [0, 8], sizes = [16, 8], strides = [1, 1]} : vector<16x64xf32> to vector<16x8xf32>
    %363 = vector.extract_strided_slice %340 {offsets = [0, 40], sizes = [16, 8], strides = [1, 1]} : vector<16x64xf32> to vector<16x8xf32>
    "tpu.trace_start"() <{level = 10 : i32, message = "qe,ke->qk"}> : () -> ()
    %cst_152 = arith.constant dense<0.000000e+00> : vector<16x16xf32>
    %364 = tpu.matmul %361, %362, %cst_152 {dimension_numbers = #tpu.dot_dimension_numbers<[1], [1], [0], [0], [0, 0, 1, 0], [], []>} : vector<16x8xf32>, vector<16x8xf32>, vector<16x16xf32> -> vector<16x16xf32>
    %cst_153 = arith.constant -1.000000e+30 : f32
    "tpu.trace_stop"() : () -> ()
    %365 = vector.broadcast %cst_153 : f32 to vector<16x16xf32>
    %366 = arith.select %11, %364, %365 : vector<16x16xi1>, vector<16x16xf32>
    %cst_154 = arith.constant dense<0xFF800000> : vector<16xf32>
    %367 = vector.multi_reduction <maximumf>, %366, %cst_154 [1] : vector<16x16xf32> to vector<16xf32>
    %368 = vector.shape_cast %367 : vector<16xf32> to vector<16x1xf32>
    %369 = vector.broadcast %368 : vector<16x1xf32> to vector<16x16xf32>
    %370 = arith.subf %366, %369 : vector<16x16xf32>
    %371 = math.exp %370 : vector<16x16xf32>
    %cst_155 = arith.constant dense<0.000000e+00> : vector<16xf32>
    %372 = vector.multi_reduction <add>, %371, %cst_155 [1] : vector<16x16xf32> to vector<16xf32>
    %373 = vector.shape_cast %372 : vector<16xf32> to vector<16x1xf32>
    %374 = vector.broadcast %373 : vector<16x1xf32> to vector<16x16xf32>
    %375 = arith.divf %371, %374 : vector<16x16xf32>
    %cst_156 = arith.constant dense<0.000000e+00> : vector<16x8xf32>
    %376 = tpu.matmul %375, %363, %cst_156 {dimension_numbers = #tpu.dot_dimension_numbers<[1], [0], [0], [1], [0, 0, 1, 1], [], []>} : vector<16x16xf32>, vector<16x8xf32>, vector<16x8xf32> -> vector<16x8xf32>
    %377 = vector.extract_strided_slice %337 {offsets = [0, 16], sizes = [16, 8], strides = [1, 1]} : vector<16x32xf32> to vector<16x8xf32>
    %cst_157 = arith.constant 0.353553385 : f32
    %378 = vector.broadcast %cst_157 : f32 to vector<16x8xf32>
    %379 = arith.mulf %377, %378 : vector<16x8xf32>
    %380 = vector.extract_strided_slice %340 {offsets = [0, 16], sizes = [16, 8], strides = [1, 1]} : vector<16x64xf32> to vector<16x8xf32>
    %381 = vector.extract_strided_slice %340 {offsets = [0, 48], sizes = [16, 8], strides = [1, 1]} : vector<16x64xf32> to vector<16x8xf32>
    "tpu.trace_start"() <{level = 10 : i32, message = "qe,ke->qk"}> : () -> ()
    %cst_158 = arith.constant dense<0.000000e+00> : vector<16x16xf32>
    %382 = tpu.matmul %379, %380, %cst_158 {dimension_numbers = #tpu.dot_dimension_numbers<[1], [1], [0], [0], [0, 0, 1, 0], [], []>} : vector<16x8xf32>, vector<16x8xf32>, vector<16x16xf32> -> vector<16x16xf32>
    %cst_159 = arith.constant -1.000000e+30 : f32
    "tpu.trace_stop"() : () -> ()
    %383 = vector.broadcast %cst_159 : f32 to vector<16x16xf32>
    %384 = arith.select %11, %382, %383 : vector<16x16xi1>, vector<16x16xf32>
    %cst_160 = arith.constant dense<0xFF800000> : vector<16xf32>
    %385 = vector.multi_reduction <maximumf>, %384, %cst_160 [1] : vector<16x16xf32> to vector<16xf32>
    %386 = vector.shape_cast %385 : vector<16xf32> to vector<16x1xf32>
    %387 = vector.broadcast %386 : vector<16x1xf32> to vector<16x16xf32>
    %388 = arith.subf %384, %387 : vector<16x16xf32>
    %389 = math.exp %388 : vector<16x16xf32>
    %cst_161 = arith.constant dense<0.000000e+00> : vector<16xf32>
    %390 = vector.multi_reduction <add>, %389, %cst_161 [1] : vector<16x16xf32> to vector<16xf32>
    %391 = vector.shape_cast %390 : vector<16xf32> to vector<16x1xf32>
    %392 = vector.broadcast %391 : vector<16x1xf32> to vector<16x16xf32>
    %393 = arith.divf %389, %392 : vector<16x16xf32>
    %cst_162 = arith.constant dense<0.000000e+00> : vector<16x8xf32>
    %394 = tpu.matmul %393, %381, %cst_162 {dimension_numbers = #tpu.dot_dimension_numbers<[1], [0], [0], [1], [0, 0, 1, 1], [], []>} : vector<16x16xf32>, vector<16x8xf32>, vector<16x8xf32> -> vector<16x8xf32>
    %395 = vector.extract_strided_slice %337 {offsets = [0, 24], sizes = [16, 8], strides = [1, 1]} : vector<16x32xf32> to vector<16x8xf32>
    %cst_163 = arith.constant 0.353553385 : f32
    %396 = vector.broadcast %cst_163 : f32 to vector<16x8xf32>
    %397 = arith.mulf %395, %396 : vector<16x8xf32>
    %398 = vector.extract_strided_slice %340 {offsets = [0, 24], sizes = [16, 8], strides = [1, 1]} : vector<16x64xf32> to vector<16x8xf32>
    %399 = vector.extract_strided_slice %340 {offsets = [0, 56], sizes = [16, 8], strides = [1, 1]} : vector<16x64xf32> to vector<16x8xf32>
    "tpu.trace_start"() <{level = 10 : i32, message = "qe,ke->qk"}> : () -> ()
    %cst_164 = arith.constant dense<0.000000e+00> : vector<16x16xf32>
    %400 = tpu.matmul %397, %398, %cst_164 {dimension_numbers = #tpu.dot_dimension_numbers<[1], [1], [0], [0], [0, 0, 1, 0], [], []>} : vector<16x8xf32>, vector<16x8xf32>, vector<16x16xf32> -> vector<16x16xf32>
    %cst_165 = arith.constant -1.000000e+30 : f32
    "tpu.trace_stop"() : () -> ()
    %401 = vector.broadcast %cst_165 : f32 to vector<16x16xf32>
    %402 = arith.select %11, %400, %401 : vector<16x16xi1>, vector<16x16xf32>
    %cst_166 = arith.constant dense<0xFF800000> : vector<16xf32>
    %403 = vector.multi_reduction <maximumf>, %402, %cst_166 [1] : vector<16x16xf32> to vector<16xf32>
    %404 = vector.shape_cast %403 : vector<16xf32> to vector<16x1xf32>
    %405 = vector.broadcast %404 : vector<16x1xf32> to vector<16x16xf32>
    %406 = arith.subf %402, %405 : vector<16x16xf32>
    %407 = math.exp %406 : vector<16x16xf32>
    %cst_167 = arith.constant dense<0.000000e+00> : vector<16xf32>
    %408 = vector.multi_reduction <add>, %407, %cst_167 [1] : vector<16x16xf32> to vector<16xf32>
    %409 = vector.shape_cast %408 : vector<16xf32> to vector<16x1xf32>
    %410 = vector.broadcast %409 : vector<16x1xf32> to vector<16x16xf32>
    %411 = arith.divf %407, %410 : vector<16x16xf32>
    %cst_168 = arith.constant dense<0.000000e+00> : vector<16x8xf32>
    %412 = tpu.matmul %411, %399, %cst_168 {dimension_numbers = #tpu.dot_dimension_numbers<[1], [0], [0], [1], [0, 0, 1, 1], [], []>} : vector<16x16xf32>, vector<16x8xf32>, vector<16x8xf32> -> vector<16x8xf32>
    %413 = tpu.concatenate %358, %376, %394, %412 in 1 : vector<16x8xf32>, vector<16x8xf32>, vector<16x8xf32>, vector<16x8xf32> -> vector<16x32xf32>
    %cst_169 = arith.constant dense<0.000000e+00> : vector<16x32xf32>
    %414 = tpu.matmul %413, %331, %cst_169 {dimension_numbers = #tpu.dot_dimension_numbers<[1], [0], [0], [1], [0, 0, 1, 1], [], []>} : vector<16x32xf32>, vector<32x32xf32>, vector<16x32xf32> -> vector<16x32xf32>
    %415 = vector.broadcast %334 : vector<1x32xf32> to vector<16x32xf32>
    %416 = arith.addf %414, %415 : vector<16x32xf32>
    %417 = arith.addf %416, %66 : vector<16x32xf32>
    %c16 = arith.constant 16 : index
    %c0_170 = arith.constant 0 : index
    %418 = vector.load %arg4[%c16, %c0_170] : memref<36x96xf32, #tpu.memory_space<vmem>>, vector<1x32xf32>
    %c17 = arith.constant 17 : index
    %c0_171 = arith.constant 0 : index
    %419 = vector.load %arg4[%c17, %c0_171] : memref<36x96xf32, #tpu.memory_space<vmem>>, vector<1x32xf32>
    %cst_172 = arith.constant dense<0.000000e+00> : vector<16xf32>
    %420 = vector.multi_reduction <add>, %417, %cst_172 [1] : vector<16x32xf32> to vector<16xf32>
    %421 = vector.shape_cast %420 : vector<16xf32> to vector<16x1xf32>
    %cst_173 = arith.constant 3.200000e+01 : f32
    %422 = vector.broadcast %cst_173 : f32 to vector<16x1xf32>
    %423 = arith.divf %421, %422 : vector<16x1xf32>
    %424 = vector.broadcast %423 : vector<16x1xf32> to vector<16x32xf32>
    %425 = arith.subf %417, %424 : vector<16x32xf32>
    %426 = arith.mulf %425, %425 : vector<16x32xf32>
    %cst_174 = arith.constant dense<0.000000e+00> : vector<16xf32>
    %427 = vector.multi_reduction <add>, %426, %cst_174 [1] : vector<16x32xf32> to vector<16xf32>
    %428 = vector.shape_cast %427 : vector<16xf32> to vector<16x1xf32>
    %cst_175 = arith.constant 3.200000e+01 : f32
    %429 = vector.broadcast %cst_175 : f32 to vector<16x1xf32>
    %430 = arith.divf %428, %429 : vector<16x1xf32>
    %cst_176 = arith.constant 9.99999974E-6 : f32
    %431 = vector.broadcast %cst_176 : f32 to vector<16x1xf32>
    %432 = arith.addf %430, %431 : vector<16x1xf32>
    %433 = math.rsqrt %432 : vector<16x1xf32>
    %434 = vector.broadcast %433 : vector<16x1xf32> to vector<16x32xf32>
    %435 = arith.mulf %425, %434 : vector<16x32xf32>
    %436 = vector.broadcast %418 : vector<1x32xf32> to vector<16x32xf32>
    %437 = arith.mulf %435, %436 : vector<16x32xf32>
    %438 = vector.broadcast %419 : vector<1x32xf32> to vector<16x32xf32>
    %439 = arith.addf %437, %438 : vector<16x32xf32>
    %c18 = arith.constant 18 : index
    %c0_177 = arith.constant 0 : index
    %440 = vector.load %arg4[%c18, %c0_177] : memref<36x96xf32, #tpu.memory_space<vmem>>, vector<1x32xf32>
    %c2_i32 = arith.constant 2 : i32
    %441 = tpu.dynamic_rotate %439 by %c2_i32 dim 0 : vector<16x32xf32>, i32 -> vector<16x32xf32>
    %c-2_i32 = arith.constant -2 : i32
    %442 = vector.broadcast %c-2_i32 : i32 to vector<16x32xi32>
    %443 = arith.addi %2, %442 : vector<16x32xi32>
    %c0_i32_178 = arith.constant 0 : i32
    %444 = vector.broadcast %c0_i32_178 : i32 to vector<16x32xi32>
    %445 = arith.cmpi sge, %443, %444 : vector<16x32xi32>
    %c-2_i32_179 = arith.constant -2 : i32
    %446 = vector.broadcast %c-2_i32_179 : i32 to vector<16x32xi32>
    %447 = arith.addi %2, %446 : vector<16x32xi32>
    %c8_i32_180 = arith.constant 8 : i32
    %448 = vector.broadcast %c8_i32_180 : i32 to vector<16x32xi32>
    %449 = arith.cmpi slt, %447, %448 : vector<16x32xi32>
    %450 = arith.andi %445, %449 : vector<16x32xi1>
    %cst_181 = arith.constant 0.000000e+00 : f32
    %451 = vector.broadcast %cst_181 : f32 to vector<16x32xf32>
    %452 = arith.select %450, %441, %451 : vector<16x32xi1>, vector<16x32xf32>
    %c14_i32 = arith.constant 14 : i32
    %453 = tpu.dynamic_rotate %439 by %c14_i32 dim 0 : vector<16x32xf32>, i32 -> vector<16x32xf32>
    %c2_i32_182 = arith.constant 2 : i32
    %454 = vector.broadcast %c2_i32_182 : i32 to vector<16x32xi32>
    %455 = arith.addi %2, %454 : vector<16x32xi32>
    %c0_i32_183 = arith.constant 0 : i32
    %456 = vector.broadcast %c0_i32_183 : i32 to vector<16x32xi32>
    %457 = arith.cmpi sge, %455, %456 : vector<16x32xi32>
    %c2_i32_184 = arith.constant 2 : i32
    %458 = vector.broadcast %c2_i32_184 : i32 to vector<16x32xi32>
    %459 = arith.addi %2, %458 : vector<16x32xi32>
    %c8_i32_185 = arith.constant 8 : i32
    %460 = vector.broadcast %c8_i32_185 : i32 to vector<16x32xi32>
    %461 = arith.cmpi slt, %459, %460 : vector<16x32xi32>
    %462 = arith.andi %457, %461 : vector<16x32xi1>
    %cst_186 = arith.constant 0.000000e+00 : f32
    %463 = vector.broadcast %cst_186 : f32 to vector<16x32xf32>
    %464 = arith.select %462, %453, %463 : vector<16x32xi1>, vector<16x32xf32>
    %465 = tpu.concatenate %452, %439, %464 in 1 : vector<16x32xf32>, vector<16x32xf32>, vector<16x32xf32> -> vector<16x96xf32>
    %c1_187 = arith.constant 1 : index
    %c0_188 = arith.constant 0 : index
    %c0_189 = arith.constant 0 : index
    %466 = vector.load %arg3[%c1_187, %c0_188, %c0_189] : memref<2x128x32xf32, #tpu.memory_space<vmem>>, vector<1x96x32xf32>
    %467 = vector.shape_cast %466 : vector<1x96x32xf32> to vector<96x32xf32>
    %cst_190 = arith.constant dense<0.000000e+00> : vector<16x32xf32>
    %468 = tpu.matmul %465, %467, %cst_190 {dimension_numbers = #tpu.dot_dimension_numbers<[1], [0], [0], [1], [0, 0, 1, 1], [], []>} : vector<16x96xf32>, vector<96x32xf32>, vector<16x32xf32> -> vector<16x32xf32>
    %469 = vector.broadcast %440 : vector<1x32xf32> to vector<16x32xf32>
    %470 = arith.addf %468, %469 : vector<16x32xf32>
    %cst_191 = arith.constant 0.000000e+00 : f32
    %471 = vector.broadcast %cst_191 : f32 to vector<16x32xf32>
    %472 = arith.maximumf %470, %471 : vector<16x32xf32>
    %c19 = arith.constant 19 : index
    %c0_192 = arith.constant 0 : index
    %473 = vector.load %arg4[%c19, %c0_192] : memref<36x96xf32, #tpu.memory_space<vmem>>, vector<1x32xf32>
    %c20 = arith.constant 20 : index
    %c0_193 = arith.constant 0 : index
    %474 = vector.load %arg4[%c20, %c0_193] : memref<36x96xf32, #tpu.memory_space<vmem>>, vector<1x32xf32>
    %cst_194 = arith.constant dense<0.000000e+00> : vector<16xf32>
    %475 = vector.multi_reduction <add>, %472, %cst_194 [1] : vector<16x32xf32> to vector<16xf32>
    %476 = vector.shape_cast %475 : vector<16xf32> to vector<16x1xf32>
    %cst_195 = arith.constant 3.200000e+01 : f32
    %477 = vector.broadcast %cst_195 : f32 to vector<16x1xf32>
    %478 = arith.divf %476, %477 : vector<16x1xf32>
    %479 = vector.broadcast %478 : vector<16x1xf32> to vector<16x32xf32>
    %480 = arith.subf %472, %479 : vector<16x32xf32>
    %481 = arith.mulf %480, %480 : vector<16x32xf32>
    %cst_196 = arith.constant dense<0.000000e+00> : vector<16xf32>
    %482 = vector.multi_reduction <add>, %481, %cst_196 [1] : vector<16x32xf32> to vector<16xf32>
    %483 = vector.shape_cast %482 : vector<16xf32> to vector<16x1xf32>
    %cst_197 = arith.constant 3.200000e+01 : f32
    %484 = vector.broadcast %cst_197 : f32 to vector<16x1xf32>
    %485 = arith.divf %483, %484 : vector<16x1xf32>
    %cst_198 = arith.constant 9.99999974E-6 : f32
    %486 = vector.broadcast %cst_198 : f32 to vector<16x1xf32>
    %487 = arith.addf %485, %486 : vector<16x1xf32>
    %488 = math.rsqrt %487 : vector<16x1xf32>
    %489 = vector.broadcast %488 : vector<16x1xf32> to vector<16x32xf32>
    %490 = arith.mulf %480, %489 : vector<16x32xf32>
    %491 = vector.broadcast %473 : vector<1x32xf32> to vector<16x32xf32>
    %492 = arith.mulf %490, %491 : vector<16x32xf32>
    %493 = vector.broadcast %474 : vector<1x32xf32> to vector<16x32xf32>
    %494 = arith.addf %492, %493 : vector<16x32xf32>
    %c3_199 = arith.constant 3 : index
    %c0_200 = arith.constant 0 : index
    %c0_201 = arith.constant 0 : index
    %495 = vector.load %arg2[%c3_199, %c0_200, %c0_201] : memref<6x32x128xf32, #tpu.memory_space<vmem>>, vector<1x32x32xf32>
    %496 = vector.shape_cast %495 : vector<1x32x32xf32> to vector<32x32xf32>
    %c3_202 = arith.constant 3 : index
    %c0_203 = arith.constant 0 : index
    %c32_204 = arith.constant 32 : index
    %497 = vector.load %arg2[%c3_202, %c0_203, %c32_204] : memref<6x32x128xf32, #tpu.memory_space<vmem>>, vector<1x32x64xf32>
    %498 = vector.shape_cast %497 : vector<1x32x64xf32> to vector<32x64xf32>
    %c3_205 = arith.constant 3 : index
    %c0_206 = arith.constant 0 : index
    %c96_207 = arith.constant 96 : index
    %499 = vector.load %arg2[%c3_205, %c0_206, %c96_207] : memref<6x32x128xf32, #tpu.memory_space<vmem>>, vector<1x32x32xf32>
    %500 = vector.shape_cast %499 : vector<1x32x32xf32> to vector<32x32xf32>
    %c21 = arith.constant 21 : index
    %c0_208 = arith.constant 0 : index
    %501 = vector.load %arg4[%c21, %c0_208] : memref<36x96xf32, #tpu.memory_space<vmem>>, vector<1x32xf32>
    %c21_209 = arith.constant 21 : index
    %c32_210 = arith.constant 32 : index
    %502 = vector.load %arg4[%c21_209, %c32_210] : memref<36x96xf32, #tpu.memory_space<vmem>>, vector<1x64xf32>
    %c22 = arith.constant 22 : index
    %c0_211 = arith.constant 0 : index
    %503 = vector.load %arg4[%c22, %c0_211] : memref<36x96xf32, #tpu.memory_space<vmem>>, vector<1x32xf32>
    %cst_212 = arith.constant dense<0.000000e+00> : vector<16x32xf32>
    %504 = tpu.matmul %325, %496, %cst_212 {dimension_numbers = #tpu.dot_dimension_numbers<[1], [0], [0], [1], [0, 0, 1, 1], [], []>} : vector<16x32xf32>, vector<32x32xf32>, vector<16x32xf32> -> vector<16x32xf32>
    %505 = vector.broadcast %501 : vector<1x32xf32> to vector<16x32xf32>
    %506 = arith.addf %504, %505 : vector<16x32xf32>
    %cst_213 = arith.constant dense<0.000000e+00> : vector<16x64xf32>
    %507 = tpu.matmul %325, %498, %cst_213 {dimension_numbers = #tpu.dot_dimension_numbers<[1], [0], [0], [1], [0, 0, 1, 1], [], []>} : vector<16x32xf32>, vector<32x64xf32>, vector<16x64xf32> -> vector<16x64xf32>
    %508 = vector.broadcast %502 : vector<1x64xf32> to vector<16x64xf32>
    %509 = arith.addf %507, %508 : vector<16x64xf32>
    %510 = vector.extract_strided_slice %506 {offsets = [0, 0], sizes = [16, 8], strides = [1, 1]} : vector<16x32xf32> to vector<16x8xf32>
    %cst_214 = arith.constant 0.353553385 : f32
    %511 = vector.broadcast %cst_214 : f32 to vector<16x8xf32>
    %512 = arith.mulf %510, %511 : vector<16x8xf32>
    %513 = vector.extract_strided_slice %509 {offsets = [0, 0], sizes = [16, 8], strides = [1, 1]} : vector<16x64xf32> to vector<16x8xf32>
    %514 = vector.extract_strided_slice %509 {offsets = [0, 32], sizes = [16, 8], strides = [1, 1]} : vector<16x64xf32> to vector<16x8xf32>
    "tpu.trace_start"() <{level = 10 : i32, message = "qe,ke->qk"}> : () -> ()
    %cst_215 = arith.constant dense<0.000000e+00> : vector<16x16xf32>
    %515 = tpu.matmul %512, %513, %cst_215 {dimension_numbers = #tpu.dot_dimension_numbers<[1], [1], [0], [0], [0, 0, 1, 0], [], []>} : vector<16x8xf32>, vector<16x8xf32>, vector<16x16xf32> -> vector<16x16xf32>
    %cst_216 = arith.constant -1.000000e+30 : f32
    "tpu.trace_stop"() : () -> ()
    %516 = vector.broadcast %cst_216 : f32 to vector<16x16xf32>
    %517 = arith.select %11, %515, %516 : vector<16x16xi1>, vector<16x16xf32>
    %cst_217 = arith.constant dense<0xFF800000> : vector<16xf32>
    %518 = vector.multi_reduction <maximumf>, %517, %cst_217 [1] : vector<16x16xf32> to vector<16xf32>
    %519 = vector.shape_cast %518 : vector<16xf32> to vector<16x1xf32>
    %520 = vector.broadcast %519 : vector<16x1xf32> to vector<16x16xf32>
    %521 = arith.subf %517, %520 : vector<16x16xf32>
    %522 = math.exp %521 : vector<16x16xf32>
    %cst_218 = arith.constant dense<0.000000e+00> : vector<16xf32>
    %523 = vector.multi_reduction <add>, %522, %cst_218 [1] : vector<16x16xf32> to vector<16xf32>
    %524 = vector.shape_cast %523 : vector<16xf32> to vector<16x1xf32>
    %525 = vector.broadcast %524 : vector<16x1xf32> to vector<16x16xf32>
    %526 = arith.divf %522, %525 : vector<16x16xf32>
    %cst_219 = arith.constant dense<0.000000e+00> : vector<16x8xf32>
    %527 = tpu.matmul %526, %514, %cst_219 {dimension_numbers = #tpu.dot_dimension_numbers<[1], [0], [0], [1], [0, 0, 1, 1], [], []>} : vector<16x16xf32>, vector<16x8xf32>, vector<16x8xf32> -> vector<16x8xf32>
    %528 = vector.extract_strided_slice %506 {offsets = [0, 8], sizes = [16, 8], strides = [1, 1]} : vector<16x32xf32> to vector<16x8xf32>
    %cst_220 = arith.constant 0.353553385 : f32
    %529 = vector.broadcast %cst_220 : f32 to vector<16x8xf32>
    %530 = arith.mulf %528, %529 : vector<16x8xf32>
    %531 = vector.extract_strided_slice %509 {offsets = [0, 8], sizes = [16, 8], strides = [1, 1]} : vector<16x64xf32> to vector<16x8xf32>
    %532 = vector.extract_strided_slice %509 {offsets = [0, 40], sizes = [16, 8], strides = [1, 1]} : vector<16x64xf32> to vector<16x8xf32>
    "tpu.trace_start"() <{level = 10 : i32, message = "qe,ke->qk"}> : () -> ()
    %cst_221 = arith.constant dense<0.000000e+00> : vector<16x16xf32>
    %533 = tpu.matmul %530, %531, %cst_221 {dimension_numbers = #tpu.dot_dimension_numbers<[1], [1], [0], [0], [0, 0, 1, 0], [], []>} : vector<16x8xf32>, vector<16x8xf32>, vector<16x16xf32> -> vector<16x16xf32>
    %cst_222 = arith.constant -1.000000e+30 : f32
    "tpu.trace_stop"() : () -> ()
    %534 = vector.broadcast %cst_222 : f32 to vector<16x16xf32>
    %535 = arith.select %11, %533, %534 : vector<16x16xi1>, vector<16x16xf32>
    %cst_223 = arith.constant dense<0xFF800000> : vector<16xf32>
    %536 = vector.multi_reduction <maximumf>, %535, %cst_223 [1] : vector<16x16xf32> to vector<16xf32>
    %537 = vector.shape_cast %536 : vector<16xf32> to vector<16x1xf32>
    %538 = vector.broadcast %537 : vector<16x1xf32> to vector<16x16xf32>
    %539 = arith.subf %535, %538 : vector<16x16xf32>
    %540 = math.exp %539 : vector<16x16xf32>
    %cst_224 = arith.constant dense<0.000000e+00> : vector<16xf32>
    %541 = vector.multi_reduction <add>, %540, %cst_224 [1] : vector<16x16xf32> to vector<16xf32>
    %542 = vector.shape_cast %541 : vector<16xf32> to vector<16x1xf32>
    %543 = vector.broadcast %542 : vector<16x1xf32> to vector<16x16xf32>
    %544 = arith.divf %540, %543 : vector<16x16xf32>
    %cst_225 = arith.constant dense<0.000000e+00> : vector<16x8xf32>
    %545 = tpu.matmul %544, %532, %cst_225 {dimension_numbers = #tpu.dot_dimension_numbers<[1], [0], [0], [1], [0, 0, 1, 1], [], []>} : vector<16x16xf32>, vector<16x8xf32>, vector<16x8xf32> -> vector<16x8xf32>
    %546 = vector.extract_strided_slice %506 {offsets = [0, 16], sizes = [16, 8], strides = [1, 1]} : vector<16x32xf32> to vector<16x8xf32>
    %cst_226 = arith.constant 0.353553385 : f32
    %547 = vector.broadcast %cst_226 : f32 to vector<16x8xf32>
    %548 = arith.mulf %546, %547 : vector<16x8xf32>
    %549 = vector.extract_strided_slice %509 {offsets = [0, 16], sizes = [16, 8], strides = [1, 1]} : vector<16x64xf32> to vector<16x8xf32>
    %550 = vector.extract_strided_slice %509 {offsets = [0, 48], sizes = [16, 8], strides = [1, 1]} : vector<16x64xf32> to vector<16x8xf32>
    "tpu.trace_start"() <{level = 10 : i32, message = "qe,ke->qk"}> : () -> ()
    %cst_227 = arith.constant dense<0.000000e+00> : vector<16x16xf32>
    %551 = tpu.matmul %548, %549, %cst_227 {dimension_numbers = #tpu.dot_dimension_numbers<[1], [1], [0], [0], [0, 0, 1, 0], [], []>} : vector<16x8xf32>, vector<16x8xf32>, vector<16x16xf32> -> vector<16x16xf32>
    %cst_228 = arith.constant -1.000000e+30 : f32
    "tpu.trace_stop"() : () -> ()
    %552 = vector.broadcast %cst_228 : f32 to vector<16x16xf32>
    %553 = arith.select %11, %551, %552 : vector<16x16xi1>, vector<16x16xf32>
    %cst_229 = arith.constant dense<0xFF800000> : vector<16xf32>
    %554 = vector.multi_reduction <maximumf>, %553, %cst_229 [1] : vector<16x16xf32> to vector<16xf32>
    %555 = vector.shape_cast %554 : vector<16xf32> to vector<16x1xf32>
    %556 = vector.broadcast %555 : vector<16x1xf32> to vector<16x16xf32>
    %557 = arith.subf %553, %556 : vector<16x16xf32>
    %558 = math.exp %557 : vector<16x16xf32>
    %cst_230 = arith.constant dense<0.000000e+00> : vector<16xf32>
    %559 = vector.multi_reduction <add>, %558, %cst_230 [1] : vector<16x16xf32> to vector<16xf32>
    %560 = vector.shape_cast %559 : vector<16xf32> to vector<16x1xf32>
    %561 = vector.broadcast %560 : vector<16x1xf32> to vector<16x16xf32>
    %562 = arith.divf %558, %561 : vector<16x16xf32>
    %cst_231 = arith.constant dense<0.000000e+00> : vector<16x8xf32>
    %563 = tpu.matmul %562, %550, %cst_231 {dimension_numbers = #tpu.dot_dimension_numbers<[1], [0], [0], [1], [0, 0, 1, 1], [], []>} : vector<16x16xf32>, vector<16x8xf32>, vector<16x8xf32> -> vector<16x8xf32>
    %564 = vector.extract_strided_slice %506 {offsets = [0, 24], sizes = [16, 8], strides = [1, 1]} : vector<16x32xf32> to vector<16x8xf32>
    %cst_232 = arith.constant 0.353553385 : f32
    %565 = vector.broadcast %cst_232 : f32 to vector<16x8xf32>
    %566 = arith.mulf %564, %565 : vector<16x8xf32>
    %567 = vector.extract_strided_slice %509 {offsets = [0, 24], sizes = [16, 8], strides = [1, 1]} : vector<16x64xf32> to vector<16x8xf32>
    %568 = vector.extract_strided_slice %509 {offsets = [0, 56], sizes = [16, 8], strides = [1, 1]} : vector<16x64xf32> to vector<16x8xf32>
    "tpu.trace_start"() <{level = 10 : i32, message = "qe,ke->qk"}> : () -> ()
    %cst_233 = arith.constant dense<0.000000e+00> : vector<16x16xf32>
    %569 = tpu.matmul %566, %567, %cst_233 {dimension_numbers = #tpu.dot_dimension_numbers<[1], [1], [0], [0], [0, 0, 1, 0], [], []>} : vector<16x8xf32>, vector<16x8xf32>, vector<16x16xf32> -> vector<16x16xf32>
    %cst_234 = arith.constant -1.000000e+30 : f32
    "tpu.trace_stop"() : () -> ()
    %570 = vector.broadcast %cst_234 : f32 to vector<16x16xf32>
    %571 = arith.select %11, %569, %570 : vector<16x16xi1>, vector<16x16xf32>
    %cst_235 = arith.constant dense<0xFF800000> : vector<16xf32>
    %572 = vector.multi_reduction <maximumf>, %571, %cst_235 [1] : vector<16x16xf32> to vector<16xf32>
    %573 = vector.shape_cast %572 : vector<16xf32> to vector<16x1xf32>
    %574 = vector.broadcast %573 : vector<16x1xf32> to vector<16x16xf32>
    %575 = arith.subf %571, %574 : vector<16x16xf32>
    %576 = math.exp %575 : vector<16x16xf32>
    %cst_236 = arith.constant dense<0.000000e+00> : vector<16xf32>
    %577 = vector.multi_reduction <add>, %576, %cst_236 [1] : vector<16x16xf32> to vector<16xf32>
    %578 = vector.shape_cast %577 : vector<16xf32> to vector<16x1xf32>
    %579 = vector.broadcast %578 : vector<16x1xf32> to vector<16x16xf32>
    %580 = arith.divf %576, %579 : vector<16x16xf32>
    %cst_237 = arith.constant dense<0.000000e+00> : vector<16x8xf32>
    %581 = tpu.matmul %580, %568, %cst_237 {dimension_numbers = #tpu.dot_dimension_numbers<[1], [0], [0], [1], [0, 0, 1, 1], [], []>} : vector<16x16xf32>, vector<16x8xf32>, vector<16x8xf32> -> vector<16x8xf32>
    %582 = tpu.concatenate %527, %545, %563, %581 in 1 : vector<16x8xf32>, vector<16x8xf32>, vector<16x8xf32>, vector<16x8xf32> -> vector<16x32xf32>
    %cst_238 = arith.constant dense<0.000000e+00> : vector<16x32xf32>
    %583 = tpu.matmul %582, %500, %cst_238 {dimension_numbers = #tpu.dot_dimension_numbers<[1], [0], [0], [1], [0, 0, 1, 1], [], []>} : vector<16x32xf32>, vector<32x32xf32>, vector<16x32xf32> -> vector<16x32xf32>
    %584 = vector.broadcast %503 : vector<1x32xf32> to vector<16x32xf32>
    %585 = arith.addf %583, %584 : vector<16x32xf32>
    %586 = arith.addf %585, %325 : vector<16x32xf32>
    %c27 = arith.constant 27 : index
    %c0_239 = arith.constant 0 : index
    %587 = vector.load %arg4[%c27, %c0_239] : memref<36x96xf32, #tpu.memory_space<vmem>>, vector<1x32xf32>
    %c28 = arith.constant 28 : index
    %c0_240 = arith.constant 0 : index
    %588 = vector.load %arg4[%c28, %c0_240] : memref<36x96xf32, #tpu.memory_space<vmem>>, vector<1x32xf32>
    %cst_241 = arith.constant dense<0.000000e+00> : vector<16xf32>
    %589 = vector.multi_reduction <add>, %586, %cst_241 [1] : vector<16x32xf32> to vector<16xf32>
    %590 = vector.shape_cast %589 : vector<16xf32> to vector<16x1xf32>
    %cst_242 = arith.constant 3.200000e+01 : f32
    %591 = vector.broadcast %cst_242 : f32 to vector<16x1xf32>
    %592 = arith.divf %590, %591 : vector<16x1xf32>
    %593 = vector.broadcast %592 : vector<16x1xf32> to vector<16x32xf32>
    %594 = arith.subf %586, %593 : vector<16x32xf32>
    %595 = arith.mulf %594, %594 : vector<16x32xf32>
    %cst_243 = arith.constant dense<0.000000e+00> : vector<16xf32>
    %596 = vector.multi_reduction <add>, %595, %cst_243 [1] : vector<16x32xf32> to vector<16xf32>
    %597 = vector.shape_cast %596 : vector<16xf32> to vector<16x1xf32>
    %cst_244 = arith.constant 3.200000e+01 : f32
    %598 = vector.broadcast %cst_244 : f32 to vector<16x1xf32>
    %599 = arith.divf %597, %598 : vector<16x1xf32>
    %cst_245 = arith.constant 9.99999974E-6 : f32
    %600 = vector.broadcast %cst_245 : f32 to vector<16x1xf32>
    %601 = arith.addf %599, %600 : vector<16x1xf32>
    %602 = math.rsqrt %601 : vector<16x1xf32>
    %603 = vector.broadcast %602 : vector<16x1xf32> to vector<16x32xf32>
    %604 = arith.mulf %594, %603 : vector<16x32xf32>
    %605 = vector.broadcast %587 : vector<1x32xf32> to vector<16x32xf32>
    %606 = arith.mulf %604, %605 : vector<16x32xf32>
    %607 = vector.broadcast %588 : vector<1x32xf32> to vector<16x32xf32>
    %608 = arith.addf %606, %607 : vector<16x32xf32>
    %c1_246 = arith.constant 1 : index
    %c96_247 = arith.constant 96 : index
    %c0_248 = arith.constant 0 : index
    %609 = vector.load %arg3[%c1_246, %c96_247, %c0_248] : memref<2x128x32xf32, #tpu.memory_space<vmem>>, vector<1x32x32xf32>
    %610 = vector.shape_cast %609 : vector<1x32x32xf32> to vector<32x32xf32>
    %cst_249 = arith.constant dense<0.000000e+00> : vector<16x32xf32>
    %611 = tpu.matmul %608, %610, %cst_249 {dimension_numbers = #tpu.dot_dimension_numbers<[1], [0], [0], [1], [0, 0, 1, 1], [], []>} : vector<16x32xf32>, vector<32x32xf32>, vector<16x32xf32> -> vector<16x32xf32>
    %c29 = arith.constant 29 : index
    %c0_250 = arith.constant 0 : index
    %612 = vector.load %arg4[%c29, %c0_250] : memref<36x96xf32, #tpu.memory_space<vmem>>, vector<1x32xf32>
    %613 = vector.broadcast %612 : vector<1x32xf32> to vector<16x32xf32>
    %614 = arith.addf %611, %613 : vector<16x32xf32>
    %cst_251 = arith.constant 0.000000e+00 : f32
    %615 = vector.broadcast %cst_251 : f32 to vector<16x32xf32>
    %616 = arith.maximumf %614, %615 : vector<16x32xf32>
    %c30 = arith.constant 30 : index
    %c0_252 = arith.constant 0 : index
    %617 = vector.load %arg4[%c30, %c0_252] : memref<36x96xf32, #tpu.memory_space<vmem>>, vector<1x32xf32>
    %c31 = arith.constant 31 : index
    %c0_253 = arith.constant 0 : index
    %618 = vector.load %arg4[%c31, %c0_253] : memref<36x96xf32, #tpu.memory_space<vmem>>, vector<1x32xf32>
    %cst_254 = arith.constant dense<0.000000e+00> : vector<16xf32>
    %619 = vector.multi_reduction <add>, %616, %cst_254 [1] : vector<16x32xf32> to vector<16xf32>
    %620 = vector.shape_cast %619 : vector<16xf32> to vector<16x1xf32>
    %cst_255 = arith.constant 3.200000e+01 : f32
    %621 = vector.broadcast %cst_255 : f32 to vector<16x1xf32>
    %622 = arith.divf %620, %621 : vector<16x1xf32>
    %623 = vector.broadcast %622 : vector<16x1xf32> to vector<16x32xf32>
    %624 = arith.subf %616, %623 : vector<16x32xf32>
    %625 = arith.mulf %624, %624 : vector<16x32xf32>
    %cst_256 = arith.constant dense<0.000000e+00> : vector<16xf32>
    %626 = vector.multi_reduction <add>, %625, %cst_256 [1] : vector<16x32xf32> to vector<16xf32>
    %627 = vector.shape_cast %626 : vector<16xf32> to vector<16x1xf32>
    %cst_257 = arith.constant 3.200000e+01 : f32
    %628 = vector.broadcast %cst_257 : f32 to vector<16x1xf32>
    %629 = arith.divf %627, %628 : vector<16x1xf32>
    %cst_258 = arith.constant 9.99999974E-6 : f32
    %630 = vector.broadcast %cst_258 : f32 to vector<16x1xf32>
    %631 = arith.addf %629, %630 : vector<16x1xf32>
    %632 = math.rsqrt %631 : vector<16x1xf32>
    %633 = vector.broadcast %632 : vector<16x1xf32> to vector<16x32xf32>
    %634 = arith.mulf %624, %633 : vector<16x32xf32>
    %635 = vector.broadcast %617 : vector<1x32xf32> to vector<16x32xf32>
    %636 = arith.mulf %634, %635 : vector<16x32xf32>
    %637 = vector.broadcast %618 : vector<1x32xf32> to vector<16x32xf32>
    %638 = arith.addf %636, %637 : vector<16x32xf32>
    %639 = arith.addf %638, %608 : vector<16x32xf32>
    %c4_259 = arith.constant 4 : index
    %c0_260 = arith.constant 0 : index
    %c0_261 = arith.constant 0 : index
    %640 = vector.load %arg2[%c4_259, %c0_260, %c0_261] : memref<6x32x128xf32, #tpu.memory_space<vmem>>, vector<1x32x32xf32>
    %641 = vector.shape_cast %640 : vector<1x32x32xf32> to vector<32x32xf32>
    %c4_262 = arith.constant 4 : index
    %c0_263 = arith.constant 0 : index
    %c32_264 = arith.constant 32 : index
    %642 = vector.load %arg2[%c4_262, %c0_263, %c32_264] : memref<6x32x128xf32, #tpu.memory_space<vmem>>, vector<1x32x64xf32>
    %643 = vector.shape_cast %642 : vector<1x32x64xf32> to vector<32x64xf32>
    %c4_265 = arith.constant 4 : index
    %c0_266 = arith.constant 0 : index
    %c96_267 = arith.constant 96 : index
    %644 = vector.load %arg2[%c4_265, %c0_266, %c96_267] : memref<6x32x128xf32, #tpu.memory_space<vmem>>, vector<1x32x32xf32>
    %645 = vector.shape_cast %644 : vector<1x32x32xf32> to vector<32x32xf32>
    %c23 = arith.constant 23 : index
    %c0_268 = arith.constant 0 : index
    %646 = vector.load %arg4[%c23, %c0_268] : memref<36x96xf32, #tpu.memory_space<vmem>>, vector<1x32xf32>
    %c23_269 = arith.constant 23 : index
    %c32_270 = arith.constant 32 : index
    %647 = vector.load %arg4[%c23_269, %c32_270] : memref<36x96xf32, #tpu.memory_space<vmem>>, vector<1x64xf32>
    %c24 = arith.constant 24 : index
    %c0_271 = arith.constant 0 : index
    %648 = vector.load %arg4[%c24, %c0_271] : memref<36x96xf32, #tpu.memory_space<vmem>>, vector<1x32xf32>
    %cst_272 = arith.constant dense<0.000000e+00> : vector<16x32xf32>
    %649 = tpu.matmul %639, %641, %cst_272 {dimension_numbers = #tpu.dot_dimension_numbers<[1], [0], [0], [1], [0, 0, 1, 1], [], []>} : vector<16x32xf32>, vector<32x32xf32>, vector<16x32xf32> -> vector<16x32xf32>
    %650 = vector.broadcast %646 : vector<1x32xf32> to vector<16x32xf32>
    %651 = arith.addf %649, %650 : vector<16x32xf32>
    %cst_273 = arith.constant dense<0.000000e+00> : vector<16x64xf32>
    %652 = tpu.matmul %494, %643, %cst_273 {dimension_numbers = #tpu.dot_dimension_numbers<[1], [0], [0], [1], [0, 0, 1, 1], [], []>} : vector<16x32xf32>, vector<32x64xf32>, vector<16x64xf32> -> vector<16x64xf32>
    %653 = vector.broadcast %647 : vector<1x64xf32> to vector<16x64xf32>
    %654 = arith.addf %652, %653 : vector<16x64xf32>
    %655 = vector.extract_strided_slice %651 {offsets = [0, 0], sizes = [16, 8], strides = [1, 1]} : vector<16x32xf32> to vector<16x8xf32>
    %cst_274 = arith.constant 0.353553385 : f32
    %656 = vector.broadcast %cst_274 : f32 to vector<16x8xf32>
    %657 = arith.mulf %655, %656 : vector<16x8xf32>
    %658 = vector.extract_strided_slice %654 {offsets = [0, 0], sizes = [16, 8], strides = [1, 1]} : vector<16x64xf32> to vector<16x8xf32>
    %659 = vector.extract_strided_slice %654 {offsets = [0, 32], sizes = [16, 8], strides = [1, 1]} : vector<16x64xf32> to vector<16x8xf32>
    "tpu.trace_start"() <{level = 10 : i32, message = "qe,ke->qk"}> : () -> ()
    %cst_275 = arith.constant dense<0.000000e+00> : vector<16x16xf32>
    %660 = tpu.matmul %657, %658, %cst_275 {dimension_numbers = #tpu.dot_dimension_numbers<[1], [1], [0], [0], [0, 0, 1, 0], [], []>} : vector<16x8xf32>, vector<16x8xf32>, vector<16x16xf32> -> vector<16x16xf32>
    %cst_276 = arith.constant -1.000000e+30 : f32
    "tpu.trace_stop"() : () -> ()
    %661 = vector.broadcast %cst_276 : f32 to vector<16x16xf32>
    %662 = arith.select %11, %660, %661 : vector<16x16xi1>, vector<16x16xf32>
    %cst_277 = arith.constant dense<0xFF800000> : vector<16xf32>
    %663 = vector.multi_reduction <maximumf>, %662, %cst_277 [1] : vector<16x16xf32> to vector<16xf32>
    %664 = vector.shape_cast %663 : vector<16xf32> to vector<16x1xf32>
    %665 = vector.broadcast %664 : vector<16x1xf32> to vector<16x16xf32>
    %666 = arith.subf %662, %665 : vector<16x16xf32>
    %667 = math.exp %666 : vector<16x16xf32>
    %cst_278 = arith.constant dense<0.000000e+00> : vector<16xf32>
    %668 = vector.multi_reduction <add>, %667, %cst_278 [1] : vector<16x16xf32> to vector<16xf32>
    %669 = vector.shape_cast %668 : vector<16xf32> to vector<16x1xf32>
    %670 = vector.broadcast %669 : vector<16x1xf32> to vector<16x16xf32>
    %671 = arith.divf %667, %670 : vector<16x16xf32>
    %cst_279 = arith.constant dense<0.000000e+00> : vector<16x8xf32>
    %672 = tpu.matmul %671, %659, %cst_279 {dimension_numbers = #tpu.dot_dimension_numbers<[1], [0], [0], [1], [0, 0, 1, 1], [], []>} : vector<16x16xf32>, vector<16x8xf32>, vector<16x8xf32> -> vector<16x8xf32>
    %673 = vector.extract_strided_slice %651 {offsets = [0, 8], sizes = [16, 8], strides = [1, 1]} : vector<16x32xf32> to vector<16x8xf32>
    %cst_280 = arith.constant 0.353553385 : f32
    %674 = vector.broadcast %cst_280 : f32 to vector<16x8xf32>
    %675 = arith.mulf %673, %674 : vector<16x8xf32>
    %676 = vector.extract_strided_slice %654 {offsets = [0, 8], sizes = [16, 8], strides = [1, 1]} : vector<16x64xf32> to vector<16x8xf32>
    %677 = vector.extract_strided_slice %654 {offsets = [0, 40], sizes = [16, 8], strides = [1, 1]} : vector<16x64xf32> to vector<16x8xf32>
    "tpu.trace_start"() <{level = 10 : i32, message = "qe,ke->qk"}> : () -> ()
    %cst_281 = arith.constant dense<0.000000e+00> : vector<16x16xf32>
    %678 = tpu.matmul %675, %676, %cst_281 {dimension_numbers = #tpu.dot_dimension_numbers<[1], [1], [0], [0], [0, 0, 1, 0], [], []>} : vector<16x8xf32>, vector<16x8xf32>, vector<16x16xf32> -> vector<16x16xf32>
    %cst_282 = arith.constant -1.000000e+30 : f32
    "tpu.trace_stop"() : () -> ()
    %679 = vector.broadcast %cst_282 : f32 to vector<16x16xf32>
    %680 = arith.select %11, %678, %679 : vector<16x16xi1>, vector<16x16xf32>
    %cst_283 = arith.constant dense<0xFF800000> : vector<16xf32>
    %681 = vector.multi_reduction <maximumf>, %680, %cst_283 [1] : vector<16x16xf32> to vector<16xf32>
    %682 = vector.shape_cast %681 : vector<16xf32> to vector<16x1xf32>
    %683 = vector.broadcast %682 : vector<16x1xf32> to vector<16x16xf32>
    %684 = arith.subf %680, %683 : vector<16x16xf32>
    %685 = math.exp %684 : vector<16x16xf32>
    %cst_284 = arith.constant dense<0.000000e+00> : vector<16xf32>
    %686 = vector.multi_reduction <add>, %685, %cst_284 [1] : vector<16x16xf32> to vector<16xf32>
    %687 = vector.shape_cast %686 : vector<16xf32> to vector<16x1xf32>
    %688 = vector.broadcast %687 : vector<16x1xf32> to vector<16x16xf32>
    %689 = arith.divf %685, %688 : vector<16x16xf32>
    %cst_285 = arith.constant dense<0.000000e+00> : vector<16x8xf32>
    %690 = tpu.matmul %689, %677, %cst_285 {dimension_numbers = #tpu.dot_dimension_numbers<[1], [0], [0], [1], [0, 0, 1, 1], [], []>} : vector<16x16xf32>, vector<16x8xf32>, vector<16x8xf32> -> vector<16x8xf32>
    %691 = vector.extract_strided_slice %651 {offsets = [0, 16], sizes = [16, 8], strides = [1, 1]} : vector<16x32xf32> to vector<16x8xf32>
    %cst_286 = arith.constant 0.353553385 : f32
    %692 = vector.broadcast %cst_286 : f32 to vector<16x8xf32>
    %693 = arith.mulf %691, %692 : vector<16x8xf32>
    %694 = vector.extract_strided_slice %654 {offsets = [0, 16], sizes = [16, 8], strides = [1, 1]} : vector<16x64xf32> to vector<16x8xf32>
    %695 = vector.extract_strided_slice %654 {offsets = [0, 48], sizes = [16, 8], strides = [1, 1]} : vector<16x64xf32> to vector<16x8xf32>
    "tpu.trace_start"() <{level = 10 : i32, message = "qe,ke->qk"}> : () -> ()
    %cst_287 = arith.constant dense<0.000000e+00> : vector<16x16xf32>
    %696 = tpu.matmul %693, %694, %cst_287 {dimension_numbers = #tpu.dot_dimension_numbers<[1], [1], [0], [0], [0, 0, 1, 0], [], []>} : vector<16x8xf32>, vector<16x8xf32>, vector<16x16xf32> -> vector<16x16xf32>
    %cst_288 = arith.constant -1.000000e+30 : f32
    "tpu.trace_stop"() : () -> ()
    %697 = vector.broadcast %cst_288 : f32 to vector<16x16xf32>
    %698 = arith.select %11, %696, %697 : vector<16x16xi1>, vector<16x16xf32>
    %cst_289 = arith.constant dense<0xFF800000> : vector<16xf32>
    %699 = vector.multi_reduction <maximumf>, %698, %cst_289 [1] : vector<16x16xf32> to vector<16xf32>
    %700 = vector.shape_cast %699 : vector<16xf32> to vector<16x1xf32>
    %701 = vector.broadcast %700 : vector<16x1xf32> to vector<16x16xf32>
    %702 = arith.subf %698, %701 : vector<16x16xf32>
    %703 = math.exp %702 : vector<16x16xf32>
    %cst_290 = arith.constant dense<0.000000e+00> : vector<16xf32>
    %704 = vector.multi_reduction <add>, %703, %cst_290 [1] : vector<16x16xf32> to vector<16xf32>
    %705 = vector.shape_cast %704 : vector<16xf32> to vector<16x1xf32>
    %706 = vector.broadcast %705 : vector<16x1xf32> to vector<16x16xf32>
    %707 = arith.divf %703, %706 : vector<16x16xf32>
    %cst_291 = arith.constant dense<0.000000e+00> : vector<16x8xf32>
    %708 = tpu.matmul %707, %695, %cst_291 {dimension_numbers = #tpu.dot_dimension_numbers<[1], [0], [0], [1], [0, 0, 1, 1], [], []>} : vector<16x16xf32>, vector<16x8xf32>, vector<16x8xf32> -> vector<16x8xf32>
    %709 = vector.extract_strided_slice %651 {offsets = [0, 24], sizes = [16, 8], strides = [1, 1]} : vector<16x32xf32> to vector<16x8xf32>
    %cst_292 = arith.constant 0.353553385 : f32
    %710 = vector.broadcast %cst_292 : f32 to vector<16x8xf32>
    %711 = arith.mulf %709, %710 : vector<16x8xf32>
    %712 = vector.extract_strided_slice %654 {offsets = [0, 24], sizes = [16, 8], strides = [1, 1]} : vector<16x64xf32> to vector<16x8xf32>
    %713 = vector.extract_strided_slice %654 {offsets = [0, 56], sizes = [16, 8], strides = [1, 1]} : vector<16x64xf32> to vector<16x8xf32>
    "tpu.trace_start"() <{level = 10 : i32, message = "qe,ke->qk"}> : () -> ()
    %cst_293 = arith.constant dense<0.000000e+00> : vector<16x16xf32>
    %714 = tpu.matmul %711, %712, %cst_293 {dimension_numbers = #tpu.dot_dimension_numbers<[1], [1], [0], [0], [0, 0, 1, 0], [], []>} : vector<16x8xf32>, vector<16x8xf32>, vector<16x16xf32> -> vector<16x16xf32>
    %cst_294 = arith.constant -1.000000e+30 : f32
    "tpu.trace_stop"() : () -> ()
    %715 = vector.broadcast %cst_294 : f32 to vector<16x16xf32>
    %716 = arith.select %11, %714, %715 : vector<16x16xi1>, vector<16x16xf32>
    %cst_295 = arith.constant dense<0xFF800000> : vector<16xf32>
    %717 = vector.multi_reduction <maximumf>, %716, %cst_295 [1] : vector<16x16xf32> to vector<16xf32>
    %718 = vector.shape_cast %717 : vector<16xf32> to vector<16x1xf32>
    %719 = vector.broadcast %718 : vector<16x1xf32> to vector<16x16xf32>
    %720 = arith.subf %716, %719 : vector<16x16xf32>
    %721 = math.exp %720 : vector<16x16xf32>
    %cst_296 = arith.constant dense<0.000000e+00> : vector<16xf32>
    %722 = vector.multi_reduction <add>, %721, %cst_296 [1] : vector<16x16xf32> to vector<16xf32>
    %723 = vector.shape_cast %722 : vector<16xf32> to vector<16x1xf32>
    %724 = vector.broadcast %723 : vector<16x1xf32> to vector<16x16xf32>
    %725 = arith.divf %721, %724 : vector<16x16xf32>
    %cst_297 = arith.constant dense<0.000000e+00> : vector<16x8xf32>
    %726 = tpu.matmul %725, %713, %cst_297 {dimension_numbers = #tpu.dot_dimension_numbers<[1], [0], [0], [1], [0, 0, 1, 1], [], []>} : vector<16x16xf32>, vector<16x8xf32>, vector<16x8xf32> -> vector<16x8xf32>
    %727 = tpu.concatenate %672, %690, %708, %726 in 1 : vector<16x8xf32>, vector<16x8xf32>, vector<16x8xf32>, vector<16x8xf32> -> vector<16x32xf32>
    %cst_298 = arith.constant dense<0.000000e+00> : vector<16x32xf32>
    %728 = tpu.matmul %727, %645, %cst_298 {dimension_numbers = #tpu.dot_dimension_numbers<[1], [0], [0], [1], [0, 0, 1, 1], [], []>} : vector<16x32xf32>, vector<32x32xf32>, vector<16x32xf32> -> vector<16x32xf32>
    %729 = vector.broadcast %648 : vector<1x32xf32> to vector<16x32xf32>
    %730 = arith.addf %728, %729 : vector<16x32xf32>
    %731 = arith.addf %730, %639 : vector<16x32xf32>
    %c32_299 = arith.constant 32 : index
    %c0_300 = arith.constant 0 : index
    %732 = vector.load %arg4[%c32_299, %c0_300] : memref<36x96xf32, #tpu.memory_space<vmem>>, vector<1x32xf32>
    %c33 = arith.constant 33 : index
    %c0_301 = arith.constant 0 : index
    %733 = vector.load %arg4[%c33, %c0_301] : memref<36x96xf32, #tpu.memory_space<vmem>>, vector<1x32xf32>
    %cst_302 = arith.constant dense<0.000000e+00> : vector<16xf32>
    %734 = vector.multi_reduction <add>, %731, %cst_302 [1] : vector<16x32xf32> to vector<16xf32>
    %735 = vector.shape_cast %734 : vector<16xf32> to vector<16x1xf32>
    %cst_303 = arith.constant 3.200000e+01 : f32
    %736 = vector.broadcast %cst_303 : f32 to vector<16x1xf32>
    %737 = arith.divf %735, %736 : vector<16x1xf32>
    %738 = vector.broadcast %737 : vector<16x1xf32> to vector<16x32xf32>
    %739 = arith.subf %731, %738 : vector<16x32xf32>
    %740 = arith.mulf %739, %739 : vector<16x32xf32>
    %cst_304 = arith.constant dense<0.000000e+00> : vector<16xf32>
    %741 = vector.multi_reduction <add>, %740, %cst_304 [1] : vector<16x32xf32> to vector<16xf32>
    %742 = vector.shape_cast %741 : vector<16xf32> to vector<16x1xf32>
    %cst_305 = arith.constant 3.200000e+01 : f32
    %743 = vector.broadcast %cst_305 : f32 to vector<16x1xf32>
    %744 = arith.divf %742, %743 : vector<16x1xf32>
    %cst_306 = arith.constant 9.99999974E-6 : f32
    %745 = vector.broadcast %cst_306 : f32 to vector<16x1xf32>
    %746 = arith.addf %744, %745 : vector<16x1xf32>
    %747 = math.rsqrt %746 : vector<16x1xf32>
    %748 = vector.broadcast %747 : vector<16x1xf32> to vector<16x32xf32>
    %749 = arith.mulf %739, %748 : vector<16x32xf32>
    %750 = vector.broadcast %732 : vector<1x32xf32> to vector<16x32xf32>
    %751 = arith.mulf %749, %750 : vector<16x32xf32>
    %752 = vector.broadcast %733 : vector<1x32xf32> to vector<16x32xf32>
    %753 = arith.addf %751, %752 : vector<16x32xf32>
    %c5_307 = arith.constant 5 : index
    %c0_308 = arith.constant 0 : index
    %c0_309 = arith.constant 0 : index
    %754 = vector.load %arg2[%c5_307, %c0_308, %c0_309] : memref<6x32x128xf32, #tpu.memory_space<vmem>>, vector<1x32x32xf32>
    %755 = vector.shape_cast %754 : vector<1x32x32xf32> to vector<32x32xf32>
    %c5_310 = arith.constant 5 : index
    %c0_311 = arith.constant 0 : index
    %c32_312 = arith.constant 32 : index
    %756 = vector.load %arg2[%c5_310, %c0_311, %c32_312] : memref<6x32x128xf32, #tpu.memory_space<vmem>>, vector<1x32x64xf32>
    %757 = vector.shape_cast %756 : vector<1x32x64xf32> to vector<32x64xf32>
    %c5_313 = arith.constant 5 : index
    %c0_314 = arith.constant 0 : index
    %c96_315 = arith.constant 96 : index
    %758 = vector.load %arg2[%c5_313, %c0_314, %c96_315] : memref<6x32x128xf32, #tpu.memory_space<vmem>>, vector<1x32x32xf32>
    %759 = vector.shape_cast %758 : vector<1x32x32xf32> to vector<32x32xf32>
    %c25 = arith.constant 25 : index
    %c0_316 = arith.constant 0 : index
    %760 = vector.load %arg4[%c25, %c0_316] : memref<36x96xf32, #tpu.memory_space<vmem>>, vector<1x32xf32>
    %c25_317 = arith.constant 25 : index
    %c32_318 = arith.constant 32 : index
    %761 = vector.load %arg4[%c25_317, %c32_318] : memref<36x96xf32, #tpu.memory_space<vmem>>, vector<1x64xf32>
    %c26 = arith.constant 26 : index
    %c0_319 = arith.constant 0 : index
    %762 = vector.load %arg4[%c26, %c0_319] : memref<36x96xf32, #tpu.memory_space<vmem>>, vector<1x32xf32>
    %cst_320 = arith.constant dense<0.000000e+00> : vector<16x32xf32>
    %763 = tpu.matmul %494, %755, %cst_320 {dimension_numbers = #tpu.dot_dimension_numbers<[1], [0], [0], [1], [0, 0, 1, 1], [], []>} : vector<16x32xf32>, vector<32x32xf32>, vector<16x32xf32> -> vector<16x32xf32>
    %764 = vector.broadcast %760 : vector<1x32xf32> to vector<16x32xf32>
    %765 = arith.addf %763, %764 : vector<16x32xf32>
    %cst_321 = arith.constant dense<0.000000e+00> : vector<16x64xf32>
    %766 = tpu.matmul %639, %757, %cst_321 {dimension_numbers = #tpu.dot_dimension_numbers<[1], [0], [0], [1], [0, 0, 1, 1], [], []>} : vector<16x32xf32>, vector<32x64xf32>, vector<16x64xf32> -> vector<16x64xf32>
    %767 = vector.broadcast %761 : vector<1x64xf32> to vector<16x64xf32>
    %768 = arith.addf %766, %767 : vector<16x64xf32>
    %769 = vector.extract_strided_slice %765 {offsets = [0, 0], sizes = [16, 8], strides = [1, 1]} : vector<16x32xf32> to vector<16x8xf32>
    %cst_322 = arith.constant 0.353553385 : f32
    %770 = vector.broadcast %cst_322 : f32 to vector<16x8xf32>
    %771 = arith.mulf %769, %770 : vector<16x8xf32>
    %772 = vector.extract_strided_slice %768 {offsets = [0, 0], sizes = [16, 8], strides = [1, 1]} : vector<16x64xf32> to vector<16x8xf32>
    %773 = vector.extract_strided_slice %768 {offsets = [0, 32], sizes = [16, 8], strides = [1, 1]} : vector<16x64xf32> to vector<16x8xf32>
    "tpu.trace_start"() <{level = 10 : i32, message = "qe,ke->qk"}> : () -> ()
    %cst_323 = arith.constant dense<0.000000e+00> : vector<16x16xf32>
    %774 = tpu.matmul %771, %772, %cst_323 {dimension_numbers = #tpu.dot_dimension_numbers<[1], [1], [0], [0], [0, 0, 1, 0], [], []>} : vector<16x8xf32>, vector<16x8xf32>, vector<16x16xf32> -> vector<16x16xf32>
    %cst_324 = arith.constant -1.000000e+30 : f32
    "tpu.trace_stop"() : () -> ()
    %775 = vector.broadcast %cst_324 : f32 to vector<16x16xf32>
    %776 = arith.select %11, %774, %775 : vector<16x16xi1>, vector<16x16xf32>
    %cst_325 = arith.constant dense<0xFF800000> : vector<16xf32>
    %777 = vector.multi_reduction <maximumf>, %776, %cst_325 [1] : vector<16x16xf32> to vector<16xf32>
    %778 = vector.shape_cast %777 : vector<16xf32> to vector<16x1xf32>
    %779 = vector.broadcast %778 : vector<16x1xf32> to vector<16x16xf32>
    %780 = arith.subf %776, %779 : vector<16x16xf32>
    %781 = math.exp %780 : vector<16x16xf32>
    %cst_326 = arith.constant dense<0.000000e+00> : vector<16xf32>
    %782 = vector.multi_reduction <add>, %781, %cst_326 [1] : vector<16x16xf32> to vector<16xf32>
    %783 = vector.shape_cast %782 : vector<16xf32> to vector<16x1xf32>
    %784 = vector.broadcast %783 : vector<16x1xf32> to vector<16x16xf32>
    %785 = arith.divf %781, %784 : vector<16x16xf32>
    %cst_327 = arith.constant dense<0.000000e+00> : vector<16x8xf32>
    %786 = tpu.matmul %785, %773, %cst_327 {dimension_numbers = #tpu.dot_dimension_numbers<[1], [0], [0], [1], [0, 0, 1, 1], [], []>} : vector<16x16xf32>, vector<16x8xf32>, vector<16x8xf32> -> vector<16x8xf32>
    %787 = vector.extract_strided_slice %765 {offsets = [0, 8], sizes = [16, 8], strides = [1, 1]} : vector<16x32xf32> to vector<16x8xf32>
    %cst_328 = arith.constant 0.353553385 : f32
    %788 = vector.broadcast %cst_328 : f32 to vector<16x8xf32>
    %789 = arith.mulf %787, %788 : vector<16x8xf32>
    %790 = vector.extract_strided_slice %768 {offsets = [0, 8], sizes = [16, 8], strides = [1, 1]} : vector<16x64xf32> to vector<16x8xf32>
    %791 = vector.extract_strided_slice %768 {offsets = [0, 40], sizes = [16, 8], strides = [1, 1]} : vector<16x64xf32> to vector<16x8xf32>
    "tpu.trace_start"() <{level = 10 : i32, message = "qe,ke->qk"}> : () -> ()
    %cst_329 = arith.constant dense<0.000000e+00> : vector<16x16xf32>
    %792 = tpu.matmul %789, %790, %cst_329 {dimension_numbers = #tpu.dot_dimension_numbers<[1], [1], [0], [0], [0, 0, 1, 0], [], []>} : vector<16x8xf32>, vector<16x8xf32>, vector<16x16xf32> -> vector<16x16xf32>
    %cst_330 = arith.constant -1.000000e+30 : f32
    "tpu.trace_stop"() : () -> ()
    %793 = vector.broadcast %cst_330 : f32 to vector<16x16xf32>
    %794 = arith.select %11, %792, %793 : vector<16x16xi1>, vector<16x16xf32>
    %cst_331 = arith.constant dense<0xFF800000> : vector<16xf32>
    %795 = vector.multi_reduction <maximumf>, %794, %cst_331 [1] : vector<16x16xf32> to vector<16xf32>
    %796 = vector.shape_cast %795 : vector<16xf32> to vector<16x1xf32>
    %797 = vector.broadcast %796 : vector<16x1xf32> to vector<16x16xf32>
    %798 = arith.subf %794, %797 : vector<16x16xf32>
    %799 = math.exp %798 : vector<16x16xf32>
    %cst_332 = arith.constant dense<0.000000e+00> : vector<16xf32>
    %800 = vector.multi_reduction <add>, %799, %cst_332 [1] : vector<16x16xf32> to vector<16xf32>
    %801 = vector.shape_cast %800 : vector<16xf32> to vector<16x1xf32>
    %802 = vector.broadcast %801 : vector<16x1xf32> to vector<16x16xf32>
    %803 = arith.divf %799, %802 : vector<16x16xf32>
    %cst_333 = arith.constant dense<0.000000e+00> : vector<16x8xf32>
    %804 = tpu.matmul %803, %791, %cst_333 {dimension_numbers = #tpu.dot_dimension_numbers<[1], [0], [0], [1], [0, 0, 1, 1], [], []>} : vector<16x16xf32>, vector<16x8xf32>, vector<16x8xf32> -> vector<16x8xf32>
    %805 = vector.extract_strided_slice %765 {offsets = [0, 16], sizes = [16, 8], strides = [1, 1]} : vector<16x32xf32> to vector<16x8xf32>
    %cst_334 = arith.constant 0.353553385 : f32
    %806 = vector.broadcast %cst_334 : f32 to vector<16x8xf32>
    %807 = arith.mulf %805, %806 : vector<16x8xf32>
    %808 = vector.extract_strided_slice %768 {offsets = [0, 16], sizes = [16, 8], strides = [1, 1]} : vector<16x64xf32> to vector<16x8xf32>
    %809 = vector.extract_strided_slice %768 {offsets = [0, 48], sizes = [16, 8], strides = [1, 1]} : vector<16x64xf32> to vector<16x8xf32>
    "tpu.trace_start"() <{level = 10 : i32, message = "qe,ke->qk"}> : () -> ()
    %cst_335 = arith.constant dense<0.000000e+00> : vector<16x16xf32>
    %810 = tpu.matmul %807, %808, %cst_335 {dimension_numbers = #tpu.dot_dimension_numbers<[1], [1], [0], [0], [0, 0, 1, 0], [], []>} : vector<16x8xf32>, vector<16x8xf32>, vector<16x16xf32> -> vector<16x16xf32>
    %cst_336 = arith.constant -1.000000e+30 : f32
    "tpu.trace_stop"() : () -> ()
    %811 = vector.broadcast %cst_336 : f32 to vector<16x16xf32>
    %812 = arith.select %11, %810, %811 : vector<16x16xi1>, vector<16x16xf32>
    %cst_337 = arith.constant dense<0xFF800000> : vector<16xf32>
    %813 = vector.multi_reduction <maximumf>, %812, %cst_337 [1] : vector<16x16xf32> to vector<16xf32>
    %814 = vector.shape_cast %813 : vector<16xf32> to vector<16x1xf32>
    %815 = vector.broadcast %814 : vector<16x1xf32> to vector<16x16xf32>
    %816 = arith.subf %812, %815 : vector<16x16xf32>
    %817 = math.exp %816 : vector<16x16xf32>
    %cst_338 = arith.constant dense<0.000000e+00> : vector<16xf32>
    %818 = vector.multi_reduction <add>, %817, %cst_338 [1] : vector<16x16xf32> to vector<16xf32>
    %819 = vector.shape_cast %818 : vector<16xf32> to vector<16x1xf32>
    %820 = vector.broadcast %819 : vector<16x1xf32> to vector<16x16xf32>
    %821 = arith.divf %817, %820 : vector<16x16xf32>
    %cst_339 = arith.constant dense<0.000000e+00> : vector<16x8xf32>
    %822 = tpu.matmul %821, %809, %cst_339 {dimension_numbers = #tpu.dot_dimension_numbers<[1], [0], [0], [1], [0, 0, 1, 1], [], []>} : vector<16x16xf32>, vector<16x8xf32>, vector<16x8xf32> -> vector<16x8xf32>
    %823 = vector.extract_strided_slice %765 {offsets = [0, 24], sizes = [16, 8], strides = [1, 1]} : vector<16x32xf32> to vector<16x8xf32>
    %cst_340 = arith.constant 0.353553385 : f32
    %824 = vector.broadcast %cst_340 : f32 to vector<16x8xf32>
    %825 = arith.mulf %823, %824 : vector<16x8xf32>
    %826 = vector.extract_strided_slice %768 {offsets = [0, 24], sizes = [16, 8], strides = [1, 1]} : vector<16x64xf32> to vector<16x8xf32>
    %827 = vector.extract_strided_slice %768 {offsets = [0, 56], sizes = [16, 8], strides = [1, 1]} : vector<16x64xf32> to vector<16x8xf32>
    "tpu.trace_start"() <{level = 10 : i32, message = "qe,ke->qk"}> : () -> ()
    %cst_341 = arith.constant dense<0.000000e+00> : vector<16x16xf32>
    %828 = tpu.matmul %825, %826, %cst_341 {dimension_numbers = #tpu.dot_dimension_numbers<[1], [1], [0], [0], [0, 0, 1, 0], [], []>} : vector<16x8xf32>, vector<16x8xf32>, vector<16x16xf32> -> vector<16x16xf32>
    %cst_342 = arith.constant -1.000000e+30 : f32
    "tpu.trace_stop"() : () -> ()
    %829 = vector.broadcast %cst_342 : f32 to vector<16x16xf32>
    %830 = arith.select %11, %828, %829 : vector<16x16xi1>, vector<16x16xf32>
    %cst_343 = arith.constant dense<0xFF800000> : vector<16xf32>
    %831 = vector.multi_reduction <maximumf>, %830, %cst_343 [1] : vector<16x16xf32> to vector<16xf32>
    %832 = vector.shape_cast %831 : vector<16xf32> to vector<16x1xf32>
    %833 = vector.broadcast %832 : vector<16x1xf32> to vector<16x16xf32>
    %834 = arith.subf %830, %833 : vector<16x16xf32>
    %835 = math.exp %834 : vector<16x16xf32>
    %cst_344 = arith.constant dense<0.000000e+00> : vector<16xf32>
    %836 = vector.multi_reduction <add>, %835, %cst_344 [1] : vector<16x16xf32> to vector<16xf32>
    %837 = vector.shape_cast %836 : vector<16xf32> to vector<16x1xf32>
    %838 = vector.broadcast %837 : vector<16x1xf32> to vector<16x16xf32>
    %839 = arith.divf %835, %838 : vector<16x16xf32>
    %cst_345 = arith.constant dense<0.000000e+00> : vector<16x8xf32>
    %840 = tpu.matmul %839, %827, %cst_345 {dimension_numbers = #tpu.dot_dimension_numbers<[1], [0], [0], [1], [0, 0, 1, 1], [], []>} : vector<16x16xf32>, vector<16x8xf32>, vector<16x8xf32> -> vector<16x8xf32>
    %841 = tpu.concatenate %786, %804, %822, %840 in 1 : vector<16x8xf32>, vector<16x8xf32>, vector<16x8xf32>, vector<16x8xf32> -> vector<16x32xf32>
    %cst_346 = arith.constant dense<0.000000e+00> : vector<16x32xf32>
    %842 = tpu.matmul %841, %759, %cst_346 {dimension_numbers = #tpu.dot_dimension_numbers<[1], [0], [0], [1], [0, 0, 1, 1], [], []>} : vector<16x32xf32>, vector<32x32xf32>, vector<16x32xf32> -> vector<16x32xf32>
    %843 = vector.broadcast %762 : vector<1x32xf32> to vector<16x32xf32>
    %844 = arith.addf %842, %843 : vector<16x32xf32>
    %845 = arith.addf %844, %494 : vector<16x32xf32>
    %c34 = arith.constant 34 : index
    %c0_347 = arith.constant 0 : index
    %846 = vector.load %arg4[%c34, %c0_347] : memref<36x96xf32, #tpu.memory_space<vmem>>, vector<1x32xf32>
    %c35 = arith.constant 35 : index
    %c0_348 = arith.constant 0 : index
    %847 = vector.load %arg4[%c35, %c0_348] : memref<36x96xf32, #tpu.memory_space<vmem>>, vector<1x32xf32>
    %cst_349 = arith.constant dense<0.000000e+00> : vector<16xf32>
    %848 = vector.multi_reduction <add>, %845, %cst_349 [1] : vector<16x32xf32> to vector<16xf32>
    %849 = vector.shape_cast %848 : vector<16xf32> to vector<16x1xf32>
    %cst_350 = arith.constant 3.200000e+01 : f32
    %850 = vector.broadcast %cst_350 : f32 to vector<16x1xf32>
    %851 = arith.divf %849, %850 : vector<16x1xf32>
    %852 = vector.broadcast %851 : vector<16x1xf32> to vector<16x32xf32>
    %853 = arith.subf %845, %852 : vector<16x32xf32>
    %854 = arith.mulf %853, %853 : vector<16x32xf32>
    %cst_351 = arith.constant dense<0.000000e+00> : vector<16xf32>
    %855 = vector.multi_reduction <add>, %854, %cst_351 [1] : vector<16x32xf32> to vector<16xf32>
    %856 = vector.shape_cast %855 : vector<16xf32> to vector<16x1xf32>
    %cst_352 = arith.constant 3.200000e+01 : f32
    %857 = vector.broadcast %cst_352 : f32 to vector<16x1xf32>
    %858 = arith.divf %856, %857 : vector<16x1xf32>
    %cst_353 = arith.constant 9.99999974E-6 : f32
    %859 = vector.broadcast %cst_353 : f32 to vector<16x1xf32>
    %860 = arith.addf %858, %859 : vector<16x1xf32>
    %861 = math.rsqrt %860 : vector<16x1xf32>
    %862 = vector.broadcast %861 : vector<16x1xf32> to vector<16x32xf32>
    %863 = arith.mulf %853, %862 : vector<16x32xf32>
    %864 = vector.broadcast %846 : vector<1x32xf32> to vector<16x32xf32>
    %865 = arith.mulf %863, %864 : vector<16x32xf32>
    %866 = vector.broadcast %847 : vector<1x32xf32> to vector<16x32xf32>
    %867 = arith.addf %865, %866 : vector<16x32xf32>
    %868 = tpu.concatenate %867, %753 in 1 : vector<16x32xf32>, vector<16x32xf32> -> vector<16x64xf32>
    %c0_354 = arith.constant 0 : index
    %c0_355 = arith.constant 0 : index
    %869 = vector.load %arg5[%c0_354, %c0_355] : memref<16x64xf32, #tpu.memory_space<vmem>>, vector<16x64xf32>
    tpu.vector_store %arg5[%c0_354, %c0_355], %868 {strides = array<i32>} : memref<16x64xf32, #tpu.memory_space<vmem>>, vector<16x64xf32>,
    return
  }
  func.func @transform_0(%arg0: i32) -> (i32, i32) {
    %c0_i32 = arith.constant 0 : i32
    %c0_i32_0 = arith.constant 0 : i32
    %c0_i32_1 = arith.constant 0 : i32
    return %c0_i32, %c0_i32_0 : i32, i32
  }
  func.func @transform_1(%arg0: i32) -> (i32, i32, i32) {
    %c0_i32 = arith.constant 0 : i32
    %c0_i32_0 = arith.constant 0 : i32
    %c0_i32_1 = arith.constant 0 : i32
    %c0_i32_2 = arith.constant 0 : i32
    return %c0_i32, %c0_i32_0, %c0_i32_1 : i32, i32, i32
  }
  func.func @transform_2(%arg0: i32) -> (i32, i32, i32) {
    %c0_i32 = arith.constant 0 : i32
    %c0_i32_0 = arith.constant 0 : i32
    %c0_i32_1 = arith.constant 0 : i32
    %c0_i32_2 = arith.constant 0 : i32
    return %c0_i32, %c0_i32_0, %c0_i32_1 : i32, i32, i32
  }
  func.func @transform_3(%arg0: i32) -> (i32, i32) {
    %c0_i32 = arith.constant 0 : i32
    %c0_i32_0 = arith.constant 0 : i32
    %c0_i32_1 = arith.constant 0 : i32
    return %c0_i32, %c0_i32_0 : i32, i32
  }
  func.func @transform_4(%arg0: i32) -> (i32, i32) {
    %c0_i32 = arith.constant 0 : i32
    %c0_i32_0 = arith.constant 0 : i32
    %c0_i32_1 = arith.constant 0 : i32
    return %c0_i32, %c0_i32_0 : i32, i32
  }
}

</mosaic_0001>

<llo_original>
// kernel: timesformer_decoder.1
$region0: #{timesformer_decoder.1}
  #allocation0 [shape = 'u32[]', space=smem, size = 0x4, offset = 0x4, fixed_abs, tag = 'smem constant byte address 0x4 - core index']
  #allocation1 [shape = 'u32[72,128]{1,0:T(1,128)}', space=vmem, size = 0x9000, scoped, tag = 'internal scratch']
  %s0 = inlined_call_operand.vmem [shape: f32[16,32], index: 0, kind: input, shape index: {}]
  %s1 = inlined_call_operand.vmem [shape: f32[6,32,128], index: 1, kind: input, shape index: {}]
  %s2 = inlined_call_operand.vmem [shape: f32[2,128,32], index: 2, kind: input, shape index: {}]
  %s3 = inlined_call_operand.vmem [shape: f32[36,96], index: 3, kind: input, shape index: {}]
  %s4 = inlined_call_operand.vmem [shape: f32[16,64], index: 4, kind: output, shape index: {}]
  %s5 = sld [smem:[#allocation0]]
  $region26: #{timesformer_decoder.1} parent=0
    _
  %s7 = ssub.s32 1, %s5
  %s8 = scalar_select 0, %s7, %s5
  // Predicated region
  $region2: #{timesformer_decoder.1} parent=0 // pred_check
    _
  $region3: #{timesformer_decoder.1} parent=0 // pred_check_branch
    %10 = sbr.rel (0) target = $region5
  $region4: #{timesformer_decoder.1} parent=0 // pred_region
    _
  $region5: #{timesformer_decoder.1} parent=0 // pred_fallthru
    _
  // Predicated region
  $region6: #{timesformer_decoder.1} parent=0 // pred_check
    _
  $region7: #{timesformer_decoder.1} parent=0 // pred_check_branch
    %12 = sbr.rel (0) target = $region9
  $region8: #{timesformer_decoder.1} parent=0 // pred_region
    _
  $region9: #{timesformer_decoder.1} parent=0 // pred_fallthru
    _
  // Predicated region
  $region10: #{timesformer_decoder.1} parent=0 // pred_check
    _
  $region11: #{timesformer_decoder.1} parent=0 // pred_check_branch
    %14 = sbr.rel (0) target = $region13
  $region12: #{timesformer_decoder.1} parent=0 // pred_region
    _
  $region13: #{timesformer_decoder.1} parent=0 // pred_fallthru
    _
  // Predicated region
  $region14: #{timesformer_decoder.1} parent=0 // pred_check
    _
  $region15: #{timesformer_decoder.1} parent=0 // pred_check_branch
    %16 = sbr.rel (0) target = $region17
  $region16: #{timesformer_decoder.1} parent=0 // pred_region
    _
  $region17: #{timesformer_decoder.1} parent=0 // pred_fallthru
    _
  %v17 = vld [vmem:[%s0] sm:$0xff]
  %v18 = vld [vmem:[%s0 + $0x8] sm:$0xff]
  %v19 = vlaneseq
  %v20 = vshrl.u32 %v19, 7
  %vm21 = vcmask 64512
  %v22 = vsel %vm21, 0, 1
  %23 = vset.pattern.permute.xlu0 0
  %24 = vperm.xlu0 %23, 0
  %v25 = vpop.permute.xlu0 %24
  %26 = vset.pattern.permute.xlu0 0
  %27 = vperm.xlu0 %26, 1
  %v28 = vpop.permute.xlu0 %27
  %v29 = vperm.slane %v22, 0
  %vm30 = vcmp.eq.s32.totalorder %v25, %v29
  %vm31 = vcmp.eq.s32.totalorder %v28, %v29
  %v32 = vld [vmem:[%s3] sm:$0x1]
  %v33 = vrot.slane %v17, 7
  %v34 = vrot.slane %v18, 7
  %vm35 = vcmp.lt.s32.totalorder %v20, 1
  %v36 = vsel %vm35, %v33, %v34
  %v37 = vsel %vm35, %v34, %v33
  %v38 = vadd.s32 %v20, 4294967295
  %vm39 = vcmp.ge.s32.totalorder %v38, 0
  %vm40 = vcmp.lt.s32.totalorder %v38, 8
  %vm41 = vmand %vm39, %vm40
  %v42 = vsel %vm41, %v37, 0.0
  %v43 = vsel %vm41, %v36, 0.0
  %v44 = vrot.slane %v17, 1
  %v45 = vrot.slane %v18, 1
  %vm46 = vcmp.lt.s32.totalorder %v20, 7
  %v47 = vsel %vm46, %v44, %v45
  %v48 = vsel %vm46, %v45, %v44
  %v49 = vadd.s32 %v20, 1
  %vm50 = vcmp.ge.s32.totalorder %v49, 0
  %vm51 = vcmp.lt.s32.totalorder %v49, 8
  %vm52 = vmand %vm50, %vm51
  %v53 = vsel %vm52, %v47, 0.0
  %v54 = vsel %vm52, %v48, 0.0
  %57 = vrot.lane.b32.xlu0 %v17, 32
  %v58 = vpop.permute.xlu0 %57
  %59 = vrot.lane.b32.xlu0 %v18, 32
  %v60 = vpop.permute.xlu0 %59
  %65 = vrot.lane.b32.xlu0 %v53, 64
  %v66 = vpop.permute.xlu0 %65
  %67 = vrot.lane.b32.xlu0 %v54, 64
  %v68 = vpop.permute.xlu0 %67
  %vm71 = vcmask 261120
  %v72 = vsel %vm71, %v42, %v58
  %v73 = vsel %vm71, %v43, %v60
  %vm74 = vcmask 523264
  %v75 = vsel %vm74, %v72, %v66
  %v76 = vsel %vm74, %v73, %v68
  %v77 = vld [vmem:[%s2] sm:$0xff]
  %v78 = vld [vmem:[%s2 + $0x8] sm:$0xff]
  %v79 = vld [vmem:[%s2 + $0x10] sm:$0xff]
  %v80 = vld [vmem:[%s2 + $0x18] sm:$0xff]
  %v81 = vld [vmem:[%s2 + $0x20] sm:$0xff]
  %v82 = vld [vmem:[%s2 + $0x28] sm:$0xff]
  %v83 = vld [vmem:[%s2 + $0x30] sm:$0xff]
  %v84 = vld [vmem:[%s2 + $0x38] sm:$0xff]
  %v85 = vld [vmem:[%s2 + $0x40] sm:$0xff]
  %v86 = vld [vmem:[%s2 + $0x48] sm:$0xff]
  %v87 = vld [vmem:[%s2 + $0x50] sm:$0xff]
  %v88 = vld [vmem:[%s2 + $0x58] sm:$0xff]
  %v89 = vperm.slane %v32, 0
  %vm90 = vcmask 785408
  %v92 = vsel %vm90, %v75, 0
  %v95 = vsel %vm90, %v76, 0
  %97 = vmatpush.msra.mxu0 0.0
  %98 = vmatpush.msra.mxu0 0.0
  %99 = vmatpush.msra.mxu0 0.0
  %100 = vmatpush.msra.mxu0 0.0
  %101 = vmatpush.msra.mxu0 %v88
  %102 = vmatpush.msra.mxu0 %v87
  %103 = vmatpush.msra.mxu0 %v86
  %104 = vmatpush.msra.mxu0 %v85
  %105 = vmatpush.msra.mxu0 %v84
  %106 = vmatpush.msra.mxu0 %v83
  %107 = vmatpush.msra.mxu0 %v82
  %108 = vmatpush.msra.mxu0 %v81
  %109 = vmatpush.msra.mxu0 %v80
  %110 = vmatpush.msra.mxu0 %v79
  %111 = vmatpush.msra.mxu0 %v78
  %112 = vmatpush.msra.mxu0 %v77
  %113 = vmatmul.f32.gmra.mxu0 %v92
  %v114 = vpop.f32.mrf.mxu0
  %v115 = vadd.f32 %v89, %v114
  %116 = vmatmul.f32.gmra.mxu0 %v95
  %v117 = vpop.f32.mrf.mxu0
  %v118 = vadd.f32 %v89, %v117
  %119 = vdwg.mxu0
  %v120 = vmax.f32 %v115, 0.0
  %v121 = vmax.f32 %v118, 0.0
  %v122 = vld [vmem:[%s3 + $0x1] sm:$0x1]
  %v123 = vld [vmem:[%s3 + $0x2] sm:$0x1]
  %v124 = vsel %vm71, %v120, 0.0
  %125 = vadd.xlane.f32.xlu0 %v124
  %v126 = vpop.xlane.xlu0 %125
  %v127 = vsel %vm71, %v121, 0.0
  %128 = vadd.xlane.f32.xlu0 %v127
  %v129 = vpop.xlane.xlu0 %128
  %v130 = vrcp.pop 32.0
  %v131 = vmul.f32 32.0, %v130
  %v132 = vsub.f32 1.0, %v131
  %v133 = vmul.f32 %v130, %v132
  %v134 = vadd.f32 %v130, %v133
  %vm135 = vweird.f32 %v130
  %v136 = vsel %vm135, %v130, %v134
  %v137 = vmul.f32 %v126, %v136
  %v138 = vmul.f32 %v129, %v136
  %v139 = vsub.f32 %v120, %v137
  %v140 = vsub.f32 %v121, %v138
  %v141 = vmul.f32 %v139, %v139
  %v142 = vmul.f32 %v140, %v140
  %v143 = vsel %vm71, %v141, 0.0
  %144 = vadd.xlane.f32.xlu0 %v143
  %v145 = vpop.xlane.xlu0 %144
  %v146 = vsel %vm71, %v142, 0.0
  %147 = vadd.xlane.f32.xlu0 %v146
  %v148 = vpop.xlane.xlu0 %147
  %v149 = vmul.f32 %v145, %v136
  %v150 = vmul.f32 %v148, %v136
  %v151 = vadd.f32 %v149, 1e-05
  %v152 = vadd.f32 %v150, 1e-05
  %v153 = vrsqrt.pop %v151
  %v154 = vmul.f32 %v153, %v151
  %v155 = vmul.f32 %v154, %v153
  %v156 = vmul.f32 0.5, %v155
  %v157 = vsub.f32 1.5, %v156
  %v158 = vmul.f32 %v153, %v157
  %vm159 = vweird.f32 %v151
  %vm160 = vweird.f32 %v153
  %vm161 = vmor %vm159, %vm160
  %v162 = vsel %vm161, %v153, %v158
  %v163 = vrsqrt.pop %v152
  %v164 = vmul.f32 %v163, %v152
  %v165 = vmul.f32 %v164, %v163
  %v166 = vmul.f32 0.5, %v165
  %v167 = vsub.f32 1.5, %v166
  %v168 = vmul.f32 %v163, %v167
  %vm169 = vweird.f32 %v152
  %vm170 = vweird.f32 %v163
  %vm171 = vmor %vm169, %vm170
  %v172 = vsel %vm171, %v163, %v168
  %v173 = vmul.f32 %v139, %v162
  %v174 = vmul.f32 %v140, %v172
  %v175 = vperm.slane %v122, 0
  %v176 = vmul.f32 %v173, %v175
  %v177 = vmul.f32 %v174, %v175
  %v178 = vperm.slane %v123, 0
  %v179 = vadd.f32 %v176, %v178
  %v180 = vadd.f32 %v177, %v178
  %v181 = vld [vmem:[%s1] sm:$0xff]
  %v182 = vld [vmem:[%s1 + $0x8] sm:$0xff]
  %v183 = vld [vmem:[%s1 + $0x10] sm:$0xff]
  %v184 = vld [vmem:[%s1 + $0x18] sm:$0xff]
  %v185 = vld [vmem:[%s3 + $0x3] sm:$0x1]
  %v186 = vld [vmem:[%s3 + $0x4] sm:$0x1]
  %v187 = vperm.slane %v185, 0
  %v188 = vsel %vm71, %v17, 0
  %v190 = vsel %vm71, %v18, 0
  %192 = vmatpush.msra.mxu0 0.0
  %193 = vmatpush.msra.mxu0 0.0
  %194 = vmatpush.msra.mxu0 0.0
  %195 = vmatpush.msra.mxu0 0.0
  %196 = vmatpush.msra.mxu0 0.0
  %197 = vmatpush.msra.mxu0 0.0
  %198 = vmatpush.msra.mxu0 0.0
  %199 = vmatpush.msra.mxu0 0.0
  %200 = vmatpush.msra.mxu0 0.0
  %201 = vmatpush.msra.mxu0 0.0
  %202 = vmatpush.msra.mxu0 0.0
  %203 = vmatpush.msra.mxu0 0.0
  %204 = vmatpush.msra.mxu0 %v184
  %205 = vmatpush.msra.mxu0 %v183
  %206 = vmatpush.msra.mxu0 %v182
  %207 = vmatpush.msra.mxu0 %v181
  %208 = vmatmul.f32.gmra.mxu0 %v188
  %v209 = vpop.f32.mrf.mxu0
  %v210 = vadd.f32 %v187, %v209
  %211 = vmatmul.f32.gmra.mxu0 %v190
  %v212 = vpop.f32.mrf.mxu0
  %v213 = vadd.f32 %v187, %v212
  %214 = vdwg.mxu0
  %219 = vrot.lane.b32.xlu0 %v181, 96
  %v220 = vpop.permute.xlu0 %219
  %221 = vrot.lane.b32.xlu0 %v182, 96
  %v222 = vpop.permute.xlu0 %221
  %223 = vrot.lane.b32.xlu0 %v183, 96
  %v224 = vpop.permute.xlu0 %223
  %225 = vrot.lane.b32.xlu0 %v184, 96
  %v226 = vpop.permute.xlu0 %225
  %232 = vrot.lane.b32.xlu0 %v187, 96
  %v233 = vpop.permute.xlu0 %232
  %235 = vmatpush.msra.mxu0 0.0
  %236 = vmatpush.msra.mxu0 0.0
  %237 = vmatpush.msra.mxu0 0.0
  %238 = vmatpush.msra.mxu0 0.0
  %239 = vmatpush.msra.mxu0 0.0
  %240 = vmatpush.msra.mxu0 0.0
  %241 = vmatpush.msra.mxu0 0.0
  %242 = vmatpush.msra.mxu0 0.0
  %243 = vmatpush.msra.mxu0 0.0
  %244 = vmatpush.msra.mxu0 0.0
  %245 = vmatpush.msra.mxu0 0.0
  %246 = vmatpush.msra.mxu0 0.0
  %247 = vmatpush.msra.mxu0 %v226
  %248 = vmatpush.msra.mxu0 %v224
  %249 = vmatpush.msra.mxu0 %v222
  %250 = vmatpush.msra.mxu0 %v220
  %251 = vmatmul.f32.gmra.mxu0 %v188
  %v252 = vpop.f32.mrf.mxu0
  %v253 = vadd.f32 %v233, %v252
  %254 = vmatmul.f32.gmra.mxu0 %v190
  %v255 = vpop.f32.mrf.mxu0
  %v256 = vadd.f32 %v233, %v255
  %257 = vdwg.mxu0
  %v258 = vmul.f32 %v210, 0.35355338
  %v259 = vmul.f32 %v213, 0.35355338
  %v261 = vsel %vm21, %v258, 0
  %v264 = vsel %vm21, %v259, 0
  %v267 = vsel %vm21, %v253, 0
  %v270 = vsel %vm21, %v256, 0
  %272 = vmatpush.xpose.msra.mxu0 0.0
  %273 = vmatpush.xpose.msra.mxu0 0.0
  %274 = vmatpush.xpose.msra.mxu0 0.0
  %275 = vmatpush.xpose.msra.mxu0 0.0
  %276 = vmatpush.xpose.msra.mxu0 0.0
  %277 = vmatpush.xpose.msra.mxu0 0.0
  %278 = vmatpush.xpose.msra.mxu0 0.0
  %279 = vmatpush.xpose.msra.mxu0 0.0
  %280 = vmatpush.xpose.msra.mxu0 0.0
  %281 = vmatpush.xpose.msra.mxu0 0.0
  %282 = vmatpush.xpose.msra.mxu0 0.0
  %283 = vmatpush.xpose.msra.mxu0 0.0
  %284 = vmatpush.xpose.msra.mxu0 0.0
  %285 = vmatpush.xpose.msra.mxu0 0.0
  %286 = vmatpush.xpose.msra.mxu0 %v270
  %287 = vmatpush.xpose.msra.mxu0 %v267
  %288 = vmatmul.f32.gmra.mxu0 %v261
  %v289 = vpop.f32.mrf.mxu0
  %v290 = vadd.f32 0.0, %v289
  %291 = vmatmul.f32.gmra.mxu0 %v264
  %v292 = vpop.f32.mrf.mxu0
  %v293 = vadd.f32 0.0, %v292
  %294 = vdwg.mxu0
  %v295 = vsel %vm30, %v290, -1e+30
  %v296 = vsel %vm31, %v293, -1e+30
  %vm297 = vcmask 130048
  %v298 = vsel %vm297, %v295, -inf
  %299 = vmax.xlane.f32.xlu0 %v298
  %v300 = vpop.xlane.xlu0 %299
  %v301 = vsel %vm297, %v296, -inf
  %302 = vmax.xlane.f32.xlu0 %v301
  %v303 = vpop.xlane.xlu0 %302
  %v304 = vsub.f32 %v295, %v300
  %v305 = vsub.f32 %v296, %v303
  %v306 = vmul.f32 %v304, 1.442695
  %v307 = vpow.pop %v306
  %v308 = vmul.f32 %v305, 1.442695
  %v309 = vpow.pop %v308
  %v310 = vsel %vm297, %v307, 0.0
  %311 = vadd.xlane.f32.xlu0 %v310
  %v312 = vpop.xlane.xlu0 %311
  %v313 = vsel %vm297, %v309, 0.0
  %314 = vadd.xlane.f32.xlu0 %v313
  %v315 = vpop.xlane.xlu0 %314
  %v316 = vrcp.pop %v312
  %v317 = vmul.f32 %v312, %v316
  %v318 = vsub.f32 1.0, %v317
  %v319 = vmul.f32 %v316, %v318
  %v320 = vadd.f32 %v316, %v319
  %vm321 = vweird.f32 %v312
  %vm322 = vweird.f32 %v316
  %vm323 = vmor %vm321, %vm322
  %v324 = vsel %vm323, %v316, %v320
  %v325 = vand.u32 2147483647, %v312
  %vm326 = vcmp.eq.f32.partialorder %v325, 8.507059e+37
  %v327 = vand.u32 %v312, 2147483648
  %v328 = vor.u32 1.1754944e-38, %v327
  %v329 = vsel %vm326, %v328, %v324
  %v330 = vmul.f32 %v307, %v329
  %v331 = vrcp.pop %v315
  %v332 = vmul.f32 %v315, %v331
  %v333 = vsub.f32 1.0, %v332
  %v334 = vmul.f32 %v331, %v333
  %v335 = vadd.f32 %v331, %v334
  %vm336 = vweird.f32 %v315
  %vm337 = vweird.f32 %v331
  %vm338 = vmor %vm336, %vm337
  %v339 = vsel %vm338, %v331, %v335
  %v340 = vand.u32 2147483647, %v315
  %vm341 = vcmp.eq.f32.partialorder %v340, 8.507059e+37
  %v342 = vand.u32 %v315, 2147483648
  %v343 = vor.u32 1.1754944e-38, %v342
  %v344 = vsel %vm341, %v343, %v339
  %v345 = vmul.f32 %v309, %v344
  %346 = vrot.lane.b32.xlu0 %v253, 96
  %v347 = vpop.permute.xlu0 %346
  %348 = vrot.lane.b32.xlu0 %v256, 96
  %v349 = vpop.permute.xlu0 %348
  %v353 = vsel %vm297, %v330, 0
  %v356 = vsel %vm297, %v345, 0
  %358 = vmatpush.msra.mxu0 0.0
  %359 = vmatpush.msra.mxu0 0.0
  %360 = vmatpush.msra.mxu0 0.0
  %361 = vmatpush.msra.mxu0 0.0
  %362 = vmatpush.msra.mxu0 0.0
  %363 = vmatpush.msra.mxu0 0.0
  %364 = vmatpush.msra.mxu0 0.0
  %365 = vmatpush.msra.mxu0 0.0
  %366 = vmatpush.msra.mxu0 0.0
  %367 = vmatpush.msra.mxu0 0.0
  %368 = vmatpush.msra.mxu0 0.0
  %369 = vmatpush.msra.mxu0 0.0
  %370 = vmatpush.msra.mxu0 0.0
  %371 = vmatpush.msra.mxu0 0.0
  %372 = vmatpush.msra.mxu0 %v349
  %373 = vmatpush.msra.mxu0 %v347
  %374 = vmatmul.f32.gmra.mxu0 %v353
  %v375 = vpop.f32.mrf.mxu0
  %v376 = vadd.f32 0.0, %v375
  %377 = vmatmul.f32.gmra.mxu0 %v356
  %v378 = vpop.f32.mrf.mxu0
  %v379 = vadd.f32 0.0, %v378
  %380 = vdwg.mxu0
  %381 = vrot.lane.b32.xlu0 %v258, 120
  %v382 = vpop.permute.xlu0 %381
  %383 = vrot.lane.b32.xlu0 %v259, 120
  %v384 = vpop.permute.xlu0 %383
  %385 = vrot.lane.b32.xlu0 %v253, 120
  %v386 = vpop.permute.xlu0 %385
  %387 = vrot.lane.b32.xlu0 %v256, 120
  %v388 = vpop.permute.xlu0 %387
  %v389 = vsel %vm21, %v382, 0
  %v391 = vsel %vm21, %v384, 0
  %v393 = vsel %vm21, %v386, 0
  %v395 = vsel %vm21, %v388, 0
  %397 = vmatpush.xpose.msra.mxu0 0.0
  %398 = vmatpush.xpose.msra.mxu0 0.0
  %399 = vmatpush.xpose.msra.mxu0 0.0
  %400 = vmatpush.xpose.msra.mxu0 0.0
  %401 = vmatpush.xpose.msra.mxu0 0.0
  %402 = vmatpush.xpose.msra.mxu0 0.0
  %403 = vmatpush.xpose.msra.mxu0 0.0
  %404 = vmatpush.xpose.msra.mxu0 0.0
  %405 = vmatpush.xpose.msra.mxu0 0.0
  %406 = vmatpush.xpose.msra.mxu0 0.0
  %407 = vmatpush.xpose.msra.mxu0 0.0
  %408 = vmatpush.xpose.msra.mxu0 0.0
  %409 = vmatpush.xpose.msra.mxu0 0.0
  %410 = vmatpush.xpose.msra.mxu0 0.0
  %411 = vmatpush.xpose.msra.mxu0 %v395
  %412 = vmatpush.xpose.msra.mxu0 %v393
  %413 = vmatmul.f32.gmra.mxu0 %v389
  %v414 = vpop.f32.mrf.mxu0
  %v415 = vadd.f32 0.0, %v414
  %416 = vmatmul.f32.gmra.mxu0 %v391
  %v417 = vpop.f32.mrf.mxu0
  %v418 = vadd.f32 0.0, %v417
  %419 = vdwg.mxu0
  %v420 = vsel %vm30, %v415, -1e+30
  %v421 = vsel %vm31, %v418, -1e+30
  %v422 = vsel %vm297, %v420, -inf
  %423 = vmax.xlane.f32.xlu0 %v422
  %v424 = vpop.xlane.xlu0 %423
  %v425 = vsel %vm297, %v421, -inf
  %426 = vmax.xlane.f32.xlu0 %v425
  %v427 = vpop.xlane.xlu0 %426
  %v428 = vsub.f32 %v420, %v424
  %v429 = vsub.f32 %v421, %v427
  %v430 = vmul.f32 %v428, 1.442695
  %v431 = vpow.pop %v430
  %v432 = vmul.f32 %v429, 1.442695
  %v433 = vpow.pop %v432
  %v434 = vsel %vm297, %v431, 0.0
  %435 = vadd.xlane.f32.xlu0 %v434
  %v436 = vpop.xlane.xlu0 %435
  %v437 = vsel %vm297, %v433, 0.0
  %438 = vadd.xlane.f32.xlu0 %v437
  %v439 = vpop.xlane.xlu0 %438
  %v440 = vrcp.pop %v436
  %v441 = vmul.f32 %v436, %v440
  %v442 = vsub.f32 1.0, %v441
  %v443 = vmul.f32 %v440, %v442
  %v444 = vadd.f32 %v440, %v443
  %vm445 = vweird.f32 %v436
  %vm446 = vweird.f32 %v440
  %vm447 = vmor %vm445, %vm446
  %v448 = vsel %vm447, %v440, %v444
  %v449 = vand.u32 2147483647, %v436
  %vm450 = vcmp.eq.f32.partialorder %v449, 8.507059e+37
  %v451 = vand.u32 %v436, 2147483648
  %v452 = vor.u32 1.1754944e-38, %v451
  %v453 = vsel %vm450, %v452, %v448
  %v454 = vmul.f32 %v431, %v453
  %v455 = vrcp.pop %v439
  %v456 = vmul.f32 %v439, %v455
  %v457 = vsub.f32 1.0, %v456
  %v458 = vmul.f32 %v455, %v457
  %v459 = vadd.f32 %v455, %v458
  %vm460 = vweird.f32 %v439
  %vm461 = vweird.f32 %v455
  %vm462 = vmor %vm460, %vm461
  %v463 = vsel %vm462, %v455, %v459
  %v464 = vand.u32 2147483647, %v439
  %vm465 = vcmp.eq.f32.partialorder %v464, 8.507059e+37
  %v466 = vand.u32 %v439, 2147483648
  %v467 = vor.u32 1.1754944e-38, %v466
  %v468 = vsel %vm465, %v467, %v463
  %v469 = vmul.f32 %v433, %v468
  %470 = vrot.lane.b32.xlu0 %v253, 88
  %v471 = vpop.permute.xlu0 %470
  %472 = vrot.lane.b32.xlu0 %v256, 88
  %v473 = vpop.permute.xlu0 %472
  %v477 = vsel %vm297, %v454, 0
  %v480 = vsel %vm297, %v469, 0
  %482 = vmatpush.msra.mxu0 0.0
  %483 = vmatpush.msra.mxu0 0.0
  %484 = vmatpush.msra.mxu0 0.0
  %485 = vmatpush.msra.mxu0 0.0
  %486 = vmatpush.msra.mxu0 0.0
  %487 = vmatpush.msra.mxu0 0.0
  %488 = vmatpush.msra.mxu0 0.0
  %489 = vmatpush.msra.mxu0 0.0
  %490 = vmatpush.msra.mxu0 0.0
  %491 = vmatpush.msra.mxu0 0.0
  %492 = vmatpush.msra.mxu0 0.0
  %493 = vmatpush.msra.mxu0 0.0
  %494 = vmatpush.msra.mxu0 0.0
  %495 = vmatpush.msra.mxu0 0.0
  %496 = vmatpush.msra.mxu0 %v473
  %497 = vmatpush.msra.mxu0 %v471
  %498 = vmatmul.f32.gmra.mxu0 %v477
  %v499 = vpop.f32.mrf.mxu0
  %v500 = vadd.f32 0.0, %v499
  %501 = vmatmul.f32.gmra.mxu0 %v480
  %v502 = vpop.f32.mrf.mxu0
  %v503 = vadd.f32 0.0, %v502
  %504 = vdwg.mxu0
  %505 = vrot.lane.b32.xlu0 %v258, 112
  %v506 = vpop.permute.xlu0 %505
  %507 = vrot.lane.b32.xlu0 %v259, 112
  %v508 = vpop.permute.xlu0 %507
  %509 = vrot.lane.b32.xlu0 %v253, 112
  %v510 = vpop.permute.xlu0 %509
  %511 = vrot.lane.b32.xlu0 %v256, 112
  %v512 = vpop.permute.xlu0 %511
  %v513 = vsel %vm21, %v506, 0
  %v515 = vsel %vm21, %v508, 0
  %v517 = vsel %vm21, %v510, 0
  %v519 = vsel %vm21, %v512, 0
  %521 = vmatpush.xpose.msra.mxu0 0.0
  %522 = vmatpush.xpose.msra.mxu0 0.0
  %523 = vmatpush.xpose.msra.mxu0 0.0
  %524 = vmatpush.xpose.msra.mxu0 0.0
  %525 = vmatpush.xpose.msra.mxu0 0.0
  %526 = vmatpush.xpose.msra.mxu0 0.0
  %527 = vmatpush.xpose.msra.mxu0 0.0
  %528 = vmatpush.xpose.msra.mxu0 0.0
  %529 = vmatpush.xpose.msra.mxu0 0.0
  %530 = vmatpush.xpose.msra.mxu0 0.0
  %531 = vmatpush.xpose.msra.mxu0 0.0
  %532 = vmatpush.xpose.msra.mxu0 0.0
  %533 = vmatpush.xpose.msra.mxu0 0.0
  %534 = vmatpush.xpose.msra.mxu0 0.0
  %535 = vmatpush.xpose.msra.mxu0 %v519
  %536 = vmatpush.xpose.msra.mxu0 %v517
  %537 = vmatmul.f32.gmra.mxu0 %v513
  %v538 = vpop.f32.mrf.mxu0
  %v539 = vadd.f32 0.0, %v538
  %540 = vmatmul.f32.gmra.mxu0 %v515
  %v541 = vpop.f32.mrf.mxu0
  %v542 = vadd.f32 0.0, %v541
  %543 = vdwg.mxu0
  %v544 = vsel %vm30, %v539, -1e+30
  %v545 = vsel %vm31, %v542, -1e+30
  %v546 = vsel %vm297, %v544, -inf
  %547 = vmax.xlane.f32.xlu0 %v546
  %v548 = vpop.xlane.xlu0 %547
  %v549 = vsel %vm297, %v545, -inf
  %550 = vmax.xlane.f32.xlu0 %v549
  %v551 = vpop.xlane.xlu0 %550
  %v552 = vsub.f32 %v544, %v548
  %v553 = vsub.f32 %v545, %v551
  %v554 = vmul.f32 %v552, 1.442695
  %v555 = vpow.pop %v554
  %v556 = vmul.f32 %v553, 1.442695
  %v557 = vpow.pop %v556
  %v558 = vsel %vm297, %v555, 0.0
  %559 = vadd.xlane.f32.xlu0 %v558
  %v560 = vpop.xlane.xlu0 %559
  %v561 = vsel %vm297, %v557, 0.0
  %562 = vadd.xlane.f32.xlu0 %v561
  %v563 = vpop.xlane.xlu0 %562
  %v564 = vrcp.pop %v560
  %v565 = vmul.f32 %v560, %v564
  %v566 = vsub.f32 1.0, %v565
  %v567 = vmul.f32 %v564, %v566
  %v568 = vadd.f32 %v564, %v567
  %vm569 = vweird.f32 %v560
  %vm570 = vweird.f32 %v564
  %vm571 = vmor %vm569, %vm570
  %v572 = vsel %vm571, %v564, %v568
  %v573 = vand.u32 2147483647, %v560
  %vm574 = vcmp.eq.f32.partialorder %v573, 8.507059e+37
  %v575 = vand.u32 %v560, 2147483648
  %v576 = vor.u32 1.1754944e-38, %v575
  %v577 = vsel %vm574, %v576, %v572
  %v578 = vmul.f32 %v555, %v577
  %v579 = vrcp.pop %v563
  %v580 = vmul.f32 %v563, %v579
  %v581 = vsub.f32 1.0, %v580
  %v582 = vmul.f32 %v579, %v581
  %v583 = vadd.f32 %v579, %v582
  %vm584 = vweird.f32 %v563
  %vm585 = vweird.f32 %v579
  %vm586 = vmor %vm584, %vm585
  %v587 = vsel %vm586, %v579, %v583
  %v588 = vand.u32 2147483647, %v563
  %vm589 = vcmp.eq.f32.partialorder %v588, 8.507059e+37
  %v590 = vand.u32 %v563, 2147483648
  %v591 = vor.u32 1.1754944e-38, %v590
  %v592 = vsel %vm589, %v591, %v587
  %v593 = vmul.f32 %v557, %v592
  %594 = vrot.lane.b32.xlu0 %v253, 80
  %v595 = vpop.permute.xlu0 %594
  %596 = vrot.lane.b32.xlu0 %v256, 80
  %v597 = vpop.permute.xlu0 %596
  %v601 = vsel %vm297, %v578, 0
  %v604 = vsel %vm297, %v593, 0
  %606 = vmatpush.msra.mxu0 0.0
  %607 = vmatpush.msra.mxu0 0.0
  %608 = vmatpush.msra.mxu0 0.0
  %609 = vmatpush.msra.mxu0 0.0
  %610 = vmatpush.msra.mxu0 0.0
  %611 = vmatpush.msra.mxu0 0.0
  %612 = vmatpush.msra.mxu0 0.0
  %613 = vmatpush.msra.mxu0 0.0
  %614 = vmatpush.msra.mxu0 0.0
  %615 = vmatpush.msra.mxu0 0.0
  %616 = vmatpush.msra.mxu0 0.0
  %617 = vmatpush.msra.mxu0 0.0
  %618 = vmatpush.msra.mxu0 0.0
  %619 = vmatpush.msra.mxu0 0.0
  %620 = vmatpush.msra.mxu0 %v597
  %621 = vmatpush.msra.mxu0 %v595
  %622 = vmatmul.f32.gmra.mxu0 %v601
  %v623 = vpop.f32.mrf.mxu0
  %v624 = vadd.f32 0.0, %v623
  %625 = vmatmul.f32.gmra.mxu0 %v604
  %v626 = vpop.f32.mrf.mxu0
  %v627 = vadd.f32 0.0, %v626
  %628 = vdwg.mxu0
  %629 = vrot.lane.b32.xlu0 %v258, 104
  %v630 = vpop.permute.xlu0 %629
  %631 = vrot.lane.b32.xlu0 %v259, 104
  %v632 = vpop.permute.xlu0 %631
  %633 = vrot.lane.b32.xlu0 %v253, 104
  %v634 = vpop.permute.xlu0 %633
  %635 = vrot.lane.b32.xlu0 %v256, 104
  %v636 = vpop.permute.xlu0 %635
  %v637 = vsel %vm21, %v630, 0
  %v639 = vsel %vm21, %v632, 0
  %v641 = vsel %vm21, %v634, 0
  %v643 = vsel %vm21, %v636, 0
  %645 = vmatpush.xpose.msra.mxu0 0.0
  %646 = vmatpush.xpose.msra.mxu0 0.0
  %647 = vmatpush.xpose.msra.mxu0 0.0
  %648 = vmatpush.xpose.msra.mxu0 0.0
  %649 = vmatpush.xpose.msra.mxu0 0.0
  %650 = vmatpush.xpose.msra.mxu0 0.0
  %651 = vmatpush.xpose.msra.mxu0 0.0
  %652 = vmatpush.xpose.msra.mxu0 0.0
  %653 = vmatpush.xpose.msra.mxu0 0.0
  %654 = vmatpush.xpose.msra.mxu0 0.0
  %655 = vmatpush.xpose.msra.mxu0 0.0
  %656 = vmatpush.xpose.msra.mxu0 0.0
  %657 = vmatpush.xpose.msra.mxu0 0.0
  %658 = vmatpush.xpose.msra.mxu0 0.0
  %659 = vmatpush.xpose.msra.mxu0 %v643
  %660 = vmatpush.xpose.msra.mxu0 %v641
  %661 = vmatmul.f32.gmra.mxu0 %v637
  %v662 = vpop.f32.mrf.mxu0
  %v663 = vadd.f32 0.0, %v662
  %664 = vmatmul.f32.gmra.mxu0 %v639
  %v665 = vpop.f32.mrf.mxu0
  %v666 = vadd.f32 0.0, %v665
  %667 = vdwg.mxu0
  %v668 = vsel %vm30, %v663, -1e+30
  %v669 = vsel %vm31, %v666, -1e+30
  %v670 = vsel %vm297, %v668, -inf
  %671 = vmax.xlane.f32.xlu0 %v670
  %v672 = vpop.xlane.xlu0 %671
  %v673 = vsel %vm297, %v669, -inf
  %674 = vmax.xlane.f32.xlu0 %v673
  %v675 = vpop.xlane.xlu0 %674
  %v676 = vsub.f32 %v668, %v672
  %v677 = vsub.f32 %v669, %v675
  %v678 = vmul.f32 %v676, 1.442695
  %v679 = vpow.pop %v678
  %v680 = vmul.f32 %v677, 1.442695
  %v681 = vpow.pop %v680
  %v682 = vsel %vm297, %v679, 0.0
  %683 = vadd.xlane.f32.xlu0 %v682
  %v684 = vpop.xlane.xlu0 %683
  %v685 = vsel %vm297, %v681, 0.0
  %686 = vadd.xlane.f32.xlu0 %v685
  %v687 = vpop.xlane.xlu0 %686
  %v688 = vrcp.pop %v684
  %v689 = vmul.f32 %v684, %v688
  %v690 = vsub.f32 1.0, %v689
  %v691 = vmul.f32 %v688, %v690
  %v692 = vadd.f32 %v688, %v691
  %vm693 = vweird.f32 %v684
  %vm694 = vweird.f32 %v688
  %vm695 = vmor %vm693, %vm694
  %v696 = vsel %vm695, %v688, %v692
  %v697 = vand.u32 2147483647, %v684
  %vm698 = vcmp.eq.f32.partialorder %v697, 8.507059e+37
  %v699 = vand.u32 %v684, 2147483648
  %v700 = vor.u32 1.1754944e-38, %v699
  %v701 = vsel %vm698, %v700, %v696
  %v702 = vmul.f32 %v679, %v701
  %v703 = vrcp.pop %v687
  %v704 = vmul.f32 %v687, %v703
  %v705 = vsub.f32 1.0, %v704
  %v706 = vmul.f32 %v703, %v705
  %v707 = vadd.f32 %v703, %v706
  %vm708 = vweird.f32 %v687
  %vm709 = vweird.f32 %v703
  %vm710 = vmor %vm708, %vm709
  %v711 = vsel %vm710, %v703, %v707
  %v712 = vand.u32 2147483647, %v687
  %vm713 = vcmp.eq.f32.partialorder %v712, 8.507059e+37
  %v714 = vand.u32 %v687, 2147483648
  %v715 = vor.u32 1.1754944e-38, %v714
  %v716 = vsel %vm713, %v715, %v711
  %v717 = vmul.f32 %v681, %v716
  %718 = vrot.lane.b32.xlu0 %v253, 72
  %v719 = vpop.permute.xlu0 %718
  %720 = vrot.lane.b32.xlu0 %v256, 72
  %v721 = vpop.permute.xlu0 %720
  %v725 = vsel %vm297, %v702, 0
  %v728 = vsel %vm297, %v717, 0
  %730 = vmatpush.msra.mxu0 0.0
  %731 = vmatpush.msra.mxu0 0.0
  %732 = vmatpush.msra.mxu0 0.0
  %733 = vmatpush.msra.mxu0 0.0
  %734 = vmatpush.msra.mxu0 0.0
  %735 = vmatpush.msra.mxu0 0.0
  %736 = vmatpush.msra.mxu0 0.0
  %737 = vmatpush.msra.mxu0 0.0
  %738 = vmatpush.msra.mxu0 0.0
  %739 = vmatpush.msra.mxu0 0.0
  %740 = vmatpush.msra.mxu0 0.0
  %741 = vmatpush.msra.mxu0 0.0
  %742 = vmatpush.msra.mxu0 0.0
  %743 = vmatpush.msra.mxu0 0.0
  %744 = vmatpush.msra.mxu0 %v721
  %745 = vmatpush.msra.mxu0 %v719
  %746 = vmatmul.f32.gmra.mxu0 %v725
  %v747 = vpop.f32.mrf.mxu0
  %v748 = vadd.f32 0.0, %v747
  %749 = vmatmul.f32.gmra.mxu0 %v728
  %v750 = vpop.f32.mrf.mxu0
  %v751 = vadd.f32 0.0, %v750
  %752 = vdwg.mxu0
  %755 = vrot.lane.b32.xlu0 %v500, 8
  %v756 = vpop.permute.xlu0 %755
  %757 = vrot.lane.b32.xlu0 %v503, 8
  %v758 = vpop.permute.xlu0 %757
  %763 = vrot.lane.b32.xlu0 %v624, 16
  %v764 = vpop.permute.xlu0 %763
  %765 = vrot.lane.b32.xlu0 %v627, 16
  %v766 = vpop.permute.xlu0 %765
  %771 = vrot.lane.b32.xlu0 %v748, 24
  %v772 = vpop.permute.xlu0 %771
  %773 = vrot.lane.b32.xlu0 %v751, 24
  %v774 = vpop.permute.xlu0 %773
  %v777 = vsel %vm21, %v376, %v756
  %v778 = vsel %vm21, %v379, %v758
  %v779 = vsel %vm297, %v777, %v764
  %v780 = vsel %vm297, %v778, %v766
  %vm781 = vcmask 195584
  %v782 = vsel %vm781, %v779, %v772
  %v783 = vsel %vm781, %v780, %v774
  %v784 = vperm.slane %v186, 0
  %785 = vrot.lane.b32.xlu0 %v181, 32
  %v786 = vpop.permute.xlu0 %785
  %787 = vrot.lane.b32.xlu0 %v182, 32
  %v788 = vpop.permute.xlu0 %787
  %789 = vrot.lane.b32.xlu0 %v183, 32
  %v790 = vpop.permute.xlu0 %789
  %791 = vrot.lane.b32.xlu0 %v184, 32
  %v792 = vpop.permute.xlu0 %791
  %v798 = vsel %vm71, %v782, 0
  %v801 = vsel %vm71, %v783, 0
  %803 = vmatpush.msra.mxu0 0.0
  %804 = vmatpush.msra.mxu0 0.0
  %805 = vmatpush.msra.mxu0 0.0
  %806 = vmatpush.msra.mxu0 0.0
  %807 = vmatpush.msra.mxu0 0.0
  %808 = vmatpush.msra.mxu0 0.0
  %809 = vmatpush.msra.mxu0 0.0
  %810 = vmatpush.msra.mxu0 0.0
  %811 = vmatpush.msra.mxu0 0.0
  %812 = vmatpush.msra.mxu0 0.0
  %813 = vmatpush.msra.mxu0 0.0
  %814 = vmatpush.msra.mxu0 0.0
  %815 = vmatpush.msra.mxu0 %v792
  %816 = vmatpush.msra.mxu0 %v790
  %817 = vmatpush.msra.mxu0 %v788
  %818 = vmatpush.msra.mxu0 %v786
  %819 = vmatmul.f32.gmra.mxu0 %v798
  %v820 = vpop.f32.mrf.mxu0
  %v821 = vadd.f32 %v784, %v820
  %822 = vmatmul.f32.gmra.mxu0 %v801
  %v823 = vpop.f32.mrf.mxu0
  %v824 = vadd.f32 %v784, %v823
  %825 = vdwg.mxu0
  %v826 = vadd.f32 %v821, %v17
  %v827 = vadd.f32 %v824, %v18
  %v828 = vld [vmem:[%s3 + $0x9] sm:$0x1]
  %v829 = vld [vmem:[%s3 + $0xa] sm:$0x1]
  %v830 = vsel %vm71, %v826, 0.0
  %831 = vadd.xlane.f32.xlu0 %v830
  %v832 = vpop.xlane.xlu0 %831
  %v833 = vsel %vm71, %v827, 0.0
  %834 = vadd.xlane.f32.xlu0 %v833
  %v835 = vpop.xlane.xlu0 %834
  %v836 = vmul.f32 %v832, %v136
  %v837 = vmul.f32 %v835, %v136
  %v838 = vsub.f32 %v826, %v836
  %v839 = vsub.f32 %v827, %v837
  %v840 = vmul.f32 %v838, %v838
  %v841 = vmul.f32 %v839, %v839
  %v842 = vsel %vm71, %v840, 0.0
  %843 = vadd.xlane.f32.xlu0 %v842
  %v844 = vpop.xlane.xlu0 %843
  %v845 = vsel %vm71, %v841, 0.0
  %846 = vadd.xlane.f32.xlu0 %v845
  %v847 = vpop.xlane.xlu0 %846
  %v848 = vmul.f32 %v844, %v136
  %v849 = vmul.f32 %v847, %v136
  %v850 = vadd.f32 %v848, 1e-05
  %v851 = vadd.f32 %v849, 1e-05
  %v852 = vrsqrt.pop %v850
  %v853 = vmul.f32 %v852, %v850
  %v854 = vmul.f32 %v853, %v852
  %v855 = vmul.f32 0.5, %v854
  %v856 = vsub.f32 1.5, %v855
  %v857 = vmul.f32 %v852, %v856
  %vm858 = vweird.f32 %v850
  %vm859 = vweird.f32 %v852
  %vm860 = vmor %vm858, %vm859
  %v861 = vsel %vm860, %v852, %v857
  %v862 = vrsqrt.pop %v851
  %v863 = vmul.f32 %v862, %v851
  %v864 = vmul.f32 %v863, %v862
  %v865 = vmul.f32 0.5, %v864
  %v866 = vsub.f32 1.5, %v865
  %v867 = vmul.f32 %v862, %v866
  %vm868 = vweird.f32 %v851
  %vm869 = vweird.f32 %v862
  %vm870 = vmor %vm868, %vm869
  %v871 = vsel %vm870, %v862, %v867
  %v872 = vmul.f32 %v838, %v861
  %v873 = vmul.f32 %v839, %v871
  %v874 = vperm.slane %v828, 0
  %v875 = vmul.f32 %v872, %v874
  %v876 = vmul.f32 %v873, %v874
  %v877 = vperm.slane %v829, 0
  %v878 = vadd.f32 %v875, %v877
  %v879 = vadd.f32 %v876, %v877
  %v880 = vld [vmem:[%s2 + $0x60] sm:$0xff]
  %v881 = vld [vmem:[%s2 + $0x68] sm:$0xff]
  %v882 = vld [vmem:[%s2 + $0x70] sm:$0xff]
  %v883 = vld [vmem:[%s2 + $0x78] sm:$0xff]
  %v884 = vld [vmem:[%s3 + $0xb] sm:$0x1]
  %v885 = vperm.slane %v884, 0
  %v887 = vsel %vm71, %v878, 0
  %v890 = vsel %vm71, %v879, 0
  %892 = vmatpush.msra.mxu0 0.0
  %893 = vmatpush.msra.mxu0 0.0
  %894 = vmatpush.msra.mxu0 0.0
  %895 = vmatpush.msra.mxu0 0.0
  %896 = vmatpush.msra.mxu0 0.0
  %897 = vmatpush.msra.mxu0 0.0
  %898 = vmatpush.msra.mxu0 0.0
  %899 = vmatpush.msra.mxu0 0.0
  %900 = vmatpush.msra.mxu0 0.0
  %901 = vmatpush.msra.mxu0 0.0
  %902 = vmatpush.msra.mxu0 0.0
  %903 = vmatpush.msra.mxu0 0.0
  %904 = vmatpush.msra.mxu0 %v883
  %905 = vmatpush.msra.mxu0 %v882
  %906 = vmatpush.msra.mxu0 %v881
  %907 = vmatpush.msra.mxu0 %v880
  %908 = vmatmul.f32.gmra.mxu0 %v887
  %v909 = vpop.f32.mrf.mxu0
  %v910 = vadd.f32 %v885, %v909
  %911 = vmatmul.f32.gmra.mxu0 %v890
  %v912 = vpop.f32.mrf.mxu0
  %v913 = vadd.f32 %v885, %v912
  %914 = vdwg.mxu0
  %v915 = vmax.f32 %v910, 0.0
  %v916 = vmax.f32 %v913, 0.0
  %v917 = vld [vmem:[%s3 + $0xc] sm:$0x1]
  %v918 = vld [vmem:[%s3 + $0xd] sm:$0x1]
  %v919 = vsel %vm71, %v915, 0.0
  %920 = vadd.xlane.f32.xlu0 %v919
  %v921 = vpop.xlane.xlu0 %920
  %v922 = vsel %vm71, %v916, 0.0
  %923 = vadd.xlane.f32.xlu0 %v922
  %v924 = vpop.xlane.xlu0 %923
  %v925 = vmul.f32 %v921, %v136
  %v926 = vmul.f32 %v924, %v136
  %v927 = vsub.f32 %v915, %v925
  %v928 = vsub.f32 %v916, %v926
  %v929 = vmul.f32 %v927, %v927
  %v930 = vmul.f32 %v928, %v928
  %v931 = vsel %vm71, %v929, 0.0
  %932 = vadd.xlane.f32.xlu0 %v931
  %v933 = vpop.xlane.xlu0 %932
  %v934 = vsel %vm71, %v930, 0.0
  %935 = vadd.xlane.f32.xlu0 %v934
  %v936 = vpop.xlane.xlu0 %935
  %v937 = vmul.f32 %v933, %v136
  %v938 = vmul.f32 %v936, %v136
  %v939 = vadd.f32 %v937, 1e-05
  %v940 = vadd.f32 %v938, 1e-05
  %v941 = vrsqrt.pop %v939
  %v942 = vmul.f32 %v941, %v939
  %v943 = vmul.f32 %v942, %v941
  %v944 = vmul.f32 0.5, %v943
  %v945 = vsub.f32 1.5, %v944
  %v946 = vmul.f32 %v941, %v945
  %vm947 = vweird.f32 %v939
  %vm948 = vweird.f32 %v941
  %vm949 = vmor %vm947, %vm948
  %v950 = vsel %vm949, %v941, %v946
  %v951 = vrsqrt.pop %v940
  %v952 = vmul.f32 %v951, %v940
  %v953 = vmul.f32 %v952, %v951
  %v954 = vmul.f32 0.5, %v953
  %v955 = vsub.f32 1.5, %v954
  %v956 = vmul.f32 %v951, %v955
  %vm957 = vweird.f32 %v940
  %vm958 = vweird.f32 %v951
  %vm959 = vmor %vm957, %vm958
  %v960 = vsel %vm959, %v951, %v956
  %v961 = vmul.f32 %v927, %v950
  %v962 = vmul.f32 %v928, %v960
  %v963 = vperm.slane %v917, 0
  %v964 = vmul.f32 %v961, %v963
  %v965 = vmul.f32 %v962, %v963
  %v966 = vperm.slane %v918, 0
  %v967 = vadd.f32 %v964, %v966
  %v968 = vadd.f32 %v965, %v966
  %v969 = vadd.f32 %v967, %v878
  %v970 = vadd.f32 %v968, %v879
  %s971 = scalar_lea.vmem %s1, 32
  %v972 = vld [vmem:[%s971] sm:$0xff]
  %v973 = vld [vmem:[%s971 + $0x8] sm:$0xff]
  %v974 = vld [vmem:[%s971 + $0x10] sm:$0xff]
  %v975 = vld [vmem:[%s971 + $0x18] sm:$0xff]
  %v976 = vld [vmem:[%s3 + $0x5] sm:$0x1]
  %v977 = vld [vmem:[%s3 + $0x6] sm:$0x1]
  %v978 = vperm.slane %v976, 0
  %v980 = vsel %vm71, %v969, 0
  %v983 = vsel %vm71, %v970, 0
  %985 = vmatpush.msra.mxu0 0.0
  %986 = vmatpush.msra.mxu0 0.0
  %987 = vmatpush.msra.mxu0 0.0
  %988 = vmatpush.msra.mxu0 0.0
  %989 = vmatpush.msra.mxu0 0.0
  %990 = vmatpush.msra.mxu0 0.0
  %991 = vmatpush.msra.mxu0 0.0
  %992 = vmatpush.msra.mxu0 0.0
  %993 = vmatpush.msra.mxu0 0.0
  %994 = vmatpush.msra.mxu0 0.0
  %995 = vmatpush.msra.mxu0 0.0
  %996 = vmatpush.msra.mxu0 0.0
  %997 = vmatpush.msra.mxu0 %v975
  %998 = vmatpush.msra.mxu0 %v974
  %999 = vmatpush.msra.mxu0 %v973
  %1000 = vmatpush.msra.mxu0 %v972
  %1001 = vmatmul.f32.gmra.mxu0 %v980
  %v1002 = vpop.f32.mrf.mxu0
  %v1003 = vadd.f32 %v978, %v1002
  %1004 = vmatmul.f32.gmra.mxu0 %v983
  %v1005 = vpop.f32.mrf.mxu0
  %v1006 = vadd.f32 %v978, %v1005
  %1007 = vdwg.mxu0
  %1012 = vrot.lane.b32.xlu0 %v972, 96
  %v1013 = vpop.permute.xlu0 %1012
  %1014 = vrot.lane.b32.xlu0 %v973, 96
  %v1015 = vpop.permute.xlu0 %1014
  %1016 = vrot.lane.b32.xlu0 %v974, 96
  %v1017 = vpop.permute.xlu0 %1016
  %1018 = vrot.lane.b32.xlu0 %v975, 96
  %v1019 = vpop.permute.xlu0 %1018
  %1025 = vrot.lane.b32.xlu0 %v978, 96
  %v1026 = vpop.permute.xlu0 %1025
  %v1029 = vsel %vm71, %v179, 0
  %v1032 = vsel %vm71, %v180, 0
  %1034 = vmatpush.msra.mxu0 0.0
  %1035 = vmatpush.msra.mxu0 0.0
  %1036 = vmatpush.msra.mxu0 0.0
  %1037 = vmatpush.msra.mxu0 0.0
  %1038 = vmatpush.msra.mxu0 0.0
  %1039 = vmatpush.msra.mxu0 0.0
  %1040 = vmatpush.msra.mxu0 0.0
  %1041 = vmatpush.msra.mxu0 0.0
  %1042 = vmatpush.msra.mxu0 0.0
  %1043 = vmatpush.msra.mxu0 0.0
  %1044 = vmatpush.msra.mxu0 0.0
  %1045 = vmatpush.msra.mxu0 0.0
  %1046 = vmatpush.msra.mxu0 %v1019
  %1047 = vmatpush.msra.mxu0 %v1017
  %1048 = vmatpush.msra.mxu0 %v1015
  %1049 = vmatpush.msra.mxu0 %v1013
  %1050 = vmatmul.f32.gmra.mxu0 %v1029
  %v1051 = vpop.f32.mrf.mxu0
  %v1052 = vadd.f32 %v1026, %v1051
  %1053 = vmatmul.f32.gmra.mxu0 %v1032
  %v1054 = vpop.f32.mrf.mxu0
  %v1055 = vadd.f32 %v1026, %v1054
  %1056 = vdwg.mxu0
  %v1057 = vmul.f32 %v1003, 0.35355338
  %v1058 = vmul.f32 %v1006, 0.35355338
  %v1060 = vsel %vm21, %v1057, 0
  %v1063 = vsel %vm21, %v1058, 0
  %v1066 = vsel %vm21, %v1052, 0
  %v1069 = vsel %vm21, %v1055, 0
  %1071 = vmatpush.xpose.msra.mxu0 0.0
  %1072 = vmatpush.xpose.msra.mxu0 0.0
  %1073 = vmatpush.xpose.msra.mxu0 0.0
  %1074 = vmatpush.xpose.msra.mxu0 0.0
  %1075 = vmatpush.xpose.msra.mxu0 0.0
  %1076 = vmatpush.xpose.msra.mxu0 0.0
  %1077 = vmatpush.xpose.msra.mxu0 0.0
  %1078 = vmatpush.xpose.msra.mxu0 0.0
  %1079 = vmatpush.xpose.msra.mxu0 0.0
  %1080 = vmatpush.xpose.msra.mxu0 0.0
  %1081 = vmatpush.xpose.msra.mxu0 0.0
  %1082 = vmatpush.xpose.msra.mxu0 0.0
  %1083 = vmatpush.xpose.msra.mxu0 0.0
  %1084 = vmatpush.xpose.msra.mxu0 0.0
  %1085 = vmatpush.xpose.msra.mxu0 %v1069
  %1086 = vmatpush.xpose.msra.mxu0 %v1066
  %1087 = vmatmul.f32.gmra.mxu0 %v1060
  %v1088 = vpop.f32.mrf.mxu0
  %v1089 = vadd.f32 0.0, %v1088
  %1090 = vmatmul.f32.gmra.mxu0 %v1063
  %v1091 = vpop.f32.mrf.mxu0
  %v1092 = vadd.f32 0.0, %v1091
  %1093 = vdwg.mxu0
  %v1094 = vsel %vm30, %v1089, -1e+30
  %v1095 = vsel %vm31, %v1092, -1e+30
  %v1096 = vsel %vm297, %v1094, -inf
  %1097 = vmax.xlane.f32.xlu0 %v1096
  %v1098 = vpop.xlane.xlu0 %1097
  %v1099 = vsel %vm297, %v1095, -inf
  %1100 = vmax.xlane.f32.xlu0 %v1099
  %v1101 = vpop.xlane.xlu0 %1100
  %v1102 = vsub.f32 %v1094, %v1098
  %v1103 = vsub.f32 %v1095, %v1101
  %v1104 = vmul.f32 %v1102, 1.442695
  %v1105 = vpow.pop %v1104
  %v1106 = vmul.f32 %v1103, 1.442695
  %v1107 = vpow.pop %v1106
  %v1108 = vsel %vm297, %v1105, 0.0
  %1109 = vadd.xlane.f32.xlu0 %v1108
  %v1110 = vpop.xlane.xlu0 %1109
  %v1111 = vsel %vm297, %v1107, 0.0
  %1112 = vadd.xlane.f32.xlu0 %v1111
  %v1113 = vpop.xlane.xlu0 %1112
  %v1114 = vrcp.pop %v1110
  %v1115 = vmul.f32 %v1110, %v1114
  %v1116 = vsub.f32 1.0, %v1115
  %v1117 = vmul.f32 %v1114, %v1116
  %v1118 = vadd.f32 %v1114, %v1117
  %vm1119 = vweird.f32 %v1110
  %vm1120 = vweird.f32 %v1114
  %vm1121 = vmor %vm1119, %vm1120
  %v1122 = vsel %vm1121, %v1114, %v1118
  %v1123 = vand.u32 2147483647, %v1110
  %vm1124 = vcmp.eq.f32.partialorder %v1123, 8.507059e+37
  %v1125 = vand.u32 %v1110, 2147483648
  %v1126 = vor.u32 1.1754944e-38, %v1125
  %v1127 = vsel %vm1124, %v1126, %v1122
  %v1128 = vmul.f32 %v1105, %v1127
  %v1129 = vrcp.pop %v1113
  %v1130 = vmul.f32 %v1113, %v1129
  %v1131 = vsub.f32 1.0, %v1130
  %v1132 = vmul.f32 %v1129, %v1131
  %v1133 = vadd.f32 %v1129, %v1132
  %vm1134 = vweird.f32 %v1113
  %vm1135 = vweird.f32 %v1129
  %vm1136 = vmor %vm1134, %vm1135
  %v1137 = vsel %vm1136, %v1129, %v1133
  %v1138 = vand.u32 2147483647, %v1113
  %vm1139 = vcmp.eq.f32.partialorder %v1138, 8.507059e+37
  %v1140 = vand.u32 %v1113, 2147483648
  %v1141 = vor.u32 1.1754944e-38, %v1140
  %v1142 = vsel %vm1139, %v1141, %v1137
  %v1143 = vmul.f32 %v1107, %v1142
  %1144 = vrot.lane.b32.xlu0 %v1052, 96
  %v1145 = vpop.permute.xlu0 %1144
  %1146 = vrot.lane.b32.xlu0 %v1055, 96
  %v1147 = vpop.permute.xlu0 %1146
  %v1151 = vsel %vm297, %v1128, 0
  %v1154 = vsel %vm297, %v1143, 0
  %1156 = vmatpush.msra.mxu0 0.0
  %1157 = vmatpush.msra.mxu0 0.0
  %1158 = vmatpush.msra.mxu0 0.0
  %1159 = vmatpush.msra.mxu0 0.0
  %1160 = vmatpush.msra.mxu0 0.0
  %1161 = vmatpush.msra.mxu0 0.0
  %1162 = vmatpush.msra.mxu0 0.0
  %1163 = vmatpush.msra.mxu0 0.0
  %1164 = vmatpush.msra.mxu0 0.0
  %1165 = vmatpush.msra.mxu0 0.0
  %1166 = vmatpush.msra.mxu0 0.0
  %1167 = vmatpush.msra.mxu0 0.0
  %1168 = vmatpush.msra.mxu0 0.0
  %1169 = vmatpush.msra.mxu0 0.0
  %1170 = vmatpush.msra.mxu0 %v1147
  %1171 = vmatpush.msra.mxu0 %v1145
  %1172 = vmatmul.f32.gmra.mxu0 %v1151
  %v1173 = vpop.f32.mrf.mxu0
  %v1174 = vadd.f32 0.0, %v1173
  %1175 = vmatmul.f32.gmra.mxu0 %v1154
  %v1176 = vpop.f32.mrf.mxu0
  %v1177 = vadd.f32 0.0, %v1176
  %1178 = vdwg.mxu0
  %1179 = vrot.lane.b32.xlu0 %v1057, 120
  %v1180 = vpop.permute.xlu0 %1179
  %1181 = vrot.lane.b32.xlu0 %v1058, 120
  %v1182 = vpop.permute.xlu0 %1181
  %1183 = vrot.lane.b32.xlu0 %v1052, 120
  %v1184 = vpop.permute.xlu0 %1183
  %1185 = vrot.lane.b32.xlu0 %v1055, 120
  %v1186 = vpop.permute.xlu0 %1185
  %v1187 = vsel %vm21, %v1180, 0
  %v1189 = vsel %vm21, %v1182, 0
  %v1191 = vsel %vm21, %v1184, 0
  %v1193 = vsel %vm21, %v1186, 0
  %1195 = vmatpush.xpose.msra.mxu0 0.0
  %1196 = vmatpush.xpose.msra.mxu0 0.0
  %1197 = vmatpush.xpose.msra.mxu0 0.0
  %1198 = vmatpush.xpose.msra.mxu0 0.0
  %1199 = vmatpush.xpose.msra.mxu0 0.0
  %1200 = vmatpush.xpose.msra.mxu0 0.0
  %1201 = vmatpush.xpose.msra.mxu0 0.0
  %1202 = vmatpush.xpose.msra.mxu0 0.0
  %1203 = vmatpush.xpose.msra.mxu0 0.0
  %1204 = vmatpush.xpose.msra.mxu0 0.0
  %1205 = vmatpush.xpose.msra.mxu0 0.0
  %1206 = vmatpush.xpose.msra.mxu0 0.0
  %1207 = vmatpush.xpose.msra.mxu0 0.0
  %1208 = vmatpush.xpose.msra.mxu0 0.0
  %1209 = vmatpush.xpose.msra.mxu0 %v1193
  %1210 = vmatpush.xpose.msra.mxu0 %v1191
  %1211 = vmatmul.f32.gmra.mxu0 %v1187
  %v1212 = vpop.f32.mrf.mxu0
  %v1213 = vadd.f32 0.0, %v1212
  %1214 = vmatmul.f32.gmra.mxu0 %v1189
  %v1215 = vpop.f32.mrf.mxu0
  %v1216 = vadd.f32 0.0, %v1215
  %1217 = vdwg.mxu0
  %v1218 = vsel %vm30, %v1213, -1e+30
  %v1219 = vsel %vm31, %v1216, -1e+30
  %v1220 = vsel %vm297, %v1218, -inf
  %1221 = vmax.xlane.f32.xlu0 %v1220
  %v1222 = vpop.xlane.xlu0 %1221
  %v1223 = vsel %vm297, %v1219, -inf
  %1224 = vmax.xlane.f32.xlu0 %v1223
  %v1225 = vpop.xlane.xlu0 %1224
  %v1226 = vsub.f32 %v1218, %v1222
  %v1227 = vsub.f32 %v1219, %v1225
  %v1228 = vmul.f32 %v1226, 1.442695
  %v1229 = vpow.pop %v1228
  %v1230 = vmul.f32 %v1227, 1.442695
  %v1231 = vpow.pop %v1230
  %v1232 = vsel %vm297, %v1229, 0.0
  %1233 = vadd.xlane.f32.xlu0 %v1232
  %v1234 = vpop.xlane.xlu0 %1233
  %v1235 = vsel %vm297, %v1231, 0.0
  %1236 = vadd.xlane.f32.xlu0 %v1235
  %v1237 = vpop.xlane.xlu0 %1236
  %v1238 = vrcp.pop %v1234
  %v1239 = vmul.f32 %v1234, %v1238
  %v1240 = vsub.f32 1.0, %v1239
  %v1241 = vmul.f32 %v1238, %v1240
  %v1242 = vadd.f32 %v1238, %v1241
  %vm1243 = vweird.f32 %v1234
  %vm1244 = vweird.f32 %v1238
  %vm1245 = vmor %vm1243, %vm1244
  %v1246 = vsel %vm1245, %v1238, %v1242
  %v1247 = vand.u32 2147483647, %v1234
  %vm1248 = vcmp.eq.f32.partialorder %v1247, 8.507059e+37
  %v1249 = vand.u32 %v1234, 2147483648
  %v1250 = vor.u32 1.1754944e-38, %v1249
  %v1251 = vsel %vm1248, %v1250, %v1246
  %v1252 = vmul.f32 %v1229, %v1251
  %v1253 = vrcp.pop %v1237
  %v1254 = vmul.f32 %v1237, %v1253
  %v1255 = vsub.f32 1.0, %v1254
  %v1256 = vmul.f32 %v1253, %v1255
  %v1257 = vadd.f32 %v1253, %v1256
  %vm1258 = vweird.f32 %v1237
  %vm1259 = vweird.f32 %v1253
  %vm1260 = vmor %vm1258, %vm1259
  %v1261 = vsel %vm1260, %v1253, %v1257
  %v1262 = vand.u32 2147483647, %v1237
  %vm1263 = vcmp.eq.f32.partialorder %v1262, 8.507059e+37
  %v1264 = vand.u32 %v1237, 2147483648
  %v1265 = vor.u32 1.1754944e-38, %v1264
  %v1266 = vsel %vm1263, %v1265, %v1261
  %v1267 = vmul.f32 %v1231, %v1266
  %1268 = vrot.lane.b32.xlu0 %v1052, 88
  %v1269 = vpop.permute.xlu0 %1268
  %1270 = vrot.lane.b32.xlu0 %v1055, 88
  %v1271 = vpop.permute.xlu0 %1270
  %v1275 = vsel %vm297, %v1252, 0
  %v1278 = vsel %vm297, %v1267, 0
  %1280 = vmatpush.msra.mxu0 0.0
  %1281 = vmatpush.msra.mxu0 0.0
  %1282 = vmatpush.msra.mxu0 0.0
  %1283 = vmatpush.msra.mxu0 0.0
  %1284 = vmatpush.msra.mxu0 0.0
  %1285 = vmatpush.msra.mxu0 0.0
  %1286 = vmatpush.msra.mxu0 0.0
  %1287 = vmatpush.msra.mxu0 0.0
  %1288 = vmatpush.msra.mxu0 0.0
  %1289 = vmatpush.msra.mxu0 0.0
  %1290 = vmatpush.msra.mxu0 0.0
  %1291 = vmatpush.msra.mxu0 0.0
  %1292 = vmatpush.msra.mxu0 0.0
  %1293 = vmatpush.msra.mxu0 0.0
  %1294 = vmatpush.msra.mxu0 %v1271
  %1295 = vmatpush.msra.mxu0 %v1269
  %1296 = vmatmul.f32.gmra.mxu0 %v1275
  %v1297 = vpop.f32.mrf.mxu0
  %v1298 = vadd.f32 0.0, %v1297
  %1299 = vmatmul.f32.gmra.mxu0 %v1278
  %v1300 = vpop.f32.mrf.mxu0
  %v1301 = vadd.f32 0.0, %v1300
  %1302 = vdwg.mxu0
  %1303 = vrot.lane.b32.xlu0 %v1057, 112
  %v1304 = vpop.permute.xlu0 %1303
  %1305 = vrot.lane.b32.xlu0 %v1058, 112
  %v1306 = vpop.permute.xlu0 %1305
  %1307 = vrot.lane.b32.xlu0 %v1052, 112
  %v1308 = vpop.permute.xlu0 %1307
  %1309 = vrot.lane.b32.xlu0 %v1055, 112
  %v1310 = vpop.permute.xlu0 %1309
  %v1311 = vsel %vm21, %v1304, 0
  %v1313 = vsel %vm21, %v1306, 0
  %v1315 = vsel %vm21, %v1308, 0
  %v1317 = vsel %vm21, %v1310, 0
  %1319 = vmatpush.xpose.msra.mxu0 0.0
  %1320 = vmatpush.xpose.msra.mxu0 0.0
  %1321 = vmatpush.xpose.msra.mxu0 0.0
  %1322 = vmatpush.xpose.msra.mxu0 0.0
  %1323 = vmatpush.xpose.msra.mxu0 0.0
  %1324 = vmatpush.xpose.msra.mxu0 0.0
  %1325 = vmatpush.xpose.msra.mxu0 0.0
  %1326 = vmatpush.xpose.msra.mxu0 0.0
  %1327 = vmatpush.xpose.msra.mxu0 0.0
  %1328 = vmatpush.xpose.msra.mxu0 0.0
  %1329 = vmatpush.xpose.msra.mxu0 0.0
  %1330 = vmatpush.xpose.msra.mxu0 0.0
  %1331 = vmatpush.xpose.msra.mxu0 0.0
  %1332 = vmatpush.xpose.msra.mxu0 0.0
  %1333 = vmatpush.xpose.msra.mxu0 %v1317
  %1334 = vmatpush.xpose.msra.mxu0 %v1315
  %1335 = vmatmul.f32.gmra.mxu0 %v1311
  %v1336 = vpop.f32.mrf.mxu0
  %v1337 = vadd.f32 0.0, %v1336
  %1338 = vmatmul.f32.gmra.mxu0 %v1313
  %v1339 = vpop.f32.mrf.mxu0
  %v1340 = vadd.f32 0.0, %v1339
  %1341 = vdwg.mxu0
  %v1342 = vsel %vm30, %v1337, -1e+30
  %v1343 = vsel %vm31, %v1340, -1e+30
  %v1344 = vsel %vm297, %v1342, -inf
  %1345 = vmax.xlane.f32.xlu0 %v1344
  %v1346 = vpop.xlane.xlu0 %1345
  %v1347 = vsel %vm297, %v1343, -inf
  %1348 = vmax.xlane.f32.xlu0 %v1347
  %v1349 = vpop.xlane.xlu0 %1348
  %v1350 = vsub.f32 %v1342, %v1346
  %v1351 = vsub.f32 %v1343, %v1349
  %v1352 = vmul.f32 %v1350, 1.442695
  %v1353 = vpow.pop %v1352
  %v1354 = vmul.f32 %v1351, 1.442695
  %v1355 = vpow.pop %v1354
  %v1356 = vsel %vm297, %v1353, 0.0
  %1357 = vadd.xlane.f32.xlu0 %v1356
  %v1358 = vpop.xlane.xlu0 %1357
  %v1359 = vsel %vm297, %v1355, 0.0
  %1360 = vadd.xlane.f32.xlu0 %v1359
  %v1361 = vpop.xlane.xlu0 %1360
  %v1362 = vrcp.pop %v1358
  %v1363 = vmul.f32 %v1358, %v1362
  %v1364 = vsub.f32 1.0, %v1363
  %v1365 = vmul.f32 %v1362, %v1364
  %v1366 = vadd.f32 %v1362, %v1365
  %vm1367 = vweird.f32 %v1358
  %vm1368 = vweird.f32 %v1362
  %vm1369 = vmor %vm1367, %vm1368
  %v1370 = vsel %vm1369, %v1362, %v1366
  %v1371 = vand.u32 2147483647, %v1358
  %vm1372 = vcmp.eq.f32.partialorder %v1371, 8.507059e+37
  %v1373 = vand.u32 %v1358, 2147483648
  %v1374 = vor.u32 1.1754944e-38, %v1373
  %v1375 = vsel %vm1372, %v1374, %v1370
  %v1376 = vmul.f32 %v1353, %v1375
  %v1377 = vrcp.pop %v1361
  %v1378 = vmul.f32 %v1361, %v1377
  %v1379 = vsub.f32 1.0, %v1378
  %v1380 = vmul.f32 %v1377, %v1379
  %v1381 = vadd.f32 %v1377, %v1380
  %vm1382 = vweird.f32 %v1361
  %vm1383 = vweird.f32 %v1377
  %vm1384 = vmor %vm1382, %vm1383
  %v1385 = vsel %vm1384, %v1377, %v1381
  %v1386 = vand.u32 2147483647, %v1361
  %vm1387 = vcmp.eq.f32.partialorder %v1386, 8.507059e+37
  %v1388 = vand.u32 %v1361, 2147483648
  %v1389 = vor.u32 1.1754944e-38, %v1388
  %v1390 = vsel %vm1387, %v1389, %v1385
  %v1391 = vmul.f32 %v1355, %v1390
  %1392 = vrot.lane.b32.xlu0 %v1052, 80
  %v1393 = vpop.permute.xlu0 %1392
  %1394 = vrot.lane.b32.xlu0 %v1055, 80
  %v1395 = vpop.permute.xlu0 %1394
  %v1399 = vsel %vm297, %v1376, 0
  %v1402 = vsel %vm297, %v1391, 0
  %1404 = vmatpush.msra.mxu0 0.0
  %1405 = vmatpush.msra.mxu0 0.0
  %1406 = vmatpush.msra.mxu0 0.0
  %1407 = vmatpush.msra.mxu0 0.0
  %1408 = vmatpush.msra.mxu0 0.0
  %1409 = vmatpush.msra.mxu0 0.0
  %1410 = vmatpush.msra.mxu0 0.0
  %1411 = vmatpush.msra.mxu0 0.0
  %1412 = vmatpush.msra.mxu0 0.0
  %1413 = vmatpush.msra.mxu0 0.0
  %1414 = vmatpush.msra.mxu0 0.0
  %1415 = vmatpush.msra.mxu0 0.0
  %1416 = vmatpush.msra.mxu0 0.0
  %1417 = vmatpush.msra.mxu0 0.0
  %1418 = vmatpush.msra.mxu0 %v1395
  %1419 = vmatpush.msra.mxu0 %v1393
  %1420 = vmatmul.f32.gmra.mxu0 %v1399
  %v1421 = vpop.f32.mrf.mxu0
  %v1422 = vadd.f32 0.0, %v1421
  %1423 = vmatmul.f32.gmra.mxu0 %v1402
  %v1424 = vpop.f32.mrf.mxu0
  %v1425 = vadd.f32 0.0, %v1424
  %1426 = vdwg.mxu0
  %1427 = vrot.lane.b32.xlu0 %v1057, 104
  %v1428 = vpop.permute.xlu0 %1427
  %1429 = vrot.lane.b32.xlu0 %v1058, 104
  %v1430 = vpop.permute.xlu0 %1429
  %1431 = vrot.lane.b32.xlu0 %v1052, 104
  %v1432 = vpop.permute.xlu0 %1431
  %1433 = vrot.lane.b32.xlu0 %v1055, 104
  %v1434 = vpop.permute.xlu0 %1433
  %v1435 = vsel %vm21, %v1428, 0
  %v1437 = vsel %vm21, %v1430, 0
  %v1439 = vsel %vm21, %v1432, 0
  %v1441 = vsel %vm21, %v1434, 0
  %1443 = vmatpush.xpose.msra.mxu0 0.0
  %1444 = vmatpush.xpose.msra.mxu0 0.0
  %1445 = vmatpush.xpose.msra.mxu0 0.0
  %1446 = vmatpush.xpose.msra.mxu0 0.0
  %1447 = vmatpush.xpose.msra.mxu0 0.0
  %1448 = vmatpush.xpose.msra.mxu0 0.0
  %1449 = vmatpush.xpose.msra.mxu0 0.0
  %1450 = vmatpush.xpose.msra.mxu0 0.0
  %1451 = vmatpush.xpose.msra.mxu0 0.0
  %1452 = vmatpush.xpose.msra.mxu0 0.0
  %1453 = vmatpush.xpose.msra.mxu0 0.0
  %1454 = vmatpush.xpose.msra.mxu0 0.0
  %1455 = vmatpush.xpose.msra.mxu0 0.0
  %1456 = vmatpush.xpose.msra.mxu0 0.0
  %1457 = vmatpush.xpose.msra.mxu0 %v1441
  %1458 = vmatpush.xpose.msra.mxu0 %v1439
  %1459 = vmatmul.f32.gmra.mxu0 %v1435
  %v1460 = vpop.f32.mrf.mxu0
  %v1461 = vadd.f32 0.0, %v1460
  %1462 = vmatmul.f32.gmra.mxu0 %v1437
  %v1463 = vpop.f32.mrf.mxu0
  %v1464 = vadd.f32 0.0, %v1463
  %1465 = vdwg.mxu0
  %v1466 = vsel %vm30, %v1461, -1e+30
  %v1467 = vsel %vm31, %v1464, -1e+30
  %v1468 = vsel %vm297, %v1466, -inf
  %1469 = vmax.xlane.f32.xlu0 %v1468
  %v1470 = vpop.xlane.xlu0 %1469
  %v1471 = vsel %vm297, %v1467, -inf
  %1472 = vmax.xlane.f32.xlu0 %v1471
  %v1473 = vpop.xlane.xlu0 %1472
  %v1474 = vsub.f32 %v1466, %v1470
  %v1475 = vsub.f32 %v1467, %v1473
  %v1476 = vmul.f32 %v1474, 1.442695
  %v1477 = vpow.pop %v1476
  %v1478 = vmul.f32 %v1475, 1.442695
  %v1479 = vpow.pop %v1478
  %v1480 = vsel %vm297, %v1477, 0.0
  %1481 = vadd.xlane.f32.xlu0 %v1480
  %v1482 = vpop.xlane.xlu0 %1481
  %v1483 = vsel %vm297, %v1479, 0.0
  %1484 = vadd.xlane.f32.xlu0 %v1483
  %v1485 = vpop.xlane.xlu0 %1484
  %v1486 = vrcp.pop %v1482
  %v1487 = vmul.f32 %v1482, %v1486
  %v1488 = vsub.f32 1.0, %v1487
  %v1489 = vmul.f32 %v1486, %v1488
  %v1490 = vadd.f32 %v1486, %v1489
  %vm1491 = vweird.f32 %v1482
  %vm1492 = vweird.f32 %v1486
  %vm1493 = vmor %vm1491, %vm1492
  %v1494 = vsel %vm1493, %v1486, %v1490
  %v1495 = vand.u32 2147483647, %v1482
  %vm1496 = vcmp.eq.f32.partialorder %v1495, 8.507059e+37
  %v1497 = vand.u32 %v1482, 2147483648
  %v1498 = vor.u32 1.1754944e-38, %v1497
  %v1499 = vsel %vm1496, %v1498, %v1494
  %v1500 = vmul.f32 %v1477, %v1499
  %v1501 = vrcp.pop %v1485
  %v1502 = vmul.f32 %v1485, %v1501
  %v1503 = vsub.f32 1.0, %v1502
  %v1504 = vmul.f32 %v1501, %v1503
  %v1505 = vadd.f32 %v1501, %v1504
  %vm1506 = vweird.f32 %v1485
  %vm1507 = vweird.f32 %v1501
  %vm1508 = vmor %vm1506, %vm1507
  %v1509 = vsel %vm1508, %v1501, %v1505
  %v1510 = vand.u32 2147483647, %v1485
  %vm1511 = vcmp.eq.f32.partialorder %v1510, 8.507059e+37
  %v1512 = vand.u32 %v1485, 2147483648
  %v1513 = vor.u32 1.1754944e-38, %v1512
  %v1514 = vsel %vm1511, %v1513, %v1509
  %v1515 = vmul.f32 %v1479, %v1514
  %1516 = vrot.lane.b32.xlu0 %v1052, 72
  %v1517 = vpop.permute.xlu0 %1516
  %1518 = vrot.lane.b32.xlu0 %v1055, 72
  %v1519 = vpop.permute.xlu0 %1518
  %v1523 = vsel %vm297, %v1500, 0
  %v1526 = vsel %vm297, %v1515, 0
  %1528 = vmatpush.msra.mxu0 0.0
  %1529 = vmatpush.msra.mxu0 0.0
  %1530 = vmatpush.msra.mxu0 0.0
  %1531 = vmatpush.msra.mxu0 0.0
  %1532 = vmatpush.msra.mxu0 0.0
  %1533 = vmatpush.msra.mxu0 0.0
  %1534 = vmatpush.msra.mxu0 0.0
  %1535 = vmatpush.msra.mxu0 0.0
  %1536 = vmatpush.msra.mxu0 0.0
  %1537 = vmatpush.msra.mxu0 0.0
  %1538 = vmatpush.msra.mxu0 0.0
  %1539 = vmatpush.msra.mxu0 0.0
  %1540 = vmatpush.msra.mxu0 0.0
  %1541 = vmatpush.msra.mxu0 0.0
  %1542 = vmatpush.msra.mxu0 %v1519
  %1543 = vmatpush.msra.mxu0 %v1517
  %1544 = vmatmul.f32.gmra.mxu0 %v1523
  %v1545 = vpop.f32.mrf.mxu0
  %v1546 = vadd.f32 0.0, %v1545
  %1547 = vmatmul.f32.gmra.mxu0 %v1526
  %v1548 = vpop.f32.mrf.mxu0
  %v1549 = vadd.f32 0.0, %v1548
  %1550 = vdwg.mxu0
  %1553 = vrot.lane.b32.xlu0 %v1298, 8
  %v1554 = vpop.permute.xlu0 %1553
  %1555 = vrot.lane.b32.xlu0 %v1301, 8
  %v1556 = vpop.permute.xlu0 %1555
  %1561 = vrot.lane.b32.xlu0 %v1422, 16
  %v1562 = vpop.permute.xlu0 %1561
  %1563 = vrot.lane.b32.xlu0 %v1425, 16
  %v1564 = vpop.permute.xlu0 %1563
  %1569 = vrot.lane.b32.xlu0 %v1546, 24
  %v1570 = vpop.permute.xlu0 %1569
  %1571 = vrot.lane.b32.xlu0 %v1549, 24
  %v1572 = vpop.permute.xlu0 %1571
  %v1575 = vsel %vm21, %v1174, %v1554
  %v1576 = vsel %vm21, %v1177, %v1556
  %v1577 = vsel %vm297, %v1575, %v1562
  %v1578 = vsel %vm297, %v1576, %v1564
  %v1579 = vsel %vm781, %v1577, %v1570
  %v1580 = vsel %vm781, %v1578, %v1572
  %v1581 = vperm.slane %v977, 0
  %1582 = vrot.lane.b32.xlu0 %v972, 32
  %v1583 = vpop.permute.xlu0 %1582
  %1584 = vrot.lane.b32.xlu0 %v973, 32
  %v1585 = vpop.permute.xlu0 %1584
  %1586 = vrot.lane.b32.xlu0 %v974, 32
  %v1587 = vpop.permute.xlu0 %1586
  %1588 = vrot.lane.b32.xlu0 %v975, 32
  %v1589 = vpop.permute.xlu0 %1588
  %v1595 = vsel %vm71, %v1579, 0
  %v1598 = vsel %vm71, %v1580, 0
  %1600 = vmatpush.msra.mxu0 0.0
  %1601 = vmatpush.msra.mxu0 0.0
  %1602 = vmatpush.msra.mxu0 0.0
  %1603 = vmatpush.msra.mxu0 0.0
  %1604 = vmatpush.msra.mxu0 0.0
  %1605 = vmatpush.msra.mxu0 0.0
  %1606 = vmatpush.msra.mxu0 0.0
  %1607 = vmatpush.msra.mxu0 0.0
  %1608 = vmatpush.msra.mxu0 0.0
  %1609 = vmatpush.msra.mxu0 0.0
  %1610 = vmatpush.msra.mxu0 0.0
  %1611 = vmatpush.msra.mxu0 0.0
  %1612 = vmatpush.msra.mxu0 %v1589
  %1613 = vmatpush.msra.mxu0 %v1587
  %1614 = vmatpush.msra.mxu0 %v1585
  %1615 = vmatpush.msra.mxu0 %v1583
  %1616 = vmatmul.f32.gmra.mxu0 %v1595
  %v1617 = vpop.f32.mrf.mxu0
  %v1618 = vadd.f32 %v1581, %v1617
  %1619 = vmatmul.f32.gmra.mxu0 %v1598
  %v1620 = vpop.f32.mrf.mxu0
  %v1621 = vadd.f32 %v1581, %v1620
  %1622 = vdwg.mxu0
  %v1623 = vadd.f32 %v1618, %v969
  %v1624 = vadd.f32 %v1621, %v970
  %v1625 = vld [vmem:[%s3 + $0xe] sm:$0x1]
  %v1626 = vld [vmem:[%s3 + $0xf] sm:$0x1]
  %v1627 = vsel %vm71, %v1623, 0.0
  %1628 = vadd.xlane.f32.xlu0 %v1627
  %v1629 = vpop.xlane.xlu0 %1628
  %v1630 = vsel %vm71, %v1624, 0.0
  %1631 = vadd.xlane.f32.xlu0 %v1630
  %v1632 = vpop.xlane.xlu0 %1631
  %v1633 = vmul.f32 %v1629, %v136
  %v1634 = vmul.f32 %v1632, %v136
  %v1635 = vsub.f32 %v1623, %v1633
  %v1636 = vsub.f32 %v1624, %v1634
  %v1637 = vmul.f32 %v1635, %v1635
  %v1638 = vmul.f32 %v1636, %v1636
  %v1639 = vsel %vm71, %v1637, 0.0
  %1640 = vadd.xlane.f32.xlu0 %v1639
  %v1641 = vpop.xlane.xlu0 %1640
  %v1642 = vsel %vm71, %v1638, 0.0
  %1643 = vadd.xlane.f32.xlu0 %v1642
  %v1644 = vpop.xlane.xlu0 %1643
  %v1645 = vmul.f32 %v1641, %v136
  %v1646 = vmul.f32 %v1644, %v136
  %v1647 = vadd.f32 %v1645, 1e-05
  %v1648 = vadd.f32 %v1646, 1e-05
  %v1649 = vrsqrt.pop %v1647
  %v1650 = vmul.f32 %v1649, %v1647
  %v1651 = vmul.f32 %v1650, %v1649
  %v1652 = vmul.f32 0.5, %v1651
  %v1653 = vsub.f32 1.5, %v1652
  %v1654 = vmul.f32 %v1649, %v1653
  %vm1655 = vweird.f32 %v1647
  %vm1656 = vweird.f32 %v1649
  %vm1657 = vmor %vm1655, %vm1656
  %v1658 = vsel %vm1657, %v1649, %v1654
  %v1659 = vrsqrt.pop %v1648
  %v1660 = vmul.f32 %v1659, %v1648
  %v1661 = vmul.f32 %v1660, %v1659
  %v1662 = vmul.f32 0.5, %v1661
  %v1663 = vsub.f32 1.5, %v1662
  %v1664 = vmul.f32 %v1659, %v1663
  %vm1665 = vweird.f32 %v1648
  %vm1666 = vweird.f32 %v1659
  %vm1667 = vmor %vm1665, %vm1666
  %v1668 = vsel %vm1667, %v1659, %v1664
  %v1669 = vmul.f32 %v1635, %v1658
  %v1670 = vmul.f32 %v1636, %v1668
  %v1671 = vperm.slane %v1625, 0
  %v1672 = vmul.f32 %v1669, %v1671
  %v1673 = vmul.f32 %v1670, %v1671
  %v1674 = vperm.slane %v1626, 0
  %v1675 = vadd.f32 %v1672, %v1674
  %v1676 = vadd.f32 %v1673, %v1674
  %s1677 = scalar_lea.vmem %s1, 64
  %v1678 = vld [vmem:[%s1677] sm:$0xff]
  %v1679 = vld [vmem:[%s1677 + $0x8] sm:$0xff]
  %v1680 = vld [vmem:[%s1677 + $0x10] sm:$0xff]
  %v1681 = vld [vmem:[%s1677 + $0x18] sm:$0xff]
  %v1682 = vld [vmem:[%s3 + $0x7] sm:$0x1]
  %v1683 = vld [vmem:[%s3 + $0x8] sm:$0x1]
  %v1684 = vperm.slane %v1682, 0
  %1685 = vmatpush.msra.mxu0 0.0
  %1686 = vmatpush.msra.mxu0 0.0
  %1687 = vmatpush.msra.mxu0 0.0
  %1688 = vmatpush.msra.mxu0 0.0
  %1689 = vmatpush.msra.mxu0 0.0
  %1690 = vmatpush.msra.mxu0 0.0
  %1691 = vmatpush.msra.mxu0 0.0
  %1692 = vmatpush.msra.mxu0 0.0
  %1693 = vmatpush.msra.mxu0 0.0
  %1694 = vmatpush.msra.mxu0 0.0
  %1695 = vmatpush.msra.mxu0 0.0
  %1696 = vmatpush.msra.mxu0 0.0
  %1697 = vmatpush.msra.mxu0 %v1681
  %1698 = vmatpush.msra.mxu0 %v1680
  %1699 = vmatpush.msra.mxu0 %v1679
  %1700 = vmatpush.msra.mxu0 %v1678
  %1701 = vmatmul.f32.gmra.mxu0 %v1029
  %v1702 = vpop.f32.mrf.mxu0
  %v1703 = vadd.f32 %v1684, %v1702
  %1704 = vmatmul.f32.gmra.mxu0 %v1032
  %v1705 = vpop.f32.mrf.mxu0
  %v1706 = vadd.f32 %v1684, %v1705
  %1707 = vdwg.mxu0
  %1712 = vrot.lane.b32.xlu0 %v1678, 96
  %v1713 = vpop.permute.xlu0 %1712
  %1714 = vrot.lane.b32.xlu0 %v1679, 96
  %v1715 = vpop.permute.xlu0 %1714
  %1716 = vrot.lane.b32.xlu0 %v1680, 96
  %v1717 = vpop.permute.xlu0 %1716
  %1718 = vrot.lane.b32.xlu0 %v1681, 96
  %v1719 = vpop.permute.xlu0 %1718
  %1725 = vrot.lane.b32.xlu0 %v1684, 96
  %v1726 = vpop.permute.xlu0 %1725
  %1728 = vmatpush.msra.mxu0 0.0
  %1729 = vmatpush.msra.mxu0 0.0
  %1730 = vmatpush.msra.mxu0 0.0
  %1731 = vmatpush.msra.mxu0 0.0
  %1732 = vmatpush.msra.mxu0 0.0
  %1733 = vmatpush.msra.mxu0 0.0
  %1734 = vmatpush.msra.mxu0 0.0
  %1735 = vmatpush.msra.mxu0 0.0
  %1736 = vmatpush.msra.mxu0 0.0
  %1737 = vmatpush.msra.mxu0 0.0
  %1738 = vmatpush.msra.mxu0 0.0
  %1739 = vmatpush.msra.mxu0 0.0
  %1740 = vmatpush.msra.mxu0 %v1719
  %1741 = vmatpush.msra.mxu0 %v1717
  %1742 = vmatpush.msra.mxu0 %v1715
  %1743 = vmatpush.msra.mxu0 %v1713
  %1744 = vmatmul.f32.gmra.mxu0 %v980
  %v1745 = vpop.f32.mrf.mxu0
  %v1746 = vadd.f32 %v1726, %v1745
  %1747 = vmatmul.f32.gmra.mxu0 %v983
  %v1748 = vpop.f32.mrf.mxu0
  %v1749 = vadd.f32 %v1726, %v1748
  %1750 = vdwg.mxu0
  %v1751 = vmul.f32 %v1703, 0.35355338
  %v1752 = vmul.f32 %v1706, 0.35355338
  %v1754 = vsel %vm21, %v1751, 0
  %v1757 = vsel %vm21, %v1752, 0
  %v1760 = vsel %vm21, %v1746, 0
  %v1763 = vsel %vm21, %v1749, 0
  %1765 = vmatpush.xpose.msra.mxu0 0.0
  %1766 = vmatpush.xpose.msra.mxu0 0.0
  %1767 = vmatpush.xpose.msra.mxu0 0.0
  %1768 = vmatpush.xpose.msra.mxu0 0.0
  %1769 = vmatpush.xpose.msra.mxu0 0.0
  %1770 = vmatpush.xpose.msra.mxu0 0.0
  %1771 = vmatpush.xpose.msra.mxu0 0.0
  %1772 = vmatpush.xpose.msra.mxu0 0.0
  %1773 = vmatpush.xpose.msra.mxu0 0.0
  %1774 = vmatpush.xpose.msra.mxu0 0.0
  %1775 = vmatpush.xpose.msra.mxu0 0.0
  %1776 = vmatpush.xpose.msra.mxu0 0.0
  %1777 = vmatpush.xpose.msra.mxu0 0.0
  %1778 = vmatpush.xpose.msra.mxu0 0.0
  %1779 = vmatpush.xpose.msra.mxu0 %v1763
  %1780 = vmatpush.xpose.msra.mxu0 %v1760
  %1781 = vmatmul.f32.gmra.mxu0 %v1754
  %v1782 = vpop.f32.mrf.mxu0
  %v1783 = vadd.f32 0.0, %v1782
  %1784 = vmatmul.f32.gmra.mxu0 %v1757
  %v1785 = vpop.f32.mrf.mxu0
  %v1786 = vadd.f32 0.0, %v1785
  %1787 = vdwg.mxu0
  %v1788 = vsel %vm30, %v1783, -1e+30
  %v1789 = vsel %vm31, %v1786, -1e+30
  %v1790 = vsel %vm297, %v1788, -inf
  %1791 = vmax.xlane.f32.xlu0 %v1790
  %v1792 = vpop.xlane.xlu0 %1791
  %v1793 = vsel %vm297, %v1789, -inf
  %1794 = vmax.xlane.f32.xlu0 %v1793
  %v1795 = vpop.xlane.xlu0 %1794
  %v1796 = vsub.f32 %v1788, %v1792
  %v1797 = vsub.f32 %v1789, %v1795
  %v1798 = vmul.f32 %v1796, 1.442695
  %v1799 = vpow.pop %v1798
  %v1800 = vmul.f32 %v1797, 1.442695
  %v1801 = vpow.pop %v1800
  %v1802 = vsel %vm297, %v1799, 0.0
  %1803 = vadd.xlane.f32.xlu0 %v1802
  %v1804 = vpop.xlane.xlu0 %1803
  %v1805 = vsel %vm297, %v1801, 0.0
  %1806 = vadd.xlane.f32.xlu0 %v1805
  %v1807 = vpop.xlane.xlu0 %1806
  %v1808 = vrcp.pop %v1804
  %v1809 = vmul.f32 %v1804, %v1808
  %v1810 = vsub.f32 1.0, %v1809
  %v1811 = vmul.f32 %v1808, %v1810
  %v1812 = vadd.f32 %v1808, %v1811
  %vm1813 = vweird.f32 %v1804
  %vm1814 = vweird.f32 %v1808
  %vm1815 = vmor %vm1813, %vm1814
  %v1816 = vsel %vm1815, %v1808, %v1812
  %v1817 = vand.u32 2147483647, %v1804
  %vm1818 = vcmp.eq.f32.partialorder %v1817, 8.507059e+37
  %v1819 = vand.u32 %v1804, 2147483648
  %v1820 = vor.u32 1.1754944e-38, %v1819
  %v1821 = vsel %vm1818, %v1820, %v1816
  %v1822 = vmul.f32 %v1799, %v1821
  %v1823 = vrcp.pop %v1807
  %v1824 = vmul.f32 %v1807, %v1823
  %v1825 = vsub.f32 1.0, %v1824
  %v1826 = vmul.f32 %v1823, %v1825
  %v1827 = vadd.f32 %v1823, %v1826
  %vm1828 = vweird.f32 %v1807
  %vm1829 = vweird.f32 %v1823
  %vm1830 = vmor %vm1828, %vm1829
  %v1831 = vsel %vm1830, %v1823, %v1827
  %v1832 = vand.u32 2147483647, %v1807
  %vm1833 = vcmp.eq.f32.partialorder %v1832, 8.507059e+37
  %v1834 = vand.u32 %v1807, 2147483648
  %v1835 = vor.u32 1.1754944e-38, %v1834
  %v1836 = vsel %vm1833, %v1835, %v1831
  %v1837 = vmul.f32 %v1801, %v1836
  %1838 = vrot.lane.b32.xlu0 %v1746, 96
  %v1839 = vpop.permute.xlu0 %1838
  %1840 = vrot.lane.b32.xlu0 %v1749, 96
  %v1841 = vpop.permute.xlu0 %1840
  %v1845 = vsel %vm297, %v1822, 0
  %v1848 = vsel %vm297, %v1837, 0
  %1850 = vmatpush.msra.mxu0 0.0
  %1851 = vmatpush.msra.mxu0 0.0
  %1852 = vmatpush.msra.mxu0 0.0
  %1853 = vmatpush.msra.mxu0 0.0
  %1854 = vmatpush.msra.mxu0 0.0
  %1855 = vmatpush.msra.mxu0 0.0
  %1856 = vmatpush.msra.mxu0 0.0
  %1857 = vmatpush.msra.mxu0 0.0
  %1858 = vmatpush.msra.mxu0 0.0
  %1859 = vmatpush.msra.mxu0 0.0
  %1860 = vmatpush.msra.mxu0 0.0
  %1861 = vmatpush.msra.mxu0 0.0
  %1862 = vmatpush.msra.mxu0 0.0
  %1863 = vmatpush.msra.mxu0 0.0
  %1864 = vmatpush.msra.mxu0 %v1841
  %1865 = vmatpush.msra.mxu0 %v1839
  %1866 = vmatmul.f32.gmra.mxu0 %v1845
  %v1867 = vpop.f32.mrf.mxu0
  %v1868 = vadd.f32 0.0, %v1867
  %1869 = vmatmul.f32.gmra.mxu0 %v1848
  %v1870 = vpop.f32.mrf.mxu0
  %v1871 = vadd.f32 0.0, %v1870
  %1872 = vdwg.mxu0
  %1873 = vrot.lane.b32.xlu0 %v1751, 120
  %v1874 = vpop.permute.xlu0 %1873
  %1875 = vrot.lane.b32.xlu0 %v1752, 120
  %v1876 = vpop.permute.xlu0 %1875
  %1877 = vrot.lane.b32.xlu0 %v1746, 120
  %v1878 = vpop.permute.xlu0 %1877
  %1879 = vrot.lane.b32.xlu0 %v1749, 120
  %v1880 = vpop.permute.xlu0 %1879
  %v1881 = vsel %vm21, %v1874, 0
  %v1883 = vsel %vm21, %v1876, 0
  %v1885 = vsel %vm21, %v1878, 0
  %v1887 = vsel %vm21, %v1880, 0
  %1889 = vmatpush.xpose.msra.mxu0 0.0
  %1890 = vmatpush.xpose.msra.mxu0 0.0
  %1891 = vmatpush.xpose.msra.mxu0 0.0
  %1892 = vmatpush.xpose.msra.mxu0 0.0
  %1893 = vmatpush.xpose.msra.mxu0 0.0
  %1894 = vmatpush.xpose.msra.mxu0 0.0
  %1895 = vmatpush.xpose.msra.mxu0 0.0
  %1896 = vmatpush.xpose.msra.mxu0 0.0
  %1897 = vmatpush.xpose.msra.mxu0 0.0
  %1898 = vmatpush.xpose.msra.mxu0 0.0
  %1899 = vmatpush.xpose.msra.mxu0 0.0
  %1900 = vmatpush.xpose.msra.mxu0 0.0
  %1901 = vmatpush.xpose.msra.mxu0 0.0
  %1902 = vmatpush.xpose.msra.mxu0 0.0
  %1903 = vmatpush.xpose.msra.mxu0 %v1887
  %1904 = vmatpush.xpose.msra.mxu0 %v1885
  %1905 = vmatmul.f32.gmra.mxu0 %v1881
  %v1906 = vpop.f32.mrf.mxu0
  %v1907 = vadd.f32 0.0, %v1906
  %1908 = vmatmul.f32.gmra.mxu0 %v1883
  %v1909 = vpop.f32.mrf.mxu0
  %v1910 = vadd.f32 0.0, %v1909
  %1911 = vdwg.mxu0
  %v1912 = vsel %vm30, %v1907, -1e+30
  %v1913 = vsel %vm31, %v1910, -1e+30
  %v1914 = vsel %vm297, %v1912, -inf
  %1915 = vmax.xlane.f32.xlu0 %v1914
  %v1916 = vpop.xlane.xlu0 %1915
  %v1917 = vsel %vm297, %v1913, -inf
  %1918 = vmax.xlane.f32.xlu0 %v1917
  %v1919 = vpop.xlane.xlu0 %1918
  %v1920 = vsub.f32 %v1912, %v1916
  %v1921 = vsub.f32 %v1913, %v1919
  %v1922 = vmul.f32 %v1920, 1.442695
  %v1923 = vpow.pop %v1922
  %v1924 = vmul.f32 %v1921, 1.442695
  %v1925 = vpow.pop %v1924
  %v1926 = vsel %vm297, %v1923, 0.0
  %1927 = vadd.xlane.f32.xlu0 %v1926
  %v1928 = vpop.xlane.xlu0 %1927
  %v1929 = vsel %vm297, %v1925, 0.0
  %1930 = vadd.xlane.f32.xlu0 %v1929
  %v1931 = vpop.xlane.xlu0 %1930
  %v1932 = vrcp.pop %v1928
  %v1933 = vmul.f32 %v1928, %v1932
  %v1934 = vsub.f32 1.0, %v1933
  %v1935 = vmul.f32 %v1932, %v1934
  %v1936 = vadd.f32 %v1932, %v1935
  %vm1937 = vweird.f32 %v1928
  %vm1938 = vweird.f32 %v1932
  %vm1939 = vmor %vm1937, %vm1938
  %v1940 = vsel %vm1939, %v1932, %v1936
  %v1941 = vand.u32 2147483647, %v1928
  %vm1942 = vcmp.eq.f32.partialorder %v1941, 8.507059e+37
  %v1943 = vand.u32 %v1928, 2147483648
  %v1944 = vor.u32 1.1754944e-38, %v1943
  %v1945 = vsel %vm1942, %v1944, %v1940
  %v1946 = vmul.f32 %v1923, %v1945
  %v1947 = vrcp.pop %v1931
  %v1948 = vmul.f32 %v1931, %v1947
  %v1949 = vsub.f32 1.0, %v1948
  %v1950 = vmul.f32 %v1947, %v1949
  %v1951 = vadd.f32 %v1947, %v1950
  %vm1952 = vweird.f32 %v1931
  %vm1953 = vweird.f32 %v1947
  %vm1954 = vmor %vm1952, %vm1953
  %v1955 = vsel %vm1954, %v1947, %v1951
  %v1956 = vand.u32 2147483647, %v1931
  %vm1957 = vcmp.eq.f32.partialorder %v1956, 8.507059e+37
  %v1958 = vand.u32 %v1931, 2147483648
  %v1959 = vor.u32 1.1754944e-38, %v1958
  %v1960 = vsel %vm1957, %v1959, %v1955
  %v1961 = vmul.f32 %v1925, %v1960
  %1962 = vrot.lane.b32.xlu0 %v1746, 88
  %v1963 = vpop.permute.xlu0 %1962
  %1964 = vrot.lane.b32.xlu0 %v1749, 88
  %v1965 = vpop.permute.xlu0 %1964
  %v1969 = vsel %vm297, %v1946, 0
  %v1972 = vsel %vm297, %v1961, 0
  %1974 = vmatpush.msra.mxu0 0.0
  %1975 = vmatpush.msra.mxu0 0.0
  %1976 = vmatpush.msra.mxu0 0.0
  %1977 = vmatpush.msra.mxu0 0.0
  %1978 = vmatpush.msra.mxu0 0.0
  %1979 = vmatpush.msra.mxu0 0.0
  %1980 = vmatpush.msra.mxu0 0.0
  %1981 = vmatpush.msra.mxu0 0.0
  %1982 = vmatpush.msra.mxu0 0.0
  %1983 = vmatpush.msra.mxu0 0.0
  %1984 = vmatpush.msra.mxu0 0.0
  %1985 = vmatpush.msra.mxu0 0.0
  %1986 = vmatpush.msra.mxu0 0.0
  %1987 = vmatpush.msra.mxu0 0.0
  %1988 = vmatpush.msra.mxu0 %v1965
  %1989 = vmatpush.msra.mxu0 %v1963
  %1990 = vmatmul.f32.gmra.mxu0 %v1969
  %v1991 = vpop.f32.mrf.mxu0
  %v1992 = vadd.f32 0.0, %v1991
  %1993 = vmatmul.f32.gmra.mxu0 %v1972
  %v1994 = vpop.f32.mrf.mxu0
  %v1995 = vadd.f32 0.0, %v1994
  %1996 = vdwg.mxu0
  %1997 = vrot.lane.b32.xlu0 %v1751, 112
  %v1998 = vpop.permute.xlu0 %1997
  %1999 = vrot.lane.b32.xlu0 %v1752, 112
  %v2000 = vpop.permute.xlu0 %1999
  %2001 = vrot.lane.b32.xlu0 %v1746, 112
  %v2002 = vpop.permute.xlu0 %2001
  %2003 = vrot.lane.b32.xlu0 %v1749, 112
  %v2004 = vpop.permute.xlu0 %2003
  %v2005 = vsel %vm21, %v1998, 0
  %v2007 = vsel %vm21, %v2000, 0
  %v2009 = vsel %vm21, %v2002, 0
  %v2011 = vsel %vm21, %v2004, 0
  %2013 = vmatpush.xpose.msra.mxu0 0.0
  %2014 = vmatpush.xpose.msra.mxu0 0.0
  %2015 = vmatpush.xpose.msra.mxu0 0.0
  %2016 = vmatpush.xpose.msra.mxu0 0.0
  %2017 = vmatpush.xpose.msra.mxu0 0.0
  %2018 = vmatpush.xpose.msra.mxu0 0.0
  %2019 = vmatpush.xpose.msra.mxu0 0.0
  %2020 = vmatpush.xpose.msra.mxu0 0.0
  %2021 = vmatpush.xpose.msra.mxu0 0.0
  %2022 = vmatpush.xpose.msra.mxu0 0.0
  %2023 = vmatpush.xpose.msra.mxu0 0.0
  %2024 = vmatpush.xpose.msra.mxu0 0.0
  %2025 = vmatpush.xpose.msra.mxu0 0.0
  %2026 = vmatpush.xpose.msra.mxu0 0.0
  %2027 = vmatpush.xpose.msra.mxu0 %v2011
  %2028 = vmatpush.xpose.msra.mxu0 %v2009
  %2029 = vmatmul.f32.gmra.mxu0 %v2005
  %v2030 = vpop.f32.mrf.mxu0
  %v2031 = vadd.f32 0.0, %v2030
  %2032 = vmatmul.f32.gmra.mxu0 %v2007
  %v2033 = vpop.f32.mrf.mxu0
  %v2034 = vadd.f32 0.0, %v2033
  %2035 = vdwg.mxu0
  %v2036 = vsel %vm30, %v2031, -1e+30
  %v2037 = vsel %vm31, %v2034, -1e+30
  %v2038 = vsel %vm297, %v2036, -inf
  %2039 = vmax.xlane.f32.xlu0 %v2038
  %v2040 = vpop.xlane.xlu0 %2039
  %v2041 = vsel %vm297, %v2037, -inf
  %2042 = vmax.xlane.f32.xlu0 %v2041
  %v2043 = vpop.xlane.xlu0 %2042
  %v2044 = vsub.f32 %v2036, %v2040
  %v2045 = vsub.f32 %v2037, %v2043
  %v2046 = vmul.f32 %v2044, 1.442695
  %v2047 = vpow.pop %v2046
  %v2048 = vmul.f32 %v2045, 1.442695
  %v2049 = vpow.pop %v2048
  %v2050 = vsel %vm297, %v2047, 0.0
  %2051 = vadd.xlane.f32.xlu0 %v2050
  %v2052 = vpop.xlane.xlu0 %2051
  %v2053 = vsel %vm297, %v2049, 0.0
  %2054 = vadd.xlane.f32.xlu0 %v2053
  %v2055 = vpop.xlane.xlu0 %2054
  %v2056 = vrcp.pop %v2052
  %v2057 = vmul.f32 %v2052, %v2056
  %v2058 = vsub.f32 1.0, %v2057
  %v2059 = vmul.f32 %v2056, %v2058
  %v2060 = vadd.f32 %v2056, %v2059
  %vm2061 = vweird.f32 %v2052
  %vm2062 = vweird.f32 %v2056
  %vm2063 = vmor %vm2061, %vm2062
  %v2064 = vsel %vm2063, %v2056, %v2060
  %v2065 = vand.u32 2147483647, %v2052
  %vm2066 = vcmp.eq.f32.partialorder %v2065, 8.507059e+37
  %v2067 = vand.u32 %v2052, 2147483648
  %v2068 = vor.u32 1.1754944e-38, %v2067
  %v2069 = vsel %vm2066, %v2068, %v2064
  %v2070 = vmul.f32 %v2047, %v2069
  %v2071 = vrcp.pop %v2055
  %v2072 = vmul.f32 %v2055, %v2071
  %v2073 = vsub.f32 1.0, %v2072
  %v2074 = vmul.f32 %v2071, %v2073
  %v2075 = vadd.f32 %v2071, %v2074
  %vm2076 = vweird.f32 %v2055
  %vm2077 = vweird.f32 %v2071
  %vm2078 = vmor %vm2076, %vm2077
  %v2079 = vsel %vm2078, %v2071, %v2075
  %v2080 = vand.u32 2147483647, %v2055
  %vm2081 = vcmp.eq.f32.partialorder %v2080, 8.507059e+37
  %v2082 = vand.u32 %v2055, 2147483648
  %v2083 = vor.u32 1.1754944e-38, %v2082
  %v2084 = vsel %vm2081, %v2083, %v2079
  %v2085 = vmul.f32 %v2049, %v2084
  %2086 = vrot.lane.b32.xlu0 %v1746, 80
  %v2087 = vpop.permute.xlu0 %2086
  %2088 = vrot.lane.b32.xlu0 %v1749, 80
  %v2089 = vpop.permute.xlu0 %2088
  %v2093 = vsel %vm297, %v2070, 0
  %v2096 = vsel %vm297, %v2085, 0
  %2098 = vmatpush.msra.mxu0 0.0
  %2099 = vmatpush.msra.mxu0 0.0
  %2100 = vmatpush.msra.mxu0 0.0
  %2101 = vmatpush.msra.mxu0 0.0
  %2102 = vmatpush.msra.mxu0 0.0
  %2103 = vmatpush.msra.mxu0 0.0
  %2104 = vmatpush.msra.mxu0 0.0
  %2105 = vmatpush.msra.mxu0 0.0
  %2106 = vmatpush.msra.mxu0 0.0
  %2107 = vmatpush.msra.mxu0 0.0
  %2108 = vmatpush.msra.mxu0 0.0
  %2109 = vmatpush.msra.mxu0 0.0
  %2110 = vmatpush.msra.mxu0 0.0
  %2111 = vmatpush.msra.mxu0 0.0
  %2112 = vmatpush.msra.mxu0 %v2089
  %2113 = vmatpush.msra.mxu0 %v2087
  %2114 = vmatmul.f32.gmra.mxu0 %v2093
  %v2115 = vpop.f32.mrf.mxu0
  %v2116 = vadd.f32 0.0, %v2115
  %2117 = vmatmul.f32.gmra.mxu0 %v2096
  %v2118 = vpop.f32.mrf.mxu0
  %v2119 = vadd.f32 0.0, %v2118
  %2120 = vdwg.mxu0
  %2121 = vrot.lane.b32.xlu0 %v1751, 104
  %v2122 = vpop.permute.xlu0 %2121
  %2123 = vrot.lane.b32.xlu0 %v1752, 104
  %v2124 = vpop.permute.xlu0 %2123
  %2125 = vrot.lane.b32.xlu0 %v1746, 104
  %v2126 = vpop.permute.xlu0 %2125
  %2127 = vrot.lane.b32.xlu0 %v1749, 104
  %v2128 = vpop.permute.xlu0 %2127
  %v2129 = vsel %vm21, %v2122, 0
  %v2131 = vsel %vm21, %v2124, 0
  %v2133 = vsel %vm21, %v2126, 0
  %v2135 = vsel %vm21, %v2128, 0
  %2137 = vmatpush.xpose.msra.mxu0 0.0
  %2138 = vmatpush.xpose.msra.mxu0 0.0
  %2139 = vmatpush.xpose.msra.mxu0 0.0
  %2140 = vmatpush.xpose.msra.mxu0 0.0
  %2141 = vmatpush.xpose.msra.mxu0 0.0
  %2142 = vmatpush.xpose.msra.mxu0 0.0
  %2143 = vmatpush.xpose.msra.mxu0 0.0
  %2144 = vmatpush.xpose.msra.mxu0 0.0
  %2145 = vmatpush.xpose.msra.mxu0 0.0
  %2146 = vmatpush.xpose.msra.mxu0 0.0
  %2147 = vmatpush.xpose.msra.mxu0 0.0
  %2148 = vmatpush.xpose.msra.mxu0 0.0
  %2149 = vmatpush.xpose.msra.mxu0 0.0
  %2150 = vmatpush.xpose.msra.mxu0 0.0
  %2151 = vmatpush.xpose.msra.mxu0 %v2135
  %2152 = vmatpush.xpose.msra.mxu0 %v2133
  %2153 = vmatmul.f32.gmra.mxu0 %v2129
  %v2154 = vpop.f32.mrf.mxu0
  %v2155 = vadd.f32 0.0, %v2154
  %2156 = vmatmul.f32.gmra.mxu0 %v2131
  %v2157 = vpop.f32.mrf.mxu0
  %v2158 = vadd.f32 0.0, %v2157
  %2159 = vdwg.mxu0
  %v2160 = vsel %vm30, %v2155, -1e+30
  %v2161 = vsel %vm31, %v2158, -1e+30
  %v2162 = vsel %vm297, %v2160, -inf
  %2163 = vmax.xlane.f32.xlu0 %v2162
  %v2164 = vpop.xlane.xlu0 %2163
  %v2165 = vsel %vm297, %v2161, -inf
  %2166 = vmax.xlane.f32.xlu0 %v2165
  %v2167 = vpop.xlane.xlu0 %2166
  %v2168 = vsub.f32 %v2160, %v2164
  %v2169 = vsub.f32 %v2161, %v2167
  %v2170 = vmul.f32 %v2168, 1.442695
  %v2171 = vpow.pop %v2170
  %v2172 = vmul.f32 %v2169, 1.442695
  %v2173 = vpow.pop %v2172
  %v2174 = vsel %vm297, %v2171, 0.0
  %2175 = vadd.xlane.f32.xlu0 %v2174
  %v2176 = vpop.xlane.xlu0 %2175
  %v2177 = vsel %vm297, %v2173, 0.0
  %2178 = vadd.xlane.f32.xlu0 %v2177
  %v2179 = vpop.xlane.xlu0 %2178
  %v2180 = vrcp.pop %v2176
  %v2181 = vmul.f32 %v2176, %v2180
  %v2182 = vsub.f32 1.0, %v2181
  %v2183 = vmul.f32 %v2180, %v2182
  %v2184 = vadd.f32 %v2180, %v2183
  %vm2185 = vweird.f32 %v2176
  %vm2186 = vweird.f32 %v2180
  %vm2187 = vmor %vm2185, %vm2186
  %v2188 = vsel %vm2187, %v2180, %v2184
  %v2189 = vand.u32 2147483647, %v2176
  %vm2190 = vcmp.eq.f32.partialorder %v2189, 8.507059e+37
  %v2191 = vand.u32 %v2176, 2147483648
  %v2192 = vor.u32 1.1754944e-38, %v2191
  %v2193 = vsel %vm2190, %v2192, %v2188
  %v2194 = vmul.f32 %v2171, %v2193
  %v2195 = vrcp.pop %v2179
  %v2196 = vmul.f32 %v2179, %v2195
  %v2197 = vsub.f32 1.0, %v2196
  %v2198 = vmul.f32 %v2195, %v2197
  %v2199 = vadd.f32 %v2195, %v2198
  %vm2200 = vweird.f32 %v2179
  %vm2201 = vweird.f32 %v2195
  %vm2202 = vmor %vm2200, %vm2201
  %v2203 = vsel %vm2202, %v2195, %v2199
  %v2204 = vand.u32 2147483647, %v2179
  %vm2205 = vcmp.eq.f32.partialorder %v2204, 8.507059e+37
  %v2206 = vand.u32 %v2179, 2147483648
  %v2207 = vor.u32 1.1754944e-38, %v2206
  %v2208 = vsel %vm2205, %v2207, %v2203
  %v2209 = vmul.f32 %v2173, %v2208
  %2210 = vrot.lane.b32.xlu0 %v1746, 72
  %v2211 = vpop.permute.xlu0 %2210
  %2212 = vrot.lane.b32.xlu0 %v1749, 72
  %v2213 = vpop.permute.xlu0 %2212
  %v2217 = vsel %vm297, %v2194, 0
  %v2220 = vsel %vm297, %v2209, 0
  %2222 = vmatpush.msra.mxu0 0.0
  %2223 = vmatpush.msra.mxu0 0.0
  %2224 = vmatpush.msra.mxu0 0.0
  %2225 = vmatpush.msra.mxu0 0.0
  %2226 = vmatpush.msra.mxu0 0.0
  %2227 = vmatpush.msra.mxu0 0.0
  %2228 = vmatpush.msra.mxu0 0.0
  %2229 = vmatpush.msra.mxu0 0.0
  %2230 = vmatpush.msra.mxu0 0.0
  %2231 = vmatpush.msra.mxu0 0.0
  %2232 = vmatpush.msra.mxu0 0.0
  %2233 = vmatpush.msra.mxu0 0.0
  %2234 = vmatpush.msra.mxu0 0.0
  %2235 = vmatpush.msra.mxu0 0.0
  %2236 = vmatpush.msra.mxu0 %v2213
  %2237 = vmatpush.msra.mxu0 %v2211
  %2238 = vmatmul.f32.gmra.mxu0 %v2217
  %v2239 = vpop.f32.mrf.mxu0
  %v2240 = vadd.f32 0.0, %v2239
  %2241 = vmatmul.f32.gmra.mxu0 %v2220
  %v2242 = vpop.f32.mrf.mxu0
  %v2243 = vadd.f32 0.0, %v2242
  %2244 = vdwg.mxu0
  %2247 = vrot.lane.b32.xlu0 %v1992, 8
  %v2248 = vpop.permute.xlu0 %2247
  %2249 = vrot.lane.b32.xlu0 %v1995, 8
  %v2250 = vpop.permute.xlu0 %2249
  %2255 = vrot.lane.b32.xlu0 %v2116, 16
  %v2256 = vpop.permute.xlu0 %2255
  %2257 = vrot.lane.b32.xlu0 %v2119, 16
  %v2258 = vpop.permute.xlu0 %2257
  %2263 = vrot.lane.b32.xlu0 %v2240, 24
  %v2264 = vpop.permute.xlu0 %2263
  %2265 = vrot.lane.b32.xlu0 %v2243, 24
  %v2266 = vpop.permute.xlu0 %2265
  %v2269 = vsel %vm21, %v1868, %v2248
  %v2270 = vsel %vm21, %v1871, %v2250
  %v2271 = vsel %vm297, %v2269, %v2256
  %v2272 = vsel %vm297, %v2270, %v2258
  %v2273 = vsel %vm781, %v2271, %v2264
  %v2274 = vsel %vm781, %v2272, %v2266
  %v2275 = vperm.slane %v1683, 0
  %2276 = vrot.lane.b32.xlu0 %v1678, 32
  %v2277 = vpop.permute.xlu0 %2276
  %2278 = vrot.lane.b32.xlu0 %v1679, 32
  %v2279 = vpop.permute.xlu0 %2278
  %2280 = vrot.lane.b32.xlu0 %v1680, 32
  %v2281 = vpop.permute.xlu0 %2280
  %2282 = vrot.lane.b32.xlu0 %v1681, 32
  %v2283 = vpop.permute.xlu0 %2282
  %v2289 = vsel %vm71, %v2273, 0
  %v2292 = vsel %vm71, %v2274, 0
  %2294 = vmatpush.msra.mxu0 0.0
  %2295 = vmatpush.msra.mxu0 0.0
  %2296 = vmatpush.msra.mxu0 0.0
  %2297 = vmatpush.msra.mxu0 0.0
  %2298 = vmatpush.msra.mxu0 0.0
  %2299 = vmatpush.msra.mxu0 0.0
  %2300 = vmatpush.msra.mxu0 0.0
  %2301 = vmatpush.msra.mxu0 0.0
  %2302 = vmatpush.msra.mxu0 0.0
  %2303 = vmatpush.msra.mxu0 0.0
  %2304 = vmatpush.msra.mxu0 0.0
  %2305 = vmatpush.msra.mxu0 0.0
  %2306 = vmatpush.msra.mxu0 %v2283
  %2307 = vmatpush.msra.mxu0 %v2281
  %2308 = vmatpush.msra.mxu0 %v2279
  %2309 = vmatpush.msra.mxu0 %v2277
  %2310 = vmatmul.f32.gmra.mxu0 %v2289
  %v2311 = vpop.f32.mrf.mxu0
  %v2312 = vadd.f32 %v2275, %v2311
  %2313 = vmatmul.f32.gmra.mxu0 %v2292
  %v2314 = vpop.f32.mrf.mxu0
  %v2315 = vadd.f32 %v2275, %v2314
  %2316 = vdwg.mxu0
  %v2317 = vadd.f32 %v2312, %v179
  %v2318 = vadd.f32 %v2315, %v180
  %v2319 = vld [vmem:[%s3 + $0x10] sm:$0x1]
  %v2320 = vld [vmem:[%s3 + $0x11] sm:$0x1]
  %v2321 = vsel %vm71, %v2317, 0.0
  %2322 = vadd.xlane.f32.xlu0 %v2321
  %v2323 = vpop.xlane.xlu0 %2322
  %v2324 = vsel %vm71, %v2318, 0.0
  %2325 = vadd.xlane.f32.xlu0 %v2324
  %v2326 = vpop.xlane.xlu0 %2325
  %v2327 = vmul.f32 %v2323, %v136
  %v2328 = vmul.f32 %v2326, %v136
  %v2329 = vsub.f32 %v2317, %v2327
  %v2330 = vsub.f32 %v2318, %v2328
  %v2331 = vmul.f32 %v2329, %v2329
  %v2332 = vmul.f32 %v2330, %v2330
  %v2333 = vsel %vm71, %v2331, 0.0
  %2334 = vadd.xlane.f32.xlu0 %v2333
  %v2335 = vpop.xlane.xlu0 %2334
  %v2336 = vsel %vm71, %v2332, 0.0
  %2337 = vadd.xlane.f32.xlu0 %v2336
  %v2338 = vpop.xlane.xlu0 %2337
  %v2339 = vmul.f32 %v2335, %v136
  %v2340 = vmul.f32 %v2338, %v136
  %v2341 = vadd.f32 %v2339, 1e-05
  %v2342 = vadd.f32 %v2340, 1e-05
  %v2343 = vrsqrt.pop %v2341
  %v2344 = vmul.f32 %v2343, %v2341
  %v2345 = vmul.f32 %v2344, %v2343
  %v2346 = vmul.f32 0.5, %v2345
  %v2347 = vsub.f32 1.5, %v2346
  %v2348 = vmul.f32 %v2343, %v2347
  %vm2349 = vweird.f32 %v2341
  %vm2350 = vweird.f32 %v2343
  %vm2351 = vmor %vm2349, %vm2350
  %v2352 = vsel %vm2351, %v2343, %v2348
  %v2353 = vrsqrt.pop %v2342
  %v2354 = vmul.f32 %v2353, %v2342
  %v2355 = vmul.f32 %v2354, %v2353
  %v2356 = vmul.f32 0.5, %v2355
  %v2357 = vsub.f32 1.5, %v2356
  %v2358 = vmul.f32 %v2353, %v2357
  %vm2359 = vweird.f32 %v2342
  %vm2360 = vweird.f32 %v2353
  %vm2361 = vmor %vm2359, %vm2360
  %v2362 = vsel %vm2361, %v2353, %v2358
  %v2363 = vmul.f32 %v2329, %v2352
  %v2364 = vmul.f32 %v2330, %v2362
  %v2365 = vperm.slane %v2319, 0
  %v2366 = vmul.f32 %v2363, %v2365
  %v2367 = vmul.f32 %v2364, %v2365
  %v2368 = vperm.slane %v2320, 0
  %v2369 = vadd.f32 %v2366, %v2368
  %v2370 = vadd.f32 %v2367, %v2368
  %v2371 = vld [vmem:[%s3 + $0x12] sm:$0x1]
  %v2372 = vrot.slane %v2369, 6
  %v2373 = vrot.slane %v2370, 6
  %vm2374 = vcmp.lt.s32.totalorder %v20, 2
  %v2375 = vsel %vm2374, %v2372, %v2373
  %v2376 = vsel %vm2374, %v2373, %v2372
  %v2377 = vadd.s32 %v20, 4294967294
  %vm2378 = vcmp.ge.s32.totalorder %v2377, 0
  %vm2379 = vcmp.lt.s32.totalorder %v2377, 8
  %vm2380 = vmand %vm2378, %vm2379
  %v2381 = vsel %vm2380, %v2376, 0.0
  %v2382 = vsel %vm2380, %v2375, 0.0
  %v2383 = vrot.slane %v2369, 2
  %v2384 = vrot.slane %v2370, 2
  %vm2385 = vcmp.lt.s32.totalorder %v20, 6
  %v2386 = vsel %vm2385, %v2383, %v2384
  %v2387 = vsel %vm2385, %v2384, %v2383
  %v2388 = vadd.s32 %v20, 2
  %vm2389 = vcmp.ge.s32.totalorder %v2388, 0
  %vm2390 = vcmp.lt.s32.totalorder %v2388, 8
  %vm2391 = vmand %vm2389, %vm2390
  %v2392 = vsel %vm2391, %v2386, 0.0
  %v2393 = vsel %vm2391, %v2387, 0.0
  %2396 = vrot.lane.b32.xlu0 %v2369, 32
  %v2397 = vpop.permute.xlu0 %2396
  %2398 = vrot.lane.b32.xlu0 %v2370, 32
  %v2399 = vpop.permute.xlu0 %2398
  %2404 = vrot.lane.b32.xlu0 %v2392, 64
  %v2405 = vpop.permute.xlu0 %2404
  %2406 = vrot.lane.b32.xlu0 %v2393, 64
  %v2407 = vpop.permute.xlu0 %2406
  %v2410 = vsel %vm71, %v2381, %v2397
  %v2411 = vsel %vm71, %v2382, %v2399
  %v2412 = vsel %vm74, %v2410, %v2405
  %v2413 = vsel %vm74, %v2411, %v2407
  %s2414 = scalar_lea.vmem %s2, 128
  %v2415 = vld [vmem:[%s2414] sm:$0xff]
  %v2416 = vld [vmem:[%s2414 + $0x8] sm:$0xff]
  %v2417 = vld [vmem:[%s2414 + $0x10] sm:$0xff]
  %v2418 = vld [vmem:[%s2414 + $0x18] sm:$0xff]
  %v2419 = vld [vmem:[%s2414 + $0x20] sm:$0xff]
  %v2420 = vld [vmem:[%s2414 + $0x28] sm:$0xff]
  %v2421 = vld [vmem:[%s2414 + $0x30] sm:$0xff]
  %v2422 = vld [vmem:[%s2414 + $0x38] sm:$0xff]
  %v2423 = vld [vmem:[%s2414 + $0x40] sm:$0xff]
  %v2424 = vld [vmem:[%s2414 + $0x48] sm:$0xff]
  %v2425 = vld [vmem:[%s2414 + $0x50] sm:$0xff]
  %v2426 = vld [vmem:[%s2414 + $0x58] sm:$0xff]
  %v2427 = vperm.slane %v2371, 0
  %v2429 = vsel %vm90, %v2412, 0
  %v2432 = vsel %vm90, %v2413, 0
  %2434 = vmatpush.msra.mxu0 0.0
  %2435 = vmatpush.msra.mxu0 0.0
  %2436 = vmatpush.msra.mxu0 0.0
  %2437 = vmatpush.msra.mxu0 0.0
  %2438 = vmatpush.msra.mxu0 %v2426
  %2439 = vmatpush.msra.mxu0 %v2425
  %2440 = vmatpush.msra.mxu0 %v2424
  %2441 = vmatpush.msra.mxu0 %v2423
  %2442 = vmatpush.msra.mxu0 %v2422
  %2443 = vmatpush.msra.mxu0 %v2421
  %2444 = vmatpush.msra.mxu0 %v2420
  %2445 = vmatpush.msra.mxu0 %v2419
  %2446 = vmatpush.msra.mxu0 %v2418
  %2447 = vmatpush.msra.mxu0 %v2417
  %2448 = vmatpush.msra.mxu0 %v2416
  %2449 = vmatpush.msra.mxu0 %v2415
  %2450 = vmatmul.f32.gmra.mxu0 %v2429
  %v2451 = vpop.f32.mrf.mxu0
  %v2452 = vadd.f32 %v2427, %v2451
  %2453 = vmatmul.f32.gmra.mxu0 %v2432
  %v2454 = vpop.f32.mrf.mxu0
  %v2455 = vadd.f32 %v2427, %v2454
  %2456 = vdwg.mxu0
  %v2457 = vmax.f32 %v2452, 0.0
  %v2458 = vmax.f32 %v2455, 0.0
  %v2459 = vld [vmem:[%s3 + $0x13] sm:$0x1]
  %v2460 = vld [vmem:[%s3 + $0x14] sm:$0x1]
  %v2461 = vsel %vm71, %v2457, 0.0
  %2462 = vadd.xlane.f32.xlu0 %v2461
  %v2463 = vpop.xlane.xlu0 %2462
  %v2464 = vsel %vm71, %v2458, 0.0
  %2465 = vadd.xlane.f32.xlu0 %v2464
  %v2466 = vpop.xlane.xlu0 %2465
  %v2467 = vmul.f32 %v2463, %v136
  %v2468 = vmul.f32 %v2466, %v136
  %v2469 = vsub.f32 %v2457, %v2467
  %v2470 = vsub.f32 %v2458, %v2468
  %v2471 = vmul.f32 %v2469, %v2469
  %v2472 = vmul.f32 %v2470, %v2470
  %v2473 = vsel %vm71, %v2471, 0.0
  %2474 = vadd.xlane.f32.xlu0 %v2473
  %v2475 = vpop.xlane.xlu0 %2474
  %v2476 = vsel %vm71, %v2472, 0.0
  %2477 = vadd.xlane.f32.xlu0 %v2476
  %v2478 = vpop.xlane.xlu0 %2477
  %v2479 = vmul.f32 %v2475, %v136
  %v2480 = vmul.f32 %v2478, %v136
  %v2481 = vadd.f32 %v2479, 1e-05
  %v2482 = vadd.f32 %v2480, 1e-05
  %v2483 = vrsqrt.pop %v2481
  %v2484 = vmul.f32 %v2483, %v2481
  %v2485 = vmul.f32 %v2484, %v2483
  %v2486 = vmul.f32 0.5, %v2485
  %v2487 = vsub.f32 1.5, %v2486
  %v2488 = vmul.f32 %v2483, %v2487
  %vm2489 = vweird.f32 %v2481
  %vm2490 = vweird.f32 %v2483
  %vm2491 = vmor %vm2489, %vm2490
  %v2492 = vsel %vm2491, %v2483, %v2488
  %v2493 = vrsqrt.pop %v2482
  %v2494 = vmul.f32 %v2493, %v2482
  %v2495 = vmul.f32 %v2494, %v2493
  %v2496 = vmul.f32 0.5, %v2495
  %v2497 = vsub.f32 1.5, %v2496
  %v2498 = vmul.f32 %v2493, %v2497
  %vm2499 = vweird.f32 %v2482
  %vm2500 = vweird.f32 %v2493
  %vm2501 = vmor %vm2499, %vm2500
  %v2502 = vsel %vm2501, %v2493, %v2498
  %v2503 = vmul.f32 %v2469, %v2492
  %v2504 = vmul.f32 %v2470, %v2502
  %v2505 = vperm.slane %v2459, 0
  %v2506 = vmul.f32 %v2503, %v2505
  %v2507 = vmul.f32 %v2504, %v2505
  %v2508 = vperm.slane %v2460, 0
  %v2509 = vadd.f32 %v2506, %v2508
  %v2510 = vadd.f32 %v2507, %v2508
  %s2511 = scalar_lea.vmem %s1, 96
  %v2512 = vld [vmem:[%s2511] sm:$0xff]
  %v2513 = vld [vmem:[%s2511 + $0x8] sm:$0xff]
  %v2514 = vld [vmem:[%s2511 + $0x10] sm:$0xff]
  %v2515 = vld [vmem:[%s2511 + $0x18] sm:$0xff]
  %v2516 = vld [vmem:[%s3 + $0x15] sm:$0x1]
  %v2517 = vld [vmem:[%s3 + $0x16] sm:$0x1]
  %v2518 = vperm.slane %v2516, 0
  %v2520 = vsel %vm71, %v1675, 0
  %v2523 = vsel %vm71, %v1676, 0
  %2525 = vmatpush.msra.mxu0 0.0
  %2526 = vmatpush.msra.mxu0 0.0
  %2527 = vmatpush.msra.mxu0 0.0
  %2528 = vmatpush.msra.mxu0 0.0
  %2529 = vmatpush.msra.mxu0 0.0
  %2530 = vmatpush.msra.mxu0 0.0
  %2531 = vmatpush.msra.mxu0 0.0
  %2532 = vmatpush.msra.mxu0 0.0
  %2533 = vmatpush.msra.mxu0 0.0
  %2534 = vmatpush.msra.mxu0 0.0
  %2535 = vmatpush.msra.mxu0 0.0
  %2536 = vmatpush.msra.mxu0 0.0
  %2537 = vmatpush.msra.mxu0 %v2515
  %2538 = vmatpush.msra.mxu0 %v2514
  %2539 = vmatpush.msra.mxu0 %v2513
  %2540 = vmatpush.msra.mxu0 %v2512
  %2541 = vmatmul.f32.gmra.mxu0 %v2520
  %v2542 = vpop.f32.mrf.mxu0
  %v2543 = vadd.f32 %v2518, %v2542
  %2544 = vmatmul.f32.gmra.mxu0 %v2523
  %v2545 = vpop.f32.mrf.mxu0
  %v2546 = vadd.f32 %v2518, %v2545
  %2547 = vdwg.mxu0
  %2552 = vrot.lane.b32.xlu0 %v2512, 96
  %v2553 = vpop.permute.xlu0 %2552
  %2554 = vrot.lane.b32.xlu0 %v2513, 96
  %v2555 = vpop.permute.xlu0 %2554
  %2556 = vrot.lane.b32.xlu0 %v2514, 96
  %v2557 = vpop.permute.xlu0 %2556
  %2558 = vrot.lane.b32.xlu0 %v2515, 96
  %v2559 = vpop.permute.xlu0 %2558
  %2565 = vrot.lane.b32.xlu0 %v2518, 96
  %v2566 = vpop.permute.xlu0 %2565
  %2568 = vmatpush.msra.mxu0 0.0
  %2569 = vmatpush.msra.mxu0 0.0
  %2570 = vmatpush.msra.mxu0 0.0
  %2571 = vmatpush.msra.mxu0 0.0
  %2572 = vmatpush.msra.mxu0 0.0
  %2573 = vmatpush.msra.mxu0 0.0
  %2574 = vmatpush.msra.mxu0 0.0
  %2575 = vmatpush.msra.mxu0 0.0
  %2576 = vmatpush.msra.mxu0 0.0
  %2577 = vmatpush.msra.mxu0 0.0
  %2578 = vmatpush.msra.mxu0 0.0
  %2579 = vmatpush.msra.mxu0 0.0
  %2580 = vmatpush.msra.mxu0 %v2559
  %2581 = vmatpush.msra.mxu0 %v2557
  %2582 = vmatpush.msra.mxu0 %v2555
  %2583 = vmatpush.msra.mxu0 %v2553
  %2584 = vmatmul.f32.gmra.mxu0 %v2520
  %v2585 = vpop.f32.mrf.mxu0
  %v2586 = vadd.f32 %v2566, %v2585
  %2587 = vmatmul.f32.gmra.mxu0 %v2523
  %v2588 = vpop.f32.mrf.mxu0
  %v2589 = vadd.f32 %v2566, %v2588
  %2590 = vdwg.mxu0
  %v2591 = vmul.f32 %v2543, 0.35355338
  %v2592 = vmul.f32 %v2546, 0.35355338
  %v2594 = vsel %vm21, %v2591, 0
  %v2597 = vsel %vm21, %v2592, 0
  %v2600 = vsel %vm21, %v2586, 0
  %v2603 = vsel %vm21, %v2589, 0
  %2605 = vmatpush.xpose.msra.mxu0 0.0
  %2606 = vmatpush.xpose.msra.mxu0 0.0
  %2607 = vmatpush.xpose.msra.mxu0 0.0
  %2608 = vmatpush.xpose.msra.mxu0 0.0
  %2609 = vmatpush.xpose.msra.mxu0 0.0
  %2610 = vmatpush.xpose.msra.mxu0 0.0
  %2611 = vmatpush.xpose.msra.mxu0 0.0
  %2612 = vmatpush.xpose.msra.mxu0 0.0
  %2613 = vmatpush.xpose.msra.mxu0 0.0
  %2614 = vmatpush.xpose.msra.mxu0 0.0
  %2615 = vmatpush.xpose.msra.mxu0 0.0
  %2616 = vmatpush.xpose.msra.mxu0 0.0
  %2617 = vmatpush.xpose.msra.mxu0 0.0
  %2618 = vmatpush.xpose.msra.mxu0 0.0
  %2619 = vmatpush.xpose.msra.mxu0 %v2603
  %2620 = vmatpush.xpose.msra.mxu0 %v2600
  %2621 = vmatmul.f32.gmra.mxu0 %v2594
  %v2622 = vpop.f32.mrf.mxu0
  %v2623 = vadd.f32 0.0, %v2622
  %2624 = vmatmul.f32.gmra.mxu0 %v2597
  %v2625 = vpop.f32.mrf.mxu0
  %v2626 = vadd.f32 0.0, %v2625
  %2627 = vdwg.mxu0
  %v2628 = vsel %vm30, %v2623, -1e+30
  %v2629 = vsel %vm31, %v2626, -1e+30
  %v2630 = vsel %vm297, %v2628, -inf
  %2631 = vmax.xlane.f32.xlu0 %v2630
  %v2632 = vpop.xlane.xlu0 %2631
  %v2633 = vsel %vm297, %v2629, -inf
  %2634 = vmax.xlane.f32.xlu0 %v2633
  %v2635 = vpop.xlane.xlu0 %2634
  %v2636 = vsub.f32 %v2628, %v2632
  %v2637 = vsub.f32 %v2629, %v2635
  %v2638 = vmul.f32 %v2636, 1.442695
  %v2639 = vpow.pop %v2638
  %v2640 = vmul.f32 %v2637, 1.442695
  %v2641 = vpow.pop %v2640
  %v2642 = vsel %vm297, %v2639, 0.0
  %2643 = vadd.xlane.f32.xlu0 %v2642
  %v2644 = vpop.xlane.xlu0 %2643
  %v2645 = vsel %vm297, %v2641, 0.0
  %2646 = vadd.xlane.f32.xlu0 %v2645
  %v2647 = vpop.xlane.xlu0 %2646
  %v2648 = vrcp.pop %v2644
  %v2649 = vmul.f32 %v2644, %v2648
  %v2650 = vsub.f32 1.0, %v2649
  %v2651 = vmul.f32 %v2648, %v2650
  %v2652 = vadd.f32 %v2648, %v2651
  %vm2653 = vweird.f32 %v2644
  %vm2654 = vweird.f32 %v2648
  %vm2655 = vmor %vm2653, %vm2654
  %v2656 = vsel %vm2655, %v2648, %v2652
  %v2657 = vand.u32 2147483647, %v2644
  %vm2658 = vcmp.eq.f32.partialorder %v2657, 8.507059e+37
  %v2659 = vand.u32 %v2644, 2147483648
  %v2660 = vor.u32 1.1754944e-38, %v2659
  %v2661 = vsel %vm2658, %v2660, %v2656
  %v2662 = vmul.f32 %v2639, %v2661
  %v2663 = vrcp.pop %v2647
  %v2664 = vmul.f32 %v2647, %v2663
  %v2665 = vsub.f32 1.0, %v2664
  %v2666 = vmul.f32 %v2663, %v2665
  %v2667 = vadd.f32 %v2663, %v2666
  %vm2668 = vweird.f32 %v2647
  %vm2669 = vweird.f32 %v2663
  %vm2670 = vmor %vm2668, %vm2669
  %v2671 = vsel %vm2670, %v2663, %v2667
  %v2672 = vand.u32 2147483647, %v2647
  %vm2673 = vcmp.eq.f32.partialorder %v2672, 8.507059e+37
  %v2674 = vand.u32 %v2647, 2147483648
  %v2675 = vor.u32 1.1754944e-38, %v2674
  %v2676 = vsel %vm2673, %v2675, %v2671
  %v2677 = vmul.f32 %v2641, %v2676
  %2678 = vrot.lane.b32.xlu0 %v2586, 96
  %v2679 = vpop.permute.xlu0 %2678
  %2680 = vrot.lane.b32.xlu0 %v2589, 96
  %v2681 = vpop.permute.xlu0 %2680
  %v2685 = vsel %vm297, %v2662, 0
  %v2688 = vsel %vm297, %v2677, 0
  %2690 = vmatpush.msra.mxu0 0.0
  %2691 = vmatpush.msra.mxu0 0.0
  %2692 = vmatpush.msra.mxu0 0.0
  %2693 = vmatpush.msra.mxu0 0.0
  %2694 = vmatpush.msra.mxu0 0.0
  %2695 = vmatpush.msra.mxu0 0.0
  %2696 = vmatpush.msra.mxu0 0.0
  %2697 = vmatpush.msra.mxu0 0.0
  %2698 = vmatpush.msra.mxu0 0.0
  %2699 = vmatpush.msra.mxu0 0.0
  %2700 = vmatpush.msra.mxu0 0.0
  %2701 = vmatpush.msra.mxu0 0.0
  %2702 = vmatpush.msra.mxu0 0.0
  %2703 = vmatpush.msra.mxu0 0.0
  %2704 = vmatpush.msra.mxu0 %v2681
  %2705 = vmatpush.msra.mxu0 %v2679
  %2706 = vmatmul.f32.gmra.mxu0 %v2685
  %v2707 = vpop.f32.mrf.mxu0
  %v2708 = vadd.f32 0.0, %v2707
  %2709 = vmatmul.f32.gmra.mxu0 %v2688
  %v2710 = vpop.f32.mrf.mxu0
  %v2711 = vadd.f32 0.0, %v2710
  %2712 = vdwg.mxu0
  %2713 = vrot.lane.b32.xlu0 %v2591, 120
  %v2714 = vpop.permute.xlu0 %2713
  %2715 = vrot.lane.b32.xlu0 %v2592, 120
  %v2716 = vpop.permute.xlu0 %2715
  %2717 = vrot.lane.b32.xlu0 %v2586, 120
  %v2718 = vpop.permute.xlu0 %2717
  %2719 = vrot.lane.b32.xlu0 %v2589, 120
  %v2720 = vpop.permute.xlu0 %2719
  %v2721 = vsel %vm21, %v2714, 0
  %v2723 = vsel %vm21, %v2716, 0
  %v2725 = vsel %vm21, %v2718, 0
  %v2727 = vsel %vm21, %v2720, 0
  %2729 = vmatpush.xpose.msra.mxu0 0.0
  %2730 = vmatpush.xpose.msra.mxu0 0.0
  %2731 = vmatpush.xpose.msra.mxu0 0.0
  %2732 = vmatpush.xpose.msra.mxu0 0.0
  %2733 = vmatpush.xpose.msra.mxu0 0.0
  %2734 = vmatpush.xpose.msra.mxu0 0.0
  %2735 = vmatpush.xpose.msra.mxu0 0.0
  %2736 = vmatpush.xpose.msra.mxu0 0.0
  %2737 = vmatpush.xpose.msra.mxu0 0.0
  %2738 = vmatpush.xpose.msra.mxu0 0.0
  %2739 = vmatpush.xpose.msra.mxu0 0.0
  %2740 = vmatpush.xpose.msra.mxu0 0.0
  %2741 = vmatpush.xpose.msra.mxu0 0.0
  %2742 = vmatpush.xpose.msra.mxu0 0.0
  %2743 = vmatpush.xpose.msra.mxu0 %v2727
  %2744 = vmatpush.xpose.msra.mxu0 %v2725
  %2745 = vmatmul.f32.gmra.mxu0 %v2721
  %v2746 = vpop.f32.mrf.mxu0
  %v2747 = vadd.f32 0.0, %v2746
  %2748 = vmatmul.f32.gmra.mxu0 %v2723
  %v2749 = vpop.f32.mrf.mxu0
  %v2750 = vadd.f32 0.0, %v2749
  %2751 = vdwg.mxu0
  %v2752 = vsel %vm30, %v2747, -1e+30
  %v2753 = vsel %vm31, %v2750, -1e+30
  %v2754 = vsel %vm297, %v2752, -inf
  %2755 = vmax.xlane.f32.xlu0 %v2754
  %v2756 = vpop.xlane.xlu0 %2755
  %v2757 = vsel %vm297, %v2753, -inf
  %2758 = vmax.xlane.f32.xlu0 %v2757
  %v2759 = vpop.xlane.xlu0 %2758
  %v2760 = vsub.f32 %v2752, %v2756
  %v2761 = vsub.f32 %v2753, %v2759
  %v2762 = vmul.f32 %v2760, 1.442695
  %v2763 = vpow.pop %v2762
  %v2764 = vmul.f32 %v2761, 1.442695
  %v2765 = vpow.pop %v2764
  %v2766 = vsel %vm297, %v2763, 0.0
  %2767 = vadd.xlane.f32.xlu0 %v2766
  %v2768 = vpop.xlane.xlu0 %2767
  %v2769 = vsel %vm297, %v2765, 0.0
  %2770 = vadd.xlane.f32.xlu0 %v2769
  %v2771 = vpop.xlane.xlu0 %2770
  %v2772 = vrcp.pop %v2768
  %v2773 = vmul.f32 %v2768, %v2772
  %v2774 = vsub.f32 1.0, %v2773
  %v2775 = vmul.f32 %v2772, %v2774
  %v2776 = vadd.f32 %v2772, %v2775
  %vm2777 = vweird.f32 %v2768
  %vm2778 = vweird.f32 %v2772
  %vm2779 = vmor %vm2777, %vm2778
  %v2780 = vsel %vm2779, %v2772, %v2776
  %v2781 = vand.u32 2147483647, %v2768
  %vm2782 = vcmp.eq.f32.partialorder %v2781, 8.507059e+37
  %v2783 = vand.u32 %v2768, 2147483648
  %v2784 = vor.u32 1.1754944e-38, %v2783
  %v2785 = vsel %vm2782, %v2784, %v2780
  %v2786 = vmul.f32 %v2763, %v2785
  %v2787 = vrcp.pop %v2771
  %v2788 = vmul.f32 %v2771, %v2787
  %v2789 = vsub.f32 1.0, %v2788
  %v2790 = vmul.f32 %v2787, %v2789
  %v2791 = vadd.f32 %v2787, %v2790
  %vm2792 = vweird.f32 %v2771
  %vm2793 = vweird.f32 %v2787
  %vm2794 = vmor %vm2792, %vm2793
  %v2795 = vsel %vm2794, %v2787, %v2791
  %v2796 = vand.u32 2147483647, %v2771
  %vm2797 = vcmp.eq.f32.partialorder %v2796, 8.507059e+37
  %v2798 = vand.u32 %v2771, 2147483648
  %v2799 = vor.u32 1.1754944e-38, %v2798
  %v2800 = vsel %vm2797, %v2799, %v2795
  %v2801 = vmul.f32 %v2765, %v2800
  %2802 = vrot.lane.b32.xlu0 %v2586, 88
  %v2803 = vpop.permute.xlu0 %2802
  %2804 = vrot.lane.b32.xlu0 %v2589, 88
  %v2805 = vpop.permute.xlu0 %2804
  %v2809 = vsel %vm297, %v2786, 0
  %v2812 = vsel %vm297, %v2801, 0
  %2814 = vmatpush.msra.mxu0 0.0
  %2815 = vmatpush.msra.mxu0 0.0
  %2816 = vmatpush.msra.mxu0 0.0
  %2817 = vmatpush.msra.mxu0 0.0
  %2818 = vmatpush.msra.mxu0 0.0
  %2819 = vmatpush.msra.mxu0 0.0
  %2820 = vmatpush.msra.mxu0 0.0
  %2821 = vmatpush.msra.mxu0 0.0
  %2822 = vmatpush.msra.mxu0 0.0
  %2823 = vmatpush.msra.mxu0 0.0
  %2824 = vmatpush.msra.mxu0 0.0
  %2825 = vmatpush.msra.mxu0 0.0
  %2826 = vmatpush.msra.mxu0 0.0
  %2827 = vmatpush.msra.mxu0 0.0
  %2828 = vmatpush.msra.mxu0 %v2805
  %2829 = vmatpush.msra.mxu0 %v2803
  %2830 = vmatmul.f32.gmra.mxu0 %v2809
  %v2831 = vpop.f32.mrf.mxu0
  %v2832 = vadd.f32 0.0, %v2831
  %2833 = vmatmul.f32.gmra.mxu0 %v2812
  %v2834 = vpop.f32.mrf.mxu0
  %v2835 = vadd.f32 0.0, %v2834
  %2836 = vdwg.mxu0
  %2837 = vrot.lane.b32.xlu0 %v2591, 112
  %v2838 = vpop.permute.xlu0 %2837
  %2839 = vrot.lane.b32.xlu0 %v2592, 112
  %v2840 = vpop.permute.xlu0 %2839
  %2841 = vrot.lane.b32.xlu0 %v2586, 112
  %v2842 = vpop.permute.xlu0 %2841
  %2843 = vrot.lane.b32.xlu0 %v2589, 112
  %v2844 = vpop.permute.xlu0 %2843
  %v2845 = vsel %vm21, %v2838, 0
  %v2847 = vsel %vm21, %v2840, 0
  %v2849 = vsel %vm21, %v2842, 0
  %v2851 = vsel %vm21, %v2844, 0
  %2853 = vmatpush.xpose.msra.mxu0 0.0
  %2854 = vmatpush.xpose.msra.mxu0 0.0
  %2855 = vmatpush.xpose.msra.mxu0 0.0
  %2856 = vmatpush.xpose.msra.mxu0 0.0
  %2857 = vmatpush.xpose.msra.mxu0 0.0
  %2858 = vmatpush.xpose.msra.mxu0 0.0
  %2859 = vmatpush.xpose.msra.mxu0 0.0
  %2860 = vmatpush.xpose.msra.mxu0 0.0
  %2861 = vmatpush.xpose.msra.mxu0 0.0
  %2862 = vmatpush.xpose.msra.mxu0 0.0
  %2863 = vmatpush.xpose.msra.mxu0 0.0
  %2864 = vmatpush.xpose.msra.mxu0 0.0
  %2865 = vmatpush.xpose.msra.mxu0 0.0
  %2866 = vmatpush.xpose.msra.mxu0 0.0
  %2867 = vmatpush.xpose.msra.mxu0 %v2851
  %2868 = vmatpush.xpose.msra.mxu0 %v2849
  %2869 = vmatmul.f32.gmra.mxu0 %v2845
  %v2870 = vpop.f32.mrf.mxu0
  %v2871 = vadd.f32 0.0, %v2870
  %2872 = vmatmul.f32.gmra.mxu0 %v2847
  %v2873 = vpop.f32.mrf.mxu0
  %v2874 = vadd.f32 0.0, %v2873
  %2875 = vdwg.mxu0
  %v2876 = vsel %vm30, %v2871, -1e+30
  %v2877 = vsel %vm31, %v2874, -1e+30
  %v2878 = vsel %vm297, %v2876, -inf
  %2879 = vmax.xlane.f32.xlu0 %v2878
  %v2880 = vpop.xlane.xlu0 %2879
  %v2881 = vsel %vm297, %v2877, -inf
  %2882 = vmax.xlane.f32.xlu0 %v2881
  %v2883 = vpop.xlane.xlu0 %2882
  %v2884 = vsub.f32 %v2876, %v2880
  %v2885 = vsub.f32 %v2877, %v2883
  %v2886 = vmul.f32 %v2884, 1.442695
  %v2887 = vpow.pop %v2886
  %v2888 = vmul.f32 %v2885, 1.442695
  %v2889 = vpow.pop %v2888
  %v2890 = vsel %vm297, %v2887, 0.0
  %2891 = vadd.xlane.f32.xlu0 %v2890
  %v2892 = vpop.xlane.xlu0 %2891
  %v2893 = vsel %vm297, %v2889, 0.0
  %2894 = vadd.xlane.f32.xlu0 %v2893
  %v2895 = vpop.xlane.xlu0 %2894
  %v2896 = vrcp.pop %v2892
  %v2897 = vmul.f32 %v2892, %v2896
  %v2898 = vsub.f32 1.0, %v2897
  %v2899 = vmul.f32 %v2896, %v2898
  %v2900 = vadd.f32 %v2896, %v2899
  %vm2901 = vweird.f32 %v2892
  %vm2902 = vweird.f32 %v2896
  %vm2903 = vmor %vm2901, %vm2902
  %v2904 = vsel %vm2903, %v2896, %v2900
  %v2905 = vand.u32 2147483647, %v2892
  %vm2906 = vcmp.eq.f32.partialorder %v2905, 8.507059e+37
  %v2907 = vand.u32 %v2892, 2147483648
  %v2908 = vor.u32 1.1754944e-38, %v2907
  %v2909 = vsel %vm2906, %v2908, %v2904
  %v2910 = vmul.f32 %v2887, %v2909
  %v2911 = vrcp.pop %v2895
  %v2912 = vmul.f32 %v2895, %v2911
  %v2913 = vsub.f32 1.0, %v2912
  %v2914 = vmul.f32 %v2911, %v2913
  %v2915 = vadd.f32 %v2911, %v2914
  %vm2916 = vweird.f32 %v2895
  %vm2917 = vweird.f32 %v2911
  %vm2918 = vmor %vm2916, %vm2917
  %v2919 = vsel %vm2918, %v2911, %v2915
  %v2920 = vand.u32 2147483647, %v2895
  %vm2921 = vcmp.eq.f32.partialorder %v2920, 8.507059e+37
  %v2922 = vand.u32 %v2895, 2147483648
  %v2923 = vor.u32 1.1754944e-38, %v2922
  %v2924 = vsel %vm2921, %v2923, %v2919
  %v2925 = vmul.f32 %v2889, %v2924
  %2926 = vrot.lane.b32.xlu0 %v2586, 80
  %v2927 = vpop.permute.xlu0 %2926
  %2928 = vrot.lane.b32.xlu0 %v2589, 80
  %v2929 = vpop.permute.xlu0 %2928
  %v2933 = vsel %vm297, %v2910, 0
  %v2936 = vsel %vm297, %v2925, 0
  %2938 = vmatpush.msra.mxu0 0.0
  %2939 = vmatpush.msra.mxu0 0.0
  %2940 = vmatpush.msra.mxu0 0.0
  %2941 = vmatpush.msra.mxu0 0.0
  %2942 = vmatpush.msra.mxu0 0.0
  %2943 = vmatpush.msra.mxu0 0.0
  %2944 = vmatpush.msra.mxu0 0.0
  %2945 = vmatpush.msra.mxu0 0.0
  %2946 = vmatpush.msra.mxu0 0.0
  %2947 = vmatpush.msra.mxu0 0.0
  %2948 = vmatpush.msra.mxu0 0.0
  %2949 = vmatpush.msra.mxu0 0.0
  %2950 = vmatpush.msra.mxu0 0.0
  %2951 = vmatpush.msra.mxu0 0.0
  %2952 = vmatpush.msra.mxu0 %v2929
  %2953 = vmatpush.msra.mxu0 %v2927
  %2954 = vmatmul.f32.gmra.mxu0 %v2933
  %v2955 = vpop.f32.mrf.mxu0
  %v2956 = vadd.f32 0.0, %v2955
  %2957 = vmatmul.f32.gmra.mxu0 %v2936
  %v2958 = vpop.f32.mrf.mxu0
  %v2959 = vadd.f32 0.0, %v2958
  %2960 = vdwg.mxu0
  %2961 = vrot.lane.b32.xlu0 %v2591, 104
  %v2962 = vpop.permute.xlu0 %2961
  %2963 = vrot.lane.b32.xlu0 %v2592, 104
  %v2964 = vpop.permute.xlu0 %2963
  %2965 = vrot.lane.b32.xlu0 %v2586, 104
  %v2966 = vpop.permute.xlu0 %2965
  %2967 = vrot.lane.b32.xlu0 %v2589, 104
  %v2968 = vpop.permute.xlu0 %2967
  %v2969 = vsel %vm21, %v2962, 0
  %v2971 = vsel %vm21, %v2964, 0
  %v2973 = vsel %vm21, %v2966, 0
  %v2975 = vsel %vm21, %v2968, 0
  %2977 = vmatpush.xpose.msra.mxu0 0.0
  %2978 = vmatpush.xpose.msra.mxu0 0.0
  %2979 = vmatpush.xpose.msra.mxu0 0.0
  %2980 = vmatpush.xpose.msra.mxu0 0.0
  %2981 = vmatpush.xpose.msra.mxu0 0.0
  %2982 = vmatpush.xpose.msra.mxu0 0.0
  %2983 = vmatpush.xpose.msra.mxu0 0.0
  %2984 = vmatpush.xpose.msra.mxu0 0.0
  %2985 = vmatpush.xpose.msra.mxu0 0.0
  %2986 = vmatpush.xpose.msra.mxu0 0.0
  %2987 = vmatpush.xpose.msra.mxu0 0.0
  %2988 = vmatpush.xpose.msra.mxu0 0.0
  %2989 = vmatpush.xpose.msra.mxu0 0.0
  %2990 = vmatpush.xpose.msra.mxu0 0.0
  %2991 = vmatpush.xpose.msra.mxu0 %v2975
  %2992 = vmatpush.xpose.msra.mxu0 %v2973
  %2993 = vmatmul.f32.gmra.mxu0 %v2969
  %v2994 = vpop.f32.mrf.mxu0
  %v2995 = vadd.f32 0.0, %v2994
  %2996 = vmatmul.f32.gmra.mxu0 %v2971
  %v2997 = vpop.f32.mrf.mxu0
  %v2998 = vadd.f32 0.0, %v2997
  %2999 = vdwg.mxu0
  %v3000 = vsel %vm30, %v2995, -1e+30
  %v3001 = vsel %vm31, %v2998, -1e+30
  %v3002 = vsel %vm297, %v3000, -inf
  %3003 = vmax.xlane.f32.xlu0 %v3002
  %v3004 = vpop.xlane.xlu0 %3003
  %v3005 = vsel %vm297, %v3001, -inf
  %3006 = vmax.xlane.f32.xlu0 %v3005
  %v3007 = vpop.xlane.xlu0 %3006
  %v3008 = vsub.f32 %v3000, %v3004
  %v3009 = vsub.f32 %v3001, %v3007
  %v3010 = vmul.f32 %v3008, 1.442695
  %v3011 = vpow.pop %v3010
  %v3012 = vmul.f32 %v3009, 1.442695
  %v3013 = vpow.pop %v3012
  %v3014 = vsel %vm297, %v3011, 0.0
  %3015 = vadd.xlane.f32.xlu0 %v3014
  %v3016 = vpop.xlane.xlu0 %3015
  %v3017 = vsel %vm297, %v3013, 0.0
  %3018 = vadd.xlane.f32.xlu0 %v3017
  %v3019 = vpop.xlane.xlu0 %3018
  %v3020 = vrcp.pop %v3016
  %v3021 = vmul.f32 %v3016, %v3020
  %v3022 = vsub.f32 1.0, %v3021
  %v3023 = vmul.f32 %v3020, %v3022
  %v3024 = vadd.f32 %v3020, %v3023
  %vm3025 = vweird.f32 %v3016
  %vm3026 = vweird.f32 %v3020
  %vm3027 = vmor %vm3025, %vm3026
  %v3028 = vsel %vm3027, %v3020, %v3024
  %v3029 = vand.u32 2147483647, %v3016
  %vm3030 = vcmp.eq.f32.partialorder %v3029, 8.507059e+37
  %v3031 = vand.u32 %v3016, 2147483648
  %v3032 = vor.u32 1.1754944e-38, %v3031
  %v3033 = vsel %vm3030, %v3032, %v3028
  %v3034 = vmul.f32 %v3011, %v3033
  %v3035 = vrcp.pop %v3019
  %v3036 = vmul.f32 %v3019, %v3035
  %v3037 = vsub.f32 1.0, %v3036
  %v3038 = vmul.f32 %v3035, %v3037
  %v3039 = vadd.f32 %v3035, %v3038
  %vm3040 = vweird.f32 %v3019
  %vm3041 = vweird.f32 %v3035
  %vm3042 = vmor %vm3040, %vm3041
  %v3043 = vsel %vm3042, %v3035, %v3039
  %v3044 = vand.u32 2147483647, %v3019
  %vm3045 = vcmp.eq.f32.partialorder %v3044, 8.507059e+37
  %v3046 = vand.u32 %v3019, 2147483648
  %v3047 = vor.u32 1.1754944e-38, %v3046
  %v3048 = vsel %vm3045, %v3047, %v3043
  %v3049 = vmul.f32 %v3013, %v3048
  %3050 = vrot.lane.b32.xlu0 %v2586, 72
  %v3051 = vpop.permute.xlu0 %3050
  %3052 = vrot.lane.b32.xlu0 %v2589, 72
  %v3053 = vpop.permute.xlu0 %3052
  %v3057 = vsel %vm297, %v3034, 0
  %v3060 = vsel %vm297, %v3049, 0
  %3062 = vmatpush.msra.mxu0 0.0
  %3063 = vmatpush.msra.mxu0 0.0
  %3064 = vmatpush.msra.mxu0 0.0
  %3065 = vmatpush.msra.mxu0 0.0
  %3066 = vmatpush.msra.mxu0 0.0
  %3067 = vmatpush.msra.mxu0 0.0
  %3068 = vmatpush.msra.mxu0 0.0
  %3069 = vmatpush.msra.mxu0 0.0
  %3070 = vmatpush.msra.mxu0 0.0
  %3071 = vmatpush.msra.mxu0 0.0
  %3072 = vmatpush.msra.mxu0 0.0
  %3073 = vmatpush.msra.mxu0 0.0
  %3074 = vmatpush.msra.mxu0 0.0
  %3075 = vmatpush.msra.mxu0 0.0
  %3076 = vmatpush.msra.mxu0 %v3053
  %3077 = vmatpush.msra.mxu0 %v3051
  %3078 = vmatmul.f32.gmra.mxu0 %v3057
  %v3079 = vpop.f32.mrf.mxu0
  %v3080 = vadd.f32 0.0, %v3079
  %3081 = vmatmul.f32.gmra.mxu0 %v3060
  %v3082 = vpop.f32.mrf.mxu0
  %v3083 = vadd.f32 0.0, %v3082
  %3084 = vdwg.mxu0
  %3087 = vrot.lane.b32.xlu0 %v2832, 8
  %v3088 = vpop.permute.xlu0 %3087
  %3089 = vrot.lane.b32.xlu0 %v2835, 8
  %v3090 = vpop.permute.xlu0 %3089
  %3095 = vrot.lane.b32.xlu0 %v2956, 16
  %v3096 = vpop.permute.xlu0 %3095
  %3097 = vrot.lane.b32.xlu0 %v2959, 16
  %v3098 = vpop.permute.xlu0 %3097
  %3103 = vrot.lane.b32.xlu0 %v3080, 24
  %v3104 = vpop.permute.xlu0 %3103
  %3105 = vrot.lane.b32.xlu0 %v3083, 24
  %v3106 = vpop.permute.xlu0 %3105
  %v3109 = vsel %vm21, %v2708, %v3088
  %v3110 = vsel %vm21, %v2711, %v3090
  %v3111 = vsel %vm297, %v3109, %v3096
  %v3112 = vsel %vm297, %v3110, %v3098
  %v3113 = vsel %vm781, %v3111, %v3104
  %v3114 = vsel %vm781, %v3112, %v3106
  %v3115 = vperm.slane %v2517, 0
  %3116 = vrot.lane.b32.xlu0 %v2512, 32
  %v3117 = vpop.permute.xlu0 %3116
  %3118 = vrot.lane.b32.xlu0 %v2513, 32
  %v3119 = vpop.permute.xlu0 %3118
  %3120 = vrot.lane.b32.xlu0 %v2514, 32
  %v3121 = vpop.permute.xlu0 %3120
  %3122 = vrot.lane.b32.xlu0 %v2515, 32
  %v3123 = vpop.permute.xlu0 %3122
  %v3129 = vsel %vm71, %v3113, 0
  %v3132 = vsel %vm71, %v3114, 0
  %3134 = vmatpush.msra.mxu0 0.0
  %3135 = vmatpush.msra.mxu0 0.0
  %3136 = vmatpush.msra.mxu0 0.0
  %3137 = vmatpush.msra.mxu0 0.0
  %3138 = vmatpush.msra.mxu0 0.0
  %3139 = vmatpush.msra.mxu0 0.0
  %3140 = vmatpush.msra.mxu0 0.0
  %3141 = vmatpush.msra.mxu0 0.0
  %3142 = vmatpush.msra.mxu0 0.0
  %3143 = vmatpush.msra.mxu0 0.0
  %3144 = vmatpush.msra.mxu0 0.0
  %3145 = vmatpush.msra.mxu0 0.0
  %3146 = vmatpush.msra.mxu0 %v3123
  %3147 = vmatpush.msra.mxu0 %v3121
  %3148 = vmatpush.msra.mxu0 %v3119
  %3149 = vmatpush.msra.mxu0 %v3117
  %3150 = vmatmul.f32.gmra.mxu0 %v3129
  %v3151 = vpop.f32.mrf.mxu0
  %v3152 = vadd.f32 %v3115, %v3151
  %3153 = vmatmul.f32.gmra.mxu0 %v3132
  %v3154 = vpop.f32.mrf.mxu0
  %v3155 = vadd.f32 %v3115, %v3154
  %3156 = vdwg.mxu0
  %v3157 = vadd.f32 %v3152, %v1675
  %v3158 = vadd.f32 %v3155, %v1676
  %v3159 = vld [vmem:[%s3 + $0x1b] sm:$0x1]
  %v3160 = vld [vmem:[%s3 + $0x1c] sm:$0x1]
  %v3161 = vsel %vm71, %v3157, 0.0
  %3162 = vadd.xlane.f32.xlu0 %v3161
  %v3163 = vpop.xlane.xlu0 %3162
  %v3164 = vsel %vm71, %v3158, 0.0
  %3165 = vadd.xlane.f32.xlu0 %v3164
  %v3166 = vpop.xlane.xlu0 %3165
  %v3167 = vmul.f32 %v3163, %v136
  %v3168 = vmul.f32 %v3166, %v136
  %v3169 = vsub.f32 %v3157, %v3167
  %v3170 = vsub.f32 %v3158, %v3168
  %v3171 = vmul.f32 %v3169, %v3169
  %v3172 = vmul.f32 %v3170, %v3170
  %v3173 = vsel %vm71, %v3171, 0.0
  %3174 = vadd.xlane.f32.xlu0 %v3173
  %v3175 = vpop.xlane.xlu0 %3174
  %v3176 = vsel %vm71, %v3172, 0.0
  %3177 = vadd.xlane.f32.xlu0 %v3176
  %v3178 = vpop.xlane.xlu0 %3177
  %v3179 = vmul.f32 %v3175, %v136
  %v3180 = vmul.f32 %v3178, %v136
  %v3181 = vadd.f32 %v3179, 1e-05
  %v3182 = vadd.f32 %v3180, 1e-05
  %v3183 = vrsqrt.pop %v3181
  %v3184 = vmul.f32 %v3183, %v3181
  %v3185 = vmul.f32 %v3184, %v3183
  %v3186 = vmul.f32 0.5, %v3185
  %v3187 = vsub.f32 1.5, %v3186
  %v3188 = vmul.f32 %v3183, %v3187
  %vm3189 = vweird.f32 %v3181
  %vm3190 = vweird.f32 %v3183
  %vm3191 = vmor %vm3189, %vm3190
  %v3192 = vsel %vm3191, %v3183, %v3188
  %v3193 = vrsqrt.pop %v3182
  %v3194 = vmul.f32 %v3193, %v3182
  %v3195 = vmul.f32 %v3194, %v3193
  %v3196 = vmul.f32 0.5, %v3195
  %v3197 = vsub.f32 1.5, %v3196
  %v3198 = vmul.f32 %v3193, %v3197
  %vm3199 = vweird.f32 %v3182
  %vm3200 = vweird.f32 %v3193
  %vm3201 = vmor %vm3199, %vm3200
  %v3202 = vsel %vm3201, %v3193, %v3198
  %v3203 = vmul.f32 %v3169, %v3192
  %v3204 = vmul.f32 %v3170, %v3202
  %v3205 = vperm.slane %v3159, 0
  %v3206 = vmul.f32 %v3203, %v3205
  %v3207 = vmul.f32 %v3204, %v3205
  %v3208 = vperm.slane %v3160, 0
  %v3209 = vadd.f32 %v3206, %v3208
  %v3210 = vadd.f32 %v3207, %v3208
  %v3211 = vld [vmem:[%s2414 + $0x60] sm:$0xff]
  %v3212 = vld [vmem:[%s2414 + $0x68] sm:$0xff]
  %v3213 = vld [vmem:[%s2414 + $0x70] sm:$0xff]
  %v3214 = vld [vmem:[%s2414 + $0x78] sm:$0xff]
  %v3215 = vld [vmem:[%s3 + $0x1d] sm:$0x1]
  %v3216 = vperm.slane %v3215, 0
  %v3218 = vsel %vm71, %v3209, 0
  %v3221 = vsel %vm71, %v3210, 0
  %3223 = vmatpush.msra.mxu0 0.0
  %3224 = vmatpush.msra.mxu0 0.0
  %3225 = vmatpush.msra.mxu0 0.0
  %3226 = vmatpush.msra.mxu0 0.0
  %3227 = vmatpush.msra.mxu0 0.0
  %3228 = vmatpush.msra.mxu0 0.0
  %3229 = vmatpush.msra.mxu0 0.0
  %3230 = vmatpush.msra.mxu0 0.0
  %3231 = vmatpush.msra.mxu0 0.0
  %3232 = vmatpush.msra.mxu0 0.0
  %3233 = vmatpush.msra.mxu0 0.0
  %3234 = vmatpush.msra.mxu0 0.0
  %3235 = vmatpush.msra.mxu0 %v3214
  %3236 = vmatpush.msra.mxu0 %v3213
  %3237 = vmatpush.msra.mxu0 %v3212
  %3238 = vmatpush.msra.mxu0 %v3211
  %3239 = vmatmul.f32.gmra.mxu0 %v3218
  %v3240 = vpop.f32.mrf.mxu0
  %v3241 = vadd.f32 %v3216, %v3240
  %3242 = vmatmul.f32.gmra.mxu0 %v3221
  %v3243 = vpop.f32.mrf.mxu0
  %v3244 = vadd.f32 %v3216, %v3243
  %3245 = vdwg.mxu0
  %v3246 = vmax.f32 %v3241, 0.0
  %v3247 = vmax.f32 %v3244, 0.0
  %v3248 = vld [vmem:[%s3 + $0x1e] sm:$0x1]
  %v3249 = vld [vmem:[%s3 + $0x1f] sm:$0x1]
  %v3250 = vsel %vm71, %v3246, 0.0
  %3251 = vadd.xlane.f32.xlu0 %v3250
  %v3252 = vpop.xlane.xlu0 %3251
  %v3253 = vsel %vm71, %v3247, 0.0
  %3254 = vadd.xlane.f32.xlu0 %v3253
  %v3255 = vpop.xlane.xlu0 %3254
  %v3256 = vmul.f32 %v3252, %v136
  %v3257 = vmul.f32 %v3255, %v136
  %v3258 = vsub.f32 %v3246, %v3256
  %v3259 = vsub.f32 %v3247, %v3257
  %v3260 = vmul.f32 %v3258, %v3258
  %v3261 = vmul.f32 %v3259, %v3259
  %v3262 = vsel %vm71, %v3260, 0.0
  %3263 = vadd.xlane.f32.xlu0 %v3262
  %v3264 = vpop.xlane.xlu0 %3263
  %v3265 = vsel %vm71, %v3261, 0.0
  %3266 = vadd.xlane.f32.xlu0 %v3265
  %v3267 = vpop.xlane.xlu0 %3266
  %v3268 = vmul.f32 %v3264, %v136
  %v3269 = vmul.f32 %v3267, %v136
  %v3270 = vadd.f32 %v3268, 1e-05
  %v3271 = vadd.f32 %v3269, 1e-05
  %v3272 = vrsqrt.pop %v3270
  %v3273 = vmul.f32 %v3272, %v3270
  %v3274 = vmul.f32 %v3273, %v3272
  %v3275 = vmul.f32 0.5, %v3274
  %v3276 = vsub.f32 1.5, %v3275
  %v3277 = vmul.f32 %v3272, %v3276
  %vm3278 = vweird.f32 %v3270
  %vm3279 = vweird.f32 %v3272
  %vm3280 = vmor %vm3278, %vm3279
  %v3281 = vsel %vm3280, %v3272, %v3277
  %v3282 = vrsqrt.pop %v3271
  %v3283 = vmul.f32 %v3282, %v3271
  %v3284 = vmul.f32 %v3283, %v3282
  %v3285 = vmul.f32 0.5, %v3284
  %v3286 = vsub.f32 1.5, %v3285
  %v3287 = vmul.f32 %v3282, %v3286
  %vm3288 = vweird.f32 %v3271
  %vm3289 = vweird.f32 %v3282
  %vm3290 = vmor %vm3288, %vm3289
  %v3291 = vsel %vm3290, %v3282, %v3287
  %v3292 = vmul.f32 %v3258, %v3281
  %v3293 = vmul.f32 %v3259, %v3291
  %v3294 = vperm.slane %v3248, 0
  %v3295 = vmul.f32 %v3292, %v3294
  %v3296 = vmul.f32 %v3293, %v3294
  %v3297 = vperm.slane %v3249, 0
  %v3298 = vadd.f32 %v3295, %v3297
  %v3299 = vadd.f32 %v3296, %v3297
  %v3300 = vadd.f32 %v3298, %v3209
  %v3301 = vadd.f32 %v3299, %v3210
  %s3302 = scalar_lea.vmem %s1, 128
  %v3303 = vld [vmem:[%s3302] sm:$0xff]
  %v3304 = vld [vmem:[%s3302 + $0x8] sm:$0xff]
  %v3305 = vld [vmem:[%s3302 + $0x10] sm:$0xff]
  %v3306 = vld [vmem:[%s3302 + $0x18] sm:$0xff]
  %v3307 = vld [vmem:[%s3 + $0x17] sm:$0x1]
  %v3308 = vld [vmem:[%s3 + $0x18] sm:$0x1]
  %v3309 = vperm.slane %v3307, 0
  %v3311 = vsel %vm71, %v3300, 0
  %v3314 = vsel %vm71, %v3301, 0
  %3316 = vmatpush.msra.mxu0 0.0
  %3317 = vmatpush.msra.mxu0 0.0
  %3318 = vmatpush.msra.mxu0 0.0
  %3319 = vmatpush.msra.mxu0 0.0
  %3320 = vmatpush.msra.mxu0 0.0
  %3321 = vmatpush.msra.mxu0 0.0
  %3322 = vmatpush.msra.mxu0 0.0
  %3323 = vmatpush.msra.mxu0 0.0
  %3324 = vmatpush.msra.mxu0 0.0
  %3325 = vmatpush.msra.mxu0 0.0
  %3326 = vmatpush.msra.mxu0 0.0
  %3327 = vmatpush.msra.mxu0 0.0
  %3328 = vmatpush.msra.mxu0 %v3306
  %3329 = vmatpush.msra.mxu0 %v3305
  %3330 = vmatpush.msra.mxu0 %v3304
  %3331 = vmatpush.msra.mxu0 %v3303
  %3332 = vmatmul.f32.gmra.mxu0 %v3311
  %v3333 = vpop.f32.mrf.mxu0
  %v3334 = vadd.f32 %v3309, %v3333
  %3335 = vmatmul.f32.gmra.mxu0 %v3314
  %v3336 = vpop.f32.mrf.mxu0
  %v3337 = vadd.f32 %v3309, %v3336
  %3338 = vdwg.mxu0
  %3343 = vrot.lane.b32.xlu0 %v3303, 96
  %v3344 = vpop.permute.xlu0 %3343
  %3345 = vrot.lane.b32.xlu0 %v3304, 96
  %v3346 = vpop.permute.xlu0 %3345
  %3347 = vrot.lane.b32.xlu0 %v3305, 96
  %v3348 = vpop.permute.xlu0 %3347
  %3349 = vrot.lane.b32.xlu0 %v3306, 96
  %v3350 = vpop.permute.xlu0 %3349
  %3356 = vrot.lane.b32.xlu0 %v3309, 96
  %v3357 = vpop.permute.xlu0 %3356
  %v3360 = vsel %vm71, %v2509, 0
  %v3363 = vsel %vm71, %v2510, 0
  %3365 = vmatpush.msra.mxu0 0.0
  %3366 = vmatpush.msra.mxu0 0.0
  %3367 = vmatpush.msra.mxu0 0.0
  %3368 = vmatpush.msra.mxu0 0.0
  %3369 = vmatpush.msra.mxu0 0.0
  %3370 = vmatpush.msra.mxu0 0.0
  %3371 = vmatpush.msra.mxu0 0.0
  %3372 = vmatpush.msra.mxu0 0.0
  %3373 = vmatpush.msra.mxu0 0.0
  %3374 = vmatpush.msra.mxu0 0.0
  %3375 = vmatpush.msra.mxu0 0.0
  %3376 = vmatpush.msra.mxu0 0.0
  %3377 = vmatpush.msra.mxu0 %v3350
  %3378 = vmatpush.msra.mxu0 %v3348
  %3379 = vmatpush.msra.mxu0 %v3346
  %3380 = vmatpush.msra.mxu0 %v3344
  %3381 = vmatmul.f32.gmra.mxu0 %v3360
  %v3382 = vpop.f32.mrf.mxu0
  %v3383 = vadd.f32 %v3357, %v3382
  %3384 = vmatmul.f32.gmra.mxu0 %v3363
  %v3385 = vpop.f32.mrf.mxu0
  %v3386 = vadd.f32 %v3357, %v3385
  %3387 = vdwg.mxu0
  %v3388 = vmul.f32 %v3334, 0.35355338
  %v3389 = vmul.f32 %v3337, 0.35355338
  %v3391 = vsel %vm21, %v3388, 0
  %v3394 = vsel %vm21, %v3389, 0
  %v3397 = vsel %vm21, %v3383, 0
  %v3400 = vsel %vm21, %v3386, 0
  %3402 = vmatpush.xpose.msra.mxu0 0.0
  %3403 = vmatpush.xpose.msra.mxu0 0.0
  %3404 = vmatpush.xpose.msra.mxu0 0.0
  %3405 = vmatpush.xpose.msra.mxu0 0.0
  %3406 = vmatpush.xpose.msra.mxu0 0.0
  %3407 = vmatpush.xpose.msra.mxu0 0.0
  %3408 = vmatpush.xpose.msra.mxu0 0.0
  %3409 = vmatpush.xpose.msra.mxu0 0.0
  %3410 = vmatpush.xpose.msra.mxu0 0.0
  %3411 = vmatpush.xpose.msra.mxu0 0.0
  %3412 = vmatpush.xpose.msra.mxu0 0.0
  %3413 = vmatpush.xpose.msra.mxu0 0.0
  %3414 = vmatpush.xpose.msra.mxu0 0.0
  %3415 = vmatpush.xpose.msra.mxu0 0.0
  %3416 = vmatpush.xpose.msra.mxu0 %v3400
  %3417 = vmatpush.xpose.msra.mxu0 %v3397
  %3418 = vmatmul.f32.gmra.mxu0 %v3391
  %v3419 = vpop.f32.mrf.mxu0
  %v3420 = vadd.f32 0.0, %v3419
  %3421 = vmatmul.f32.gmra.mxu0 %v3394
  %v3422 = vpop.f32.mrf.mxu0
  %v3423 = vadd.f32 0.0, %v3422
  %3424 = vdwg.mxu0
  %v3425 = vsel %vm30, %v3420, -1e+30
  %v3426 = vsel %vm31, %v3423, -1e+30
  %v3427 = vsel %vm297, %v3425, -inf
  %3428 = vmax.xlane.f32.xlu0 %v3427
  %v3429 = vpop.xlane.xlu0 %3428
  %v3430 = vsel %vm297, %v3426, -inf
  %3431 = vmax.xlane.f32.xlu0 %v3430
  %v3432 = vpop.xlane.xlu0 %3431
  %v3433 = vsub.f32 %v3425, %v3429
  %v3434 = vsub.f32 %v3426, %v3432
  %v3435 = vmul.f32 %v3433, 1.442695
  %v3436 = vpow.pop %v3435
  %v3437 = vmul.f32 %v3434, 1.442695
  %v3438 = vpow.pop %v3437
  %v3439 = vsel %vm297, %v3436, 0.0
  %3440 = vadd.xlane.f32.xlu0 %v3439
  %v3441 = vpop.xlane.xlu0 %3440
  %v3442 = vsel %vm297, %v3438, 0.0
  %3443 = vadd.xlane.f32.xlu0 %v3442
  %v3444 = vpop.xlane.xlu0 %3443
  %v3445 = vrcp.pop %v3441
  %v3446 = vmul.f32 %v3441, %v3445
  %v3447 = vsub.f32 1.0, %v3446
  %v3448 = vmul.f32 %v3445, %v3447
  %v3449 = vadd.f32 %v3445, %v3448
  %vm3450 = vweird.f32 %v3441
  %vm3451 = vweird.f32 %v3445
  %vm3452 = vmor %vm3450, %vm3451
  %v3453 = vsel %vm3452, %v3445, %v3449
  %v3454 = vand.u32 2147483647, %v3441
  %vm3455 = vcmp.eq.f32.partialorder %v3454, 8.507059e+37
  %v3456 = vand.u32 %v3441, 2147483648
  %v3457 = vor.u32 1.1754944e-38, %v3456
  %v3458 = vsel %vm3455, %v3457, %v3453
  %v3459 = vmul.f32 %v3436, %v3458
  %v3460 = vrcp.pop %v3444
  %v3461 = vmul.f32 %v3444, %v3460
  %v3462 = vsub.f32 1.0, %v3461
  %v3463 = vmul.f32 %v3460, %v3462
  %v3464 = vadd.f32 %v3460, %v3463
  %vm3465 = vweird.f32 %v3444
  %vm3466 = vweird.f32 %v3460
  %vm3467 = vmor %vm3465, %vm3466
  %v3468 = vsel %vm3467, %v3460, %v3464
  %v3469 = vand.u32 2147483647, %v3444
  %vm3470 = vcmp.eq.f32.partialorder %v3469, 8.507059e+37
  %v3471 = vand.u32 %v3444, 2147483648
  %v3472 = vor.u32 1.1754944e-38, %v3471
  %v3473 = vsel %vm3470, %v3472, %v3468
  %v3474 = vmul.f32 %v3438, %v3473
  %3475 = vrot.lane.b32.xlu0 %v3383, 96
  %v3476 = vpop.permute.xlu0 %3475
  %3477 = vrot.lane.b32.xlu0 %v3386, 96
  %v3478 = vpop.permute.xlu0 %3477
  %v3482 = vsel %vm297, %v3459, 0
  %v3485 = vsel %vm297, %v3474, 0
  %3487 = vmatpush.msra.mxu0 0.0
  %3488 = vmatpush.msra.mxu0 0.0
  %3489 = vmatpush.msra.mxu0 0.0
  %3490 = vmatpush.msra.mxu0 0.0
  %3491 = vmatpush.msra.mxu0 0.0
  %3492 = vmatpush.msra.mxu0 0.0
  %3493 = vmatpush.msra.mxu0 0.0
  %3494 = vmatpush.msra.mxu0 0.0
  %3495 = vmatpush.msra.mxu0 0.0
  %3496 = vmatpush.msra.mxu0 0.0
  %3497 = vmatpush.msra.mxu0 0.0
  %3498 = vmatpush.msra.mxu0 0.0
  %3499 = vmatpush.msra.mxu0 0.0
  %3500 = vmatpush.msra.mxu0 0.0
  %3501 = vmatpush.msra.mxu0 %v3478
  %3502 = vmatpush.msra.mxu0 %v3476
  %3503 = vmatmul.f32.gmra.mxu0 %v3482
  %v3504 = vpop.f32.mrf.mxu0
  %v3505 = vadd.f32 0.0, %v3504
  %3506 = vmatmul.f32.gmra.mxu0 %v3485
  %v3507 = vpop.f32.mrf.mxu0
  %v3508 = vadd.f32 0.0, %v3507
  %3509 = vdwg.mxu0
  %3510 = vrot.lane.b32.xlu0 %v3388, 120
  %v3511 = vpop.permute.xlu0 %3510
  %3512 = vrot.lane.b32.xlu0 %v3389, 120
  %v3513 = vpop.permute.xlu0 %3512
  %3514 = vrot.lane.b32.xlu0 %v3383, 120
  %v3515 = vpop.permute.xlu0 %3514
  %3516 = vrot.lane.b32.xlu0 %v3386, 120
  %v3517 = vpop.permute.xlu0 %3516
  %v3518 = vsel %vm21, %v3511, 0
  %v3520 = vsel %vm21, %v3513, 0
  %v3522 = vsel %vm21, %v3515, 0
  %v3524 = vsel %vm21, %v3517, 0
  %3526 = vmatpush.xpose.msra.mxu0 0.0
  %3527 = vmatpush.xpose.msra.mxu0 0.0
  %3528 = vmatpush.xpose.msra.mxu0 0.0
  %3529 = vmatpush.xpose.msra.mxu0 0.0
  %3530 = vmatpush.xpose.msra.mxu0 0.0
  %3531 = vmatpush.xpose.msra.mxu0 0.0
  %3532 = vmatpush.xpose.msra.mxu0 0.0
  %3533 = vmatpush.xpose.msra.mxu0 0.0
  %3534 = vmatpush.xpose.msra.mxu0 0.0
  %3535 = vmatpush.xpose.msra.mxu0 0.0
  %3536 = vmatpush.xpose.msra.mxu0 0.0
  %3537 = vmatpush.xpose.msra.mxu0 0.0
  %3538 = vmatpush.xpose.msra.mxu0 0.0
  %3539 = vmatpush.xpose.msra.mxu0 0.0
  %3540 = vmatpush.xpose.msra.mxu0 %v3524
  %3541 = vmatpush.xpose.msra.mxu0 %v3522
  %3542 = vmatmul.f32.gmra.mxu0 %v3518
  %v3543 = vpop.f32.mrf.mxu0
  %v3544 = vadd.f32 0.0, %v3543
  %3545 = vmatmul.f32.gmra.mxu0 %v3520
  %v3546 = vpop.f32.mrf.mxu0
  %v3547 = vadd.f32 0.0, %v3546
  %3548 = vdwg.mxu0
  %v3549 = vsel %vm30, %v3544, -1e+30
  %v3550 = vsel %vm31, %v3547, -1e+30
  %v3551 = vsel %vm297, %v3549, -inf
  %3552 = vmax.xlane.f32.xlu0 %v3551
  %v3553 = vpop.xlane.xlu0 %3552
  %v3554 = vsel %vm297, %v3550, -inf
  %3555 = vmax.xlane.f32.xlu0 %v3554
  %v3556 = vpop.xlane.xlu0 %3555
  %v3557 = vsub.f32 %v3549, %v3553
  %v3558 = vsub.f32 %v3550, %v3556
  %v3559 = vmul.f32 %v3557, 1.442695
  %v3560 = vpow.pop %v3559
  %v3561 = vmul.f32 %v3558, 1.442695
  %v3562 = vpow.pop %v3561
  %v3563 = vsel %vm297, %v3560, 0.0
  %3564 = vadd.xlane.f32.xlu0 %v3563
  %v3565 = vpop.xlane.xlu0 %3564
  %v3566 = vsel %vm297, %v3562, 0.0
  %3567 = vadd.xlane.f32.xlu0 %v3566
  %v3568 = vpop.xlane.xlu0 %3567
  %v3569 = vrcp.pop %v3565
  %v3570 = vmul.f32 %v3565, %v3569
  %v3571 = vsub.f32 1.0, %v3570
  %v3572 = vmul.f32 %v3569, %v3571
  %v3573 = vadd.f32 %v3569, %v3572
  %vm3574 = vweird.f32 %v3565
  %vm3575 = vweird.f32 %v3569
  %vm3576 = vmor %vm3574, %vm3575
  %v3577 = vsel %vm3576, %v3569, %v3573
  %v3578 = vand.u32 2147483647, %v3565
  %vm3579 = vcmp.eq.f32.partialorder %v3578, 8.507059e+37
  %v3580 = vand.u32 %v3565, 2147483648
  %v3581 = vor.u32 1.1754944e-38, %v3580
  %v3582 = vsel %vm3579, %v3581, %v3577
  %v3583 = vmul.f32 %v3560, %v3582
  %v3584 = vrcp.pop %v3568
  %v3585 = vmul.f32 %v3568, %v3584
  %v3586 = vsub.f32 1.0, %v3585
  %v3587 = vmul.f32 %v3584, %v3586
  %v3588 = vadd.f32 %v3584, %v3587
  %vm3589 = vweird.f32 %v3568
  %vm3590 = vweird.f32 %v3584
  %vm3591 = vmor %vm3589, %vm3590
  %v3592 = vsel %vm3591, %v3584, %v3588
  %v3593 = vand.u32 2147483647, %v3568
  %vm3594 = vcmp.eq.f32.partialorder %v3593, 8.507059e+37
  %v3595 = vand.u32 %v3568, 2147483648
  %v3596 = vor.u32 1.1754944e-38, %v3595
  %v3597 = vsel %vm3594, %v3596, %v3592
  %v3598 = vmul.f32 %v3562, %v3597
  %3599 = vrot.lane.b32.xlu0 %v3383, 88
  %v3600 = vpop.permute.xlu0 %3599
  %3601 = vrot.lane.b32.xlu0 %v3386, 88
  %v3602 = vpop.permute.xlu0 %3601
  %v3606 = vsel %vm297, %v3583, 0
  %v3609 = vsel %vm297, %v3598, 0
  %3611 = vmatpush.msra.mxu0 0.0
  %3612 = vmatpush.msra.mxu0 0.0
  %3613 = vmatpush.msra.mxu0 0.0
  %3614 = vmatpush.msra.mxu0 0.0
  %3615 = vmatpush.msra.mxu0 0.0
  %3616 = vmatpush.msra.mxu0 0.0
  %3617 = vmatpush.msra.mxu0 0.0
  %3618 = vmatpush.msra.mxu0 0.0
  %3619 = vmatpush.msra.mxu0 0.0
  %3620 = vmatpush.msra.mxu0 0.0
  %3621 = vmatpush.msra.mxu0 0.0
  %3622 = vmatpush.msra.mxu0 0.0
  %3623 = vmatpush.msra.mxu0 0.0
  %3624 = vmatpush.msra.mxu0 0.0
  %3625 = vmatpush.msra.mxu0 %v3602
  %3626 = vmatpush.msra.mxu0 %v3600
  %3627 = vmatmul.f32.gmra.mxu0 %v3606
  %v3628 = vpop.f32.mrf.mxu0
  %v3629 = vadd.f32 0.0, %v3628
  %3630 = vmatmul.f32.gmra.mxu0 %v3609
  %v3631 = vpop.f32.mrf.mxu0
  %v3632 = vadd.f32 0.0, %v3631
  %3633 = vdwg.mxu0
  %3634 = vrot.lane.b32.xlu0 %v3388, 112
  %v3635 = vpop.permute.xlu0 %3634
  %3636 = vrot.lane.b32.xlu0 %v3389, 112
  %v3637 = vpop.permute.xlu0 %3636
  %3638 = vrot.lane.b32.xlu0 %v3383, 112
  %v3639 = vpop.permute.xlu0 %3638
  %3640 = vrot.lane.b32.xlu0 %v3386, 112
  %v3641 = vpop.permute.xlu0 %3640
  %v3642 = vsel %vm21, %v3635, 0
  %v3644 = vsel %vm21, %v3637, 0
  %v3646 = vsel %vm21, %v3639, 0
  %v3648 = vsel %vm21, %v3641, 0
  %3650 = vmatpush.xpose.msra.mxu0 0.0
  %3651 = vmatpush.xpose.msra.mxu0 0.0
  %3652 = vmatpush.xpose.msra.mxu0 0.0
  %3653 = vmatpush.xpose.msra.mxu0 0.0
  %3654 = vmatpush.xpose.msra.mxu0 0.0
  %3655 = vmatpush.xpose.msra.mxu0 0.0
  %3656 = vmatpush.xpose.msra.mxu0 0.0
  %3657 = vmatpush.xpose.msra.mxu0 0.0
  %3658 = vmatpush.xpose.msra.mxu0 0.0
  %3659 = vmatpush.xpose.msra.mxu0 0.0
  %3660 = vmatpush.xpose.msra.mxu0 0.0
  %3661 = vmatpush.xpose.msra.mxu0 0.0
  %3662 = vmatpush.xpose.msra.mxu0 0.0
  %3663 = vmatpush.xpose.msra.mxu0 0.0
  %3664 = vmatpush.xpose.msra.mxu0 %v3648
  %3665 = vmatpush.xpose.msra.mxu0 %v3646
  %3666 = vmatmul.f32.gmra.mxu0 %v3642
  %v3667 = vpop.f32.mrf.mxu0
  %v3668 = vadd.f32 0.0, %v3667
  %3669 = vmatmul.f32.gmra.mxu0 %v3644
  %v3670 = vpop.f32.mrf.mxu0
  %v3671 = vadd.f32 0.0, %v3670
  %3672 = vdwg.mxu0
  %v3673 = vsel %vm30, %v3668, -1e+30
  %v3674 = vsel %vm31, %v3671, -1e+30
  %v3675 = vsel %vm297, %v3673, -inf
  %3676 = vmax.xlane.f32.xlu0 %v3675
  %v3677 = vpop.xlane.xlu0 %3676
  %v3678 = vsel %vm297, %v3674, -inf
  %3679 = vmax.xlane.f32.xlu0 %v3678
  %v3680 = vpop.xlane.xlu0 %3679
  %v3681 = vsub.f32 %v3673, %v3677
  %v3682 = vsub.f32 %v3674, %v3680
  %v3683 = vmul.f32 %v3681, 1.442695
  %v3684 = vpow.pop %v3683
  %v3685 = vmul.f32 %v3682, 1.442695
  %v3686 = vpow.pop %v3685
  %v3687 = vsel %vm297, %v3684, 0.0
  %3688 = vadd.xlane.f32.xlu0 %v3687
  %v3689 = vpop.xlane.xlu0 %3688
  %v3690 = vsel %vm297, %v3686, 0.0
  %3691 = vadd.xlane.f32.xlu0 %v3690
  %v3692 = vpop.xlane.xlu0 %3691
  %v3693 = vrcp.pop %v3689
  %v3694 = vmul.f32 %v3689, %v3693
  %v3695 = vsub.f32 1.0, %v3694
  %v3696 = vmul.f32 %v3693, %v3695
  %v3697 = vadd.f32 %v3693, %v3696
  %vm3698 = vweird.f32 %v3689
  %vm3699 = vweird.f32 %v3693
  %vm3700 = vmor %vm3698, %vm3699
  %v3701 = vsel %vm3700, %v3693, %v3697
  %v3702 = vand.u32 2147483647, %v3689
  %vm3703 = vcmp.eq.f32.partialorder %v3702, 8.507059e+37
  %v3704 = vand.u32 %v3689, 2147483648
  %v3705 = vor.u32 1.1754944e-38, %v3704
  %v3706 = vsel %vm3703, %v3705, %v3701
  %v3707 = vmul.f32 %v3684, %v3706
  %v3708 = vrcp.pop %v3692
  %v3709 = vmul.f32 %v3692, %v3708
  %v3710 = vsub.f32 1.0, %v3709
  %v3711 = vmul.f32 %v3708, %v3710
  %v3712 = vadd.f32 %v3708, %v3711
  %vm3713 = vweird.f32 %v3692
  %vm3714 = vweird.f32 %v3708
  %vm3715 = vmor %vm3713, %vm3714
  %v3716 = vsel %vm3715, %v3708, %v3712
  %v3717 = vand.u32 2147483647, %v3692
  %vm3718 = vcmp.eq.f32.partialorder %v3717, 8.507059e+37
  %v3719 = vand.u32 %v3692, 2147483648
  %v3720 = vor.u32 1.1754944e-38, %v3719
  %v3721 = vsel %vm3718, %v3720, %v3716
  %v3722 = vmul.f32 %v3686, %v3721
  %3723 = vrot.lane.b32.xlu0 %v3383, 80
  %v3724 = vpop.permute.xlu0 %3723
  %3725 = vrot.lane.b32.xlu0 %v3386, 80
  %v3726 = vpop.permute.xlu0 %3725
  %v3730 = vsel %vm297, %v3707, 0
  %v3733 = vsel %vm297, %v3722, 0
  %3735 = vmatpush.msra.mxu0 0.0
  %3736 = vmatpush.msra.mxu0 0.0
  %3737 = vmatpush.msra.mxu0 0.0
  %3738 = vmatpush.msra.mxu0 0.0
  %3739 = vmatpush.msra.mxu0 0.0
  %3740 = vmatpush.msra.mxu0 0.0
  %3741 = vmatpush.msra.mxu0 0.0
  %3742 = vmatpush.msra.mxu0 0.0
  %3743 = vmatpush.msra.mxu0 0.0
  %3744 = vmatpush.msra.mxu0 0.0
  %3745 = vmatpush.msra.mxu0 0.0
  %3746 = vmatpush.msra.mxu0 0.0
  %3747 = vmatpush.msra.mxu0 0.0
  %3748 = vmatpush.msra.mxu0 0.0
  %3749 = vmatpush.msra.mxu0 %v3726
  %3750 = vmatpush.msra.mxu0 %v3724
  %3751 = vmatmul.f32.gmra.mxu0 %v3730
  %v3752 = vpop.f32.mrf.mxu0
  %v3753 = vadd.f32 0.0, %v3752
  %3754 = vmatmul.f32.gmra.mxu0 %v3733
  %v3755 = vpop.f32.mrf.mxu0
  %v3756 = vadd.f32 0.0, %v3755
  %3757 = vdwg.mxu0
  %3758 = vrot.lane.b32.xlu0 %v3388, 104
  %v3759 = vpop.permute.xlu0 %3758
  %3760 = vrot.lane.b32.xlu0 %v3389, 104
  %v3761 = vpop.permute.xlu0 %3760
  %3762 = vrot.lane.b32.xlu0 %v3383, 104
  %v3763 = vpop.permute.xlu0 %3762
  %3764 = vrot.lane.b32.xlu0 %v3386, 104
  %v3765 = vpop.permute.xlu0 %3764
  %v3766 = vsel %vm21, %v3759, 0
  %v3768 = vsel %vm21, %v3761, 0
  %v3770 = vsel %vm21, %v3763, 0
  %v3772 = vsel %vm21, %v3765, 0
  %3774 = vmatpush.xpose.msra.mxu0 0.0
  %3775 = vmatpush.xpose.msra.mxu0 0.0
  %3776 = vmatpush.xpose.msra.mxu0 0.0
  %3777 = vmatpush.xpose.msra.mxu0 0.0
  %3778 = vmatpush.xpose.msra.mxu0 0.0
  %3779 = vmatpush.xpose.msra.mxu0 0.0
  %3780 = vmatpush.xpose.msra.mxu0 0.0
  %3781 = vmatpush.xpose.msra.mxu0 0.0
  %3782 = vmatpush.xpose.msra.mxu0 0.0
  %3783 = vmatpush.xpose.msra.mxu0 0.0
  %3784 = vmatpush.xpose.msra.mxu0 0.0
  %3785 = vmatpush.xpose.msra.mxu0 0.0
  %3786 = vmatpush.xpose.msra.mxu0 0.0
  %3787 = vmatpush.xpose.msra.mxu0 0.0
  %3788 = vmatpush.xpose.msra.mxu0 %v3772
  %3789 = vmatpush.xpose.msra.mxu0 %v3770
  %3790 = vmatmul.f32.gmra.mxu0 %v3766
  %v3791 = vpop.f32.mrf.mxu0
  %v3792 = vadd.f32 0.0, %v3791
  %3793 = vmatmul.f32.gmra.mxu0 %v3768
  %v3794 = vpop.f32.mrf.mxu0
  %v3795 = vadd.f32 0.0, %v3794
  %3796 = vdwg.mxu0
  %v3797 = vsel %vm30, %v3792, -1e+30
  %v3798 = vsel %vm31, %v3795, -1e+30
  %v3799 = vsel %vm297, %v3797, -inf
  %3800 = vmax.xlane.f32.xlu0 %v3799
  %v3801 = vpop.xlane.xlu0 %3800
  %v3802 = vsel %vm297, %v3798, -inf
  %3803 = vmax.xlane.f32.xlu0 %v3802
  %v3804 = vpop.xlane.xlu0 %3803
  %v3805 = vsub.f32 %v3797, %v3801
  %v3806 = vsub.f32 %v3798, %v3804
  %v3807 = vmul.f32 %v3805, 1.442695
  %v3808 = vpow.pop %v3807
  %v3809 = vmul.f32 %v3806, 1.442695
  %v3810 = vpow.pop %v3809
  %v3811 = vsel %vm297, %v3808, 0.0
  %3812 = vadd.xlane.f32.xlu0 %v3811
  %v3813 = vpop.xlane.xlu0 %3812
  %v3814 = vsel %vm297, %v3810, 0.0
  %3815 = vadd.xlane.f32.xlu0 %v3814
  %v3816 = vpop.xlane.xlu0 %3815
  %v3817 = vrcp.pop %v3813
  %v3818 = vmul.f32 %v3813, %v3817
  %v3819 = vsub.f32 1.0, %v3818
  %v3820 = vmul.f32 %v3817, %v3819
  %v3821 = vadd.f32 %v3817, %v3820
  %vm3822 = vweird.f32 %v3813
  %vm3823 = vweird.f32 %v3817
  %vm3824 = vmor %vm3822, %vm3823
  %v3825 = vsel %vm3824, %v3817, %v3821
  %v3826 = vand.u32 2147483647, %v3813
  %vm3827 = vcmp.eq.f32.partialorder %v3826, 8.507059e+37
  %v3828 = vand.u32 %v3813, 2147483648
  %v3829 = vor.u32 1.1754944e-38, %v3828
  %v3830 = vsel %vm3827, %v3829, %v3825
  %v3831 = vmul.f32 %v3808, %v3830
  %v3832 = vrcp.pop %v3816
  %v3833 = vmul.f32 %v3816, %v3832
  %v3834 = vsub.f32 1.0, %v3833
  %v3835 = vmul.f32 %v3832, %v3834
  %v3836 = vadd.f32 %v3832, %v3835
  %vm3837 = vweird.f32 %v3816
  %vm3838 = vweird.f32 %v3832
  %vm3839 = vmor %vm3837, %vm3838
  %v3840 = vsel %vm3839, %v3832, %v3836
  %v3841 = vand.u32 2147483647, %v3816
  %vm3842 = vcmp.eq.f32.partialorder %v3841, 8.507059e+37
  %v3843 = vand.u32 %v3816, 2147483648
  %v3844 = vor.u32 1.1754944e-38, %v3843
  %v3845 = vsel %vm3842, %v3844, %v3840
  %v3846 = vmul.f32 %v3810, %v3845
  %3847 = vrot.lane.b32.xlu0 %v3383, 72
  %v3848 = vpop.permute.xlu0 %3847
  %3849 = vrot.lane.b32.xlu0 %v3386, 72
  %v3850 = vpop.permute.xlu0 %3849
  %v3854 = vsel %vm297, %v3831, 0
  %v3857 = vsel %vm297, %v3846, 0
  %3859 = vmatpush.msra.mxu0 0.0
  %3860 = vmatpush.msra.mxu0 0.0
  %3861 = vmatpush.msra.mxu0 0.0
  %3862 = vmatpush.msra.mxu0 0.0
  %3863 = vmatpush.msra.mxu0 0.0
  %3864 = vmatpush.msra.mxu0 0.0
  %3865 = vmatpush.msra.mxu0 0.0
  %3866 = vmatpush.msra.mxu0 0.0
  %3867 = vmatpush.msra.mxu0 0.0
  %3868 = vmatpush.msra.mxu0 0.0
  %3869 = vmatpush.msra.mxu0 0.0
  %3870 = vmatpush.msra.mxu0 0.0
  %3871 = vmatpush.msra.mxu0 0.0
  %3872 = vmatpush.msra.mxu0 0.0
  %3873 = vmatpush.msra.mxu0 %v3850
  %3874 = vmatpush.msra.mxu0 %v3848
  %3875 = vmatmul.f32.gmra.mxu0 %v3854
  %v3876 = vpop.f32.mrf.mxu0
  %v3877 = vadd.f32 0.0, %v3876
  %3878 = vmatmul.f32.gmra.mxu0 %v3857
  %v3879 = vpop.f32.mrf.mxu0
  %v3880 = vadd.f32 0.0, %v3879
  %3881 = vdwg.mxu0
  %3884 = vrot.lane.b32.xlu0 %v3629, 8
  %v3885 = vpop.permute.xlu0 %3884
  %3886 = vrot.lane.b32.xlu0 %v3632, 8
  %v3887 = vpop.permute.xlu0 %3886
  %3892 = vrot.lane.b32.xlu0 %v3753, 16
  %v3893 = vpop.permute.xlu0 %3892
  %3894 = vrot.lane.b32.xlu0 %v3756, 16
  %v3895 = vpop.permute.xlu0 %3894
  %3900 = vrot.lane.b32.xlu0 %v3877, 24
  %v3901 = vpop.permute.xlu0 %3900
  %3902 = vrot.lane.b32.xlu0 %v3880, 24
  %v3903 = vpop.permute.xlu0 %3902
  %v3906 = vsel %vm21, %v3505, %v3885
  %v3907 = vsel %vm21, %v3508, %v3887
  %v3908 = vsel %vm297, %v3906, %v3893
  %v3909 = vsel %vm297, %v3907, %v3895
  %v3910 = vsel %vm781, %v3908, %v3901
  %v3911 = vsel %vm781, %v3909, %v3903
  %v3912 = vperm.slane %v3308, 0
  %3913 = vrot.lane.b32.xlu0 %v3303, 32
  %v3914 = vpop.permute.xlu0 %3913
  %3915 = vrot.lane.b32.xlu0 %v3304, 32
  %v3916 = vpop.permute.xlu0 %3915
  %3917 = vrot.lane.b32.xlu0 %v3305, 32
  %v3918 = vpop.permute.xlu0 %3917
  %3919 = vrot.lane.b32.xlu0 %v3306, 32
  %v3920 = vpop.permute.xlu0 %3919
  %v3926 = vsel %vm71, %v3910, 0
  %v3929 = vsel %vm71, %v3911, 0
  %3931 = vmatpush.msra.mxu0 0.0
  %3932 = vmatpush.msra.mxu0 0.0
  %3933 = vmatpush.msra.mxu0 0.0
  %3934 = vmatpush.msra.mxu0 0.0
  %3935 = vmatpush.msra.mxu0 0.0
  %3936 = vmatpush.msra.mxu0 0.0
  %3937 = vmatpush.msra.mxu0 0.0
  %3938 = vmatpush.msra.mxu0 0.0
  %3939 = vmatpush.msra.mxu0 0.0
  %3940 = vmatpush.msra.mxu0 0.0
  %3941 = vmatpush.msra.mxu0 0.0
  %3942 = vmatpush.msra.mxu0 0.0
  %3943 = vmatpush.msra.mxu0 %v3920
  %3944 = vmatpush.msra.mxu0 %v3918
  %3945 = vmatpush.msra.mxu0 %v3916
  %3946 = vmatpush.msra.mxu0 %v3914
  %3947 = vmatmul.f32.gmra.mxu0 %v3926
  %v3948 = vpop.f32.mrf.mxu0
  %v3949 = vadd.f32 %v3912, %v3948
  %3950 = vmatmul.f32.gmra.mxu0 %v3929
  %v3951 = vpop.f32.mrf.mxu0
  %v3952 = vadd.f32 %v3912, %v3951
  %3953 = vdwg.mxu0
  %v3954 = vadd.f32 %v3949, %v3300
  %v3955 = vadd.f32 %v3952, %v3301
  %v3956 = vld [vmem:[%s3 + $0x20] sm:$0x1]
  %v3957 = vld [vmem:[%s3 + $0x21] sm:$0x1]
  %v3958 = vsel %vm71, %v3954, 0.0
  %3959 = vadd.xlane.f32.xlu0 %v3958
  %v3960 = vpop.xlane.xlu0 %3959
  %v3961 = vsel %vm71, %v3955, 0.0
  %3962 = vadd.xlane.f32.xlu0 %v3961
  %v3963 = vpop.xlane.xlu0 %3962
  %v3964 = vmul.f32 %v3960, %v136
  %v3965 = vmul.f32 %v3963, %v136
  %v3966 = vsub.f32 %v3954, %v3964
  %v3967 = vsub.f32 %v3955, %v3965
  %v3968 = vmul.f32 %v3966, %v3966
  %v3969 = vmul.f32 %v3967, %v3967
  %v3970 = vsel %vm71, %v3968, 0.0
  %3971 = vadd.xlane.f32.xlu0 %v3970
  %v3972 = vpop.xlane.xlu0 %3971
  %v3973 = vsel %vm71, %v3969, 0.0
  %3974 = vadd.xlane.f32.xlu0 %v3973
  %v3975 = vpop.xlane.xlu0 %3974
  %v3976 = vmul.f32 %v3972, %v136
  %v3977 = vmul.f32 %v3975, %v136
  %v3978 = vadd.f32 %v3976, 1e-05
  %v3979 = vadd.f32 %v3977, 1e-05
  %v3980 = vrsqrt.pop %v3978
  %v3981 = vmul.f32 %v3980, %v3978
  %v3982 = vmul.f32 %v3981, %v3980
  %v3983 = vmul.f32 0.5, %v3982
  %v3984 = vsub.f32 1.5, %v3983
  %v3985 = vmul.f32 %v3980, %v3984
  %vm3986 = vweird.f32 %v3978
  %vm3987 = vweird.f32 %v3980
  %vm3988 = vmor %vm3986, %vm3987
  %v3989 = vsel %vm3988, %v3980, %v3985
  %v3990 = vrsqrt.pop %v3979
  %v3991 = vmul.f32 %v3990, %v3979
  %v3992 = vmul.f32 %v3991, %v3990
  %v3993 = vmul.f32 0.5, %v3992
  %v3994 = vsub.f32 1.5, %v3993
  %v3995 = vmul.f32 %v3990, %v3994
  %vm3996 = vweird.f32 %v3979
  %vm3997 = vweird.f32 %v3990
  %vm3998 = vmor %vm3996, %vm3997
  %v3999 = vsel %vm3998, %v3990, %v3995
  %v4000 = vmul.f32 %v3966, %v3989
  %v4001 = vmul.f32 %v3967, %v3999
  %v4002 = vperm.slane %v3956, 0
  %v4003 = vmul.f32 %v4000, %v4002
  %v4004 = vmul.f32 %v4001, %v4002
  %v4005 = vperm.slane %v3957, 0
  %v4006 = vadd.f32 %v4003, %v4005
  %v4007 = vadd.f32 %v4004, %v4005
  %s4008 = scalar_lea.vmem %s1, 160
  %v4009 = vld [vmem:[%s4008] sm:$0xff]
  %v4010 = vld [vmem:[%s4008 + $0x8] sm:$0xff]
  %v4011 = vld [vmem:[%s4008 + $0x10] sm:$0xff]
  %v4012 = vld [vmem:[%s4008 + $0x18] sm:$0xff]
  %v4013 = vld [vmem:[%s3 + $0x19] sm:$0x1]
  %v4014 = vld [vmem:[%s3 + $0x1a] sm:$0x1]
  %v4015 = vperm.slane %v4013, 0
  %4016 = vmatpush.msra.mxu0 0.0
  %4017 = vmatpush.msra.mxu0 0.0
  %4018 = vmatpush.msra.mxu0 0.0
  %4019 = vmatpush.msra.mxu0 0.0
  %4020 = vmatpush.msra.mxu0 0.0
  %4021 = vmatpush.msra.mxu0 0.0
  %4022 = vmatpush.msra.mxu0 0.0
  %4023 = vmatpush.msra.mxu0 0.0
  %4024 = vmatpush.msra.mxu0 0.0
  %4025 = vmatpush.msra.mxu0 0.0
  %4026 = vmatpush.msra.mxu0 0.0
  %4027 = vmatpush.msra.mxu0 0.0
  %4028 = vmatpush.msra.mxu0 %v4012
  %4029 = vmatpush.msra.mxu0 %v4011
  %4030 = vmatpush.msra.mxu0 %v4010
  %4031 = vmatpush.msra.mxu0 %v4009
  %4032 = vmatmul.f32.gmra.mxu0 %v3360
  %v4033 = vpop.f32.mrf.mxu0
  %v4034 = vadd.f32 %v4015, %v4033
  %4035 = vmatmul.f32.gmra.mxu0 %v3363
  %v4036 = vpop.f32.mrf.mxu0
  %v4037 = vadd.f32 %v4015, %v4036
  %4038 = vdwg.mxu0
  %4043 = vrot.lane.b32.xlu0 %v4009, 96
  %v4044 = vpop.permute.xlu0 %4043
  %4045 = vrot.lane.b32.xlu0 %v4010, 96
  %v4046 = vpop.permute.xlu0 %4045
  %4047 = vrot.lane.b32.xlu0 %v4011, 96
  %v4048 = vpop.permute.xlu0 %4047
  %4049 = vrot.lane.b32.xlu0 %v4012, 96
  %v4050 = vpop.permute.xlu0 %4049
  %4056 = vrot.lane.b32.xlu0 %v4015, 96
  %v4057 = vpop.permute.xlu0 %4056
  %4059 = vmatpush.msra.mxu0 0.0
  %4060 = vmatpush.msra.mxu0 0.0
  %4061 = vmatpush.msra.mxu0 0.0
  %4062 = vmatpush.msra.mxu0 0.0
  %4063 = vmatpush.msra.mxu0 0.0
  %4064 = vmatpush.msra.mxu0 0.0
  %4065 = vmatpush.msra.mxu0 0.0
  %4066 = vmatpush.msra.mxu0 0.0
  %4067 = vmatpush.msra.mxu0 0.0
  %4068 = vmatpush.msra.mxu0 0.0
  %4069 = vmatpush.msra.mxu0 0.0
  %4070 = vmatpush.msra.mxu0 0.0
  %4071 = vmatpush.msra.mxu0 %v4050
  %4072 = vmatpush.msra.mxu0 %v4048
  %4073 = vmatpush.msra.mxu0 %v4046
  %4074 = vmatpush.msra.mxu0 %v4044
  %4075 = vmatmul.f32.gmra.mxu0 %v3311
  %v4076 = vpop.f32.mrf.mxu0
  %v4077 = vadd.f32 %v4057, %v4076
  %4078 = vmatmul.f32.gmra.mxu0 %v3314
  %v4079 = vpop.f32.mrf.mxu0
  %v4080 = vadd.f32 %v4057, %v4079
  %4081 = vdwg.mxu0
  %v4082 = vmul.f32 %v4034, 0.35355338
  %v4083 = vmul.f32 %v4037, 0.35355338
  %v4085 = vsel %vm21, %v4082, 0
  %v4088 = vsel %vm21, %v4083, 0
  %v4091 = vsel %vm21, %v4077, 0
  %v4094 = vsel %vm21, %v4080, 0
  %4096 = vmatpush.xpose.msra.mxu0 0.0
  %4097 = vmatpush.xpose.msra.mxu0 0.0
  %4098 = vmatpush.xpose.msra.mxu0 0.0
  %4099 = vmatpush.xpose.msra.mxu0 0.0
  %4100 = vmatpush.xpose.msra.mxu0 0.0
  %4101 = vmatpush.xpose.msra.mxu0 0.0
  %4102 = vmatpush.xpose.msra.mxu0 0.0
  %4103 = vmatpush.xpose.msra.mxu0 0.0
  %4104 = vmatpush.xpose.msra.mxu0 0.0
  %4105 = vmatpush.xpose.msra.mxu0 0.0
  %4106 = vmatpush.xpose.msra.mxu0 0.0
  %4107 = vmatpush.xpose.msra.mxu0 0.0
  %4108 = vmatpush.xpose.msra.mxu0 0.0
  %4109 = vmatpush.xpose.msra.mxu0 0.0
  %4110 = vmatpush.xpose.msra.mxu0 %v4094
  %4111 = vmatpush.xpose.msra.mxu0 %v4091
  %4112 = vmatmul.f32.gmra.mxu0 %v4085
  %v4113 = vpop.f32.mrf.mxu0
  %v4114 = vadd.f32 0.0, %v4113
  %4115 = vmatmul.f32.gmra.mxu0 %v4088
  %v4116 = vpop.f32.mrf.mxu0
  %v4117 = vadd.f32 0.0, %v4116
  %4118 = vdwg.mxu0
  %v4119 = vsel %vm30, %v4114, -1e+30
  %v4120 = vsel %vm31, %v4117, -1e+30
  %v4121 = vsel %vm297, %v4119, -inf
  %4122 = vmax.xlane.f32.xlu0 %v4121
  %v4123 = vpop.xlane.xlu0 %4122
  %v4124 = vsel %vm297, %v4120, -inf
  %4125 = vmax.xlane.f32.xlu0 %v4124
  %v4126 = vpop.xlane.xlu0 %4125
  %v4127 = vsub.f32 %v4119, %v4123
  %v4128 = vsub.f32 %v4120, %v4126
  %v4129 = vmul.f32 %v4127, 1.442695
  %v4130 = vpow.pop %v4129
  %v4131 = vmul.f32 %v4128, 1.442695
  %v4132 = vpow.pop %v4131
  %v4133 = vsel %vm297, %v4130, 0.0
  %4134 = vadd.xlane.f32.xlu0 %v4133
  %v4135 = vpop.xlane.xlu0 %4134
  %v4136 = vsel %vm297, %v4132, 0.0
  %4137 = vadd.xlane.f32.xlu0 %v4136
  %v4138 = vpop.xlane.xlu0 %4137
  %v4139 = vrcp.pop %v4135
  %v4140 = vmul.f32 %v4135, %v4139
  %v4141 = vsub.f32 1.0, %v4140
  %v4142 = vmul.f32 %v4139, %v4141
  %v4143 = vadd.f32 %v4139, %v4142
  %vm4144 = vweird.f32 %v4135
  %vm4145 = vweird.f32 %v4139
  %vm4146 = vmor %vm4144, %vm4145
  %v4147 = vsel %vm4146, %v4139, %v4143
  %v4148 = vand.u32 2147483647, %v4135
  %vm4149 = vcmp.eq.f32.partialorder %v4148, 8.507059e+37
  %v4150 = vand.u32 %v4135, 2147483648
  %v4151 = vor.u32 1.1754944e-38, %v4150
  %v4152 = vsel %vm4149, %v4151, %v4147
  %v4153 = vmul.f32 %v4130, %v4152
  %v4154 = vrcp.pop %v4138
  %v4155 = vmul.f32 %v4138, %v4154
  %v4156 = vsub.f32 1.0, %v4155
  %v4157 = vmul.f32 %v4154, %v4156
  %v4158 = vadd.f32 %v4154, %v4157
  %vm4159 = vweird.f32 %v4138
  %vm4160 = vweird.f32 %v4154
  %vm4161 = vmor %vm4159, %vm4160
  %v4162 = vsel %vm4161, %v4154, %v4158
  %v4163 = vand.u32 2147483647, %v4138
  %vm4164 = vcmp.eq.f32.partialorder %v4163, 8.507059e+37
  %v4165 = vand.u32 %v4138, 2147483648
  %v4166 = vor.u32 1.1754944e-38, %v4165
  %v4167 = vsel %vm4164, %v4166, %v4162
  %v4168 = vmul.f32 %v4132, %v4167
  %4169 = vrot.lane.b32.xlu0 %v4077, 96
  %v4170 = vpop.permute.xlu0 %4169
  %4171 = vrot.lane.b32.xlu0 %v4080, 96
  %v4172 = vpop.permute.xlu0 %4171
  %v4176 = vsel %vm297, %v4153, 0
  %v4179 = vsel %vm297, %v4168, 0
  %4181 = vmatpush.msra.mxu0 0.0
  %4182 = vmatpush.msra.mxu0 0.0
  %4183 = vmatpush.msra.mxu0 0.0
  %4184 = vmatpush.msra.mxu0 0.0
  %4185 = vmatpush.msra.mxu0 0.0
  %4186 = vmatpush.msra.mxu0 0.0
  %4187 = vmatpush.msra.mxu0 0.0
  %4188 = vmatpush.msra.mxu0 0.0
  %4189 = vmatpush.msra.mxu0 0.0
  %4190 = vmatpush.msra.mxu0 0.0
  %4191 = vmatpush.msra.mxu0 0.0
  %4192 = vmatpush.msra.mxu0 0.0
  %4193 = vmatpush.msra.mxu0 0.0
  %4194 = vmatpush.msra.mxu0 0.0
  %4195 = vmatpush.msra.mxu0 %v4172
  %4196 = vmatpush.msra.mxu0 %v4170
  %4197 = vmatmul.f32.gmra.mxu0 %v4176
  %v4198 = vpop.f32.mrf.mxu0
  %v4199 = vadd.f32 0.0, %v4198
  %4200 = vmatmul.f32.gmra.mxu0 %v4179
  %v4201 = vpop.f32.mrf.mxu0
  %v4202 = vadd.f32 0.0, %v4201
  %4203 = vdwg.mxu0
  %4204 = vrot.lane.b32.xlu0 %v4082, 120
  %v4205 = vpop.permute.xlu0 %4204
  %4206 = vrot.lane.b32.xlu0 %v4083, 120
  %v4207 = vpop.permute.xlu0 %4206
  %4208 = vrot.lane.b32.xlu0 %v4077, 120
  %v4209 = vpop.permute.xlu0 %4208
  %4210 = vrot.lane.b32.xlu0 %v4080, 120
  %v4211 = vpop.permute.xlu0 %4210
  %v4212 = vsel %vm21, %v4205, 0
  %v4214 = vsel %vm21, %v4207, 0
  %v4216 = vsel %vm21, %v4209, 0
  %v4218 = vsel %vm21, %v4211, 0
  %4220 = vmatpush.xpose.msra.mxu0 0.0
  %4221 = vmatpush.xpose.msra.mxu0 0.0
  %4222 = vmatpush.xpose.msra.mxu0 0.0
  %4223 = vmatpush.xpose.msra.mxu0 0.0
  %4224 = vmatpush.xpose.msra.mxu0 0.0
  %4225 = vmatpush.xpose.msra.mxu0 0.0
  %4226 = vmatpush.xpose.msra.mxu0 0.0
  %4227 = vmatpush.xpose.msra.mxu0 0.0
  %4228 = vmatpush.xpose.msra.mxu0 0.0
  %4229 = vmatpush.xpose.msra.mxu0 0.0
  %4230 = vmatpush.xpose.msra.mxu0 0.0
  %4231 = vmatpush.xpose.msra.mxu0 0.0
  %4232 = vmatpush.xpose.msra.mxu0 0.0
  %4233 = vmatpush.xpose.msra.mxu0 0.0
  %4234 = vmatpush.xpose.msra.mxu0 %v4218
  %4235 = vmatpush.xpose.msra.mxu0 %v4216
  %4236 = vmatmul.f32.gmra.mxu0 %v4212
  %v4237 = vpop.f32.mrf.mxu0
  %v4238 = vadd.f32 0.0, %v4237
  %4239 = vmatmul.f32.gmra.mxu0 %v4214
  %v4240 = vpop.f32.mrf.mxu0
  %v4241 = vadd.f32 0.0, %v4240
  %4242 = vdwg.mxu0
  %v4243 = vsel %vm30, %v4238, -1e+30
  %v4244 = vsel %vm31, %v4241, -1e+30
  %v4245 = vsel %vm297, %v4243, -inf
  %4246 = vmax.xlane.f32.xlu0 %v4245
  %v4247 = vpop.xlane.xlu0 %4246
  %v4248 = vsel %vm297, %v4244, -inf
  %4249 = vmax.xlane.f32.xlu0 %v4248
  %v4250 = vpop.xlane.xlu0 %4249
  %v4251 = vsub.f32 %v4243, %v4247
  %v4252 = vsub.f32 %v4244, %v4250
  %v4253 = vmul.f32 %v4251, 1.442695
  %v4254 = vpow.pop %v4253
  %v4255 = vmul.f32 %v4252, 1.442695
  %v4256 = vpow.pop %v4255
  %v4257 = vsel %vm297, %v4254, 0.0
  %4258 = vadd.xlane.f32.xlu0 %v4257
  %v4259 = vpop.xlane.xlu0 %4258
  %v4260 = vsel %vm297, %v4256, 0.0
  %4261 = vadd.xlane.f32.xlu0 %v4260
  %v4262 = vpop.xlane.xlu0 %4261
  %v4263 = vrcp.pop %v4259
  %v4264 = vmul.f32 %v4259, %v4263
  %v4265 = vsub.f32 1.0, %v4264
  %v4266 = vmul.f32 %v4263, %v4265
  %v4267 = vadd.f32 %v4263, %v4266
  %vm4268 = vweird.f32 %v4259
  %vm4269 = vweird.f32 %v4263
  %vm4270 = vmor %vm4268, %vm4269
  %v4271 = vsel %vm4270, %v4263, %v4267
  %v4272 = vand.u32 2147483647, %v4259
  %vm4273 = vcmp.eq.f32.partialorder %v4272, 8.507059e+37
  %v4274 = vand.u32 %v4259, 2147483648
  %v4275 = vor.u32 1.1754944e-38, %v4274
  %v4276 = vsel %vm4273, %v4275, %v4271
  %v4277 = vmul.f32 %v4254, %v4276
  %v4278 = vrcp.pop %v4262
  %v4279 = vmul.f32 %v4262, %v4278
  %v4280 = vsub.f32 1.0, %v4279
  %v4281 = vmul.f32 %v4278, %v4280
  %v4282 = vadd.f32 %v4278, %v4281
  %vm4283 = vweird.f32 %v4262
  %vm4284 = vweird.f32 %v4278
  %vm4285 = vmor %vm4283, %vm4284
  %v4286 = vsel %vm4285, %v4278, %v4282
  %v4287 = vand.u32 2147483647, %v4262
  %vm4288 = vcmp.eq.f32.partialorder %v4287, 8.507059e+37
  %v4289 = vand.u32 %v4262, 2147483648
  %v4290 = vor.u32 1.1754944e-38, %v4289
  %v4291 = vsel %vm4288, %v4290, %v4286
  %v4292 = vmul.f32 %v4256, %v4291
  %4293 = vrot.lane.b32.xlu0 %v4077, 88
  %v4294 = vpop.permute.xlu0 %4293
  %4295 = vrot.lane.b32.xlu0 %v4080, 88
  %v4296 = vpop.permute.xlu0 %4295
  %v4300 = vsel %vm297, %v4277, 0
  %v4303 = vsel %vm297, %v4292, 0
  %4305 = vmatpush.msra.mxu0 0.0
  %4306 = vmatpush.msra.mxu0 0.0
  %4307 = vmatpush.msra.mxu0 0.0
  %4308 = vmatpush.msra.mxu0 0.0
  %4309 = vmatpush.msra.mxu0 0.0
  %4310 = vmatpush.msra.mxu0 0.0
  %4311 = vmatpush.msra.mxu0 0.0
  %4312 = vmatpush.msra.mxu0 0.0
  %4313 = vmatpush.msra.mxu0 0.0
  %4314 = vmatpush.msra.mxu0 0.0
  %4315 = vmatpush.msra.mxu0 0.0
  %4316 = vmatpush.msra.mxu0 0.0
  %4317 = vmatpush.msra.mxu0 0.0
  %4318 = vmatpush.msra.mxu0 0.0
  %4319 = vmatpush.msra.mxu0 %v4296
  %4320 = vmatpush.msra.mxu0 %v4294
  %4321 = vmatmul.f32.gmra.mxu0 %v4300
  %v4322 = vpop.f32.mrf.mxu0
  %v4323 = vadd.f32 0.0, %v4322
  %4324 = vmatmul.f32.gmra.mxu0 %v4303
  %v4325 = vpop.f32.mrf.mxu0
  %v4326 = vadd.f32 0.0, %v4325
  %4327 = vdwg.mxu0
  %4328 = vrot.lane.b32.xlu0 %v4082, 112
  %v4329 = vpop.permute.xlu0 %4328
  %4330 = vrot.lane.b32.xlu0 %v4083, 112
  %v4331 = vpop.permute.xlu0 %4330
  %4332 = vrot.lane.b32.xlu0 %v4077, 112
  %v4333 = vpop.permute.xlu0 %4332
  %4334 = vrot.lane.b32.xlu0 %v4080, 112
  %v4335 = vpop.permute.xlu0 %4334
  %v4336 = vsel %vm21, %v4329, 0
  %v4338 = vsel %vm21, %v4331, 0
  %v4340 = vsel %vm21, %v4333, 0
  %v4342 = vsel %vm21, %v4335, 0
  %4344 = vmatpush.xpose.msra.mxu0 0.0
  %4345 = vmatpush.xpose.msra.mxu0 0.0
  %4346 = vmatpush.xpose.msra.mxu0 0.0
  %4347 = vmatpush.xpose.msra.mxu0 0.0
  %4348 = vmatpush.xpose.msra.mxu0 0.0
  %4349 = vmatpush.xpose.msra.mxu0 0.0
  %4350 = vmatpush.xpose.msra.mxu0 0.0
  %4351 = vmatpush.xpose.msra.mxu0 0.0
  %4352 = vmatpush.xpose.msra.mxu0 0.0
  %4353 = vmatpush.xpose.msra.mxu0 0.0
  %4354 = vmatpush.xpose.msra.mxu0 0.0
  %4355 = vmatpush.xpose.msra.mxu0 0.0
  %4356 = vmatpush.xpose.msra.mxu0 0.0
  %4357 = vmatpush.xpose.msra.mxu0 0.0
  %4358 = vmatpush.xpose.msra.mxu0 %v4342
  %4359 = vmatpush.xpose.msra.mxu0 %v4340
  %4360 = vmatmul.f32.gmra.mxu0 %v4336
  %v4361 = vpop.f32.mrf.mxu0
  %v4362 = vadd.f32 0.0, %v4361
  %4363 = vmatmul.f32.gmra.mxu0 %v4338
  %v4364 = vpop.f32.mrf.mxu0
  %v4365 = vadd.f32 0.0, %v4364
  %4366 = vdwg.mxu0
  %v4367 = vsel %vm30, %v4362, -1e+30
  %v4368 = vsel %vm31, %v4365, -1e+30
  %v4369 = vsel %vm297, %v4367, -inf
  %4370 = vmax.xlane.f32.xlu0 %v4369
  %v4371 = vpop.xlane.xlu0 %4370
  %v4372 = vsel %vm297, %v4368, -inf
  %4373 = vmax.xlane.f32.xlu0 %v4372
  %v4374 = vpop.xlane.xlu0 %4373
  %v4375 = vsub.f32 %v4367, %v4371
  %v4376 = vsub.f32 %v4368, %v4374
  %v4377 = vmul.f32 %v4375, 1.442695
  %v4378 = vpow.pop %v4377
  %v4379 = vmul.f32 %v4376, 1.442695
  %v4380 = vpow.pop %v4379
  %v4381 = vsel %vm297, %v4378, 0.0
  %4382 = vadd.xlane.f32.xlu0 %v4381
  %v4383 = vpop.xlane.xlu0 %4382
  %v4384 = vsel %vm297, %v4380, 0.0
  %4385 = vadd.xlane.f32.xlu0 %v4384
  %v4386 = vpop.xlane.xlu0 %4385
  %v4387 = vrcp.pop %v4383
  %v4388 = vmul.f32 %v4383, %v4387
  %v4389 = vsub.f32 1.0, %v4388
  %v4390 = vmul.f32 %v4387, %v4389
  %v4391 = vadd.f32 %v4387, %v4390
  %vm4392 = vweird.f32 %v4383
  %vm4393 = vweird.f32 %v4387
  %vm4394 = vmor %vm4392, %vm4393
  %v4395 = vsel %vm4394, %v4387, %v4391
  %v4396 = vand.u32 2147483647, %v4383
  %vm4397 = vcmp.eq.f32.partialorder %v4396, 8.507059e+37
  %v4398 = vand.u32 %v4383, 2147483648
  %v4399 = vor.u32 1.1754944e-38, %v4398
  %v4400 = vsel %vm4397, %v4399, %v4395
  %v4401 = vmul.f32 %v4378, %v4400
  %v4402 = vrcp.pop %v4386
  %v4403 = vmul.f32 %v4386, %v4402
  %v4404 = vsub.f32 1.0, %v4403
  %v4405 = vmul.f32 %v4402, %v4404
  %v4406 = vadd.f32 %v4402, %v4405
  %vm4407 = vweird.f32 %v4386
  %vm4408 = vweird.f32 %v4402
  %vm4409 = vmor %vm4407, %vm4408
  %v4410 = vsel %vm4409, %v4402, %v4406
  %v4411 = vand.u32 2147483647, %v4386
  %vm4412 = vcmp.eq.f32.partialorder %v4411, 8.507059e+37
  %v4413 = vand.u32 %v4386, 2147483648
  %v4414 = vor.u32 1.1754944e-38, %v4413
  %v4415 = vsel %vm4412, %v4414, %v4410
  %v4416 = vmul.f32 %v4380, %v4415
  %4417 = vrot.lane.b32.xlu0 %v4077, 80
  %v4418 = vpop.permute.xlu0 %4417
  %4419 = vrot.lane.b32.xlu0 %v4080, 80
  %v4420 = vpop.permute.xlu0 %4419
  %v4424 = vsel %vm297, %v4401, 0
  %v4427 = vsel %vm297, %v4416, 0
  %4429 = vmatpush.msra.mxu0 0.0
  %4430 = vmatpush.msra.mxu0 0.0
  %4431 = vmatpush.msra.mxu0 0.0
  %4432 = vmatpush.msra.mxu0 0.0
  %4433 = vmatpush.msra.mxu0 0.0
  %4434 = vmatpush.msra.mxu0 0.0
  %4435 = vmatpush.msra.mxu0 0.0
  %4436 = vmatpush.msra.mxu0 0.0
  %4437 = vmatpush.msra.mxu0 0.0
  %4438 = vmatpush.msra.mxu0 0.0
  %4439 = vmatpush.msra.mxu0 0.0
  %4440 = vmatpush.msra.mxu0 0.0
  %4441 = vmatpush.msra.mxu0 0.0
  %4442 = vmatpush.msra.mxu0 0.0
  %4443 = vmatpush.msra.mxu0 %v4420
  %4444 = vmatpush.msra.mxu0 %v4418
  %4445 = vmatmul.f32.gmra.mxu0 %v4424
  %v4446 = vpop.f32.mrf.mxu0
  %v4447 = vadd.f32 0.0, %v4446
  %4448 = vmatmul.f32.gmra.mxu0 %v4427
  %v4449 = vpop.f32.mrf.mxu0
  %v4450 = vadd.f32 0.0, %v4449
  %4451 = vdwg.mxu0
  %4452 = vrot.lane.b32.xlu0 %v4082, 104
  %v4453 = vpop.permute.xlu0 %4452
  %4454 = vrot.lane.b32.xlu0 %v4083, 104
  %v4455 = vpop.permute.xlu0 %4454
  %4456 = vrot.lane.b32.xlu0 %v4077, 104
  %v4457 = vpop.permute.xlu0 %4456
  %4458 = vrot.lane.b32.xlu0 %v4080, 104
  %v4459 = vpop.permute.xlu0 %4458
  %v4460 = vsel %vm21, %v4453, 0
  %v4462 = vsel %vm21, %v4455, 0
  %v4464 = vsel %vm21, %v4457, 0
  %v4466 = vsel %vm21, %v4459, 0
  %4468 = vmatpush.xpose.msra.mxu0 0.0
  %4469 = vmatpush.xpose.msra.mxu0 0.0
  %4470 = vmatpush.xpose.msra.mxu0 0.0
  %4471 = vmatpush.xpose.msra.mxu0 0.0
  %4472 = vmatpush.xpose.msra.mxu0 0.0
  %4473 = vmatpush.xpose.msra.mxu0 0.0
  %4474 = vmatpush.xpose.msra.mxu0 0.0
  %4475 = vmatpush.xpose.msra.mxu0 0.0
  %4476 = vmatpush.xpose.msra.mxu0 0.0
  %4477 = vmatpush.xpose.msra.mxu0 0.0
  %4478 = vmatpush.xpose.msra.mxu0 0.0
  %4479 = vmatpush.xpose.msra.mxu0 0.0
  %4480 = vmatpush.xpose.msra.mxu0 0.0
  %4481 = vmatpush.xpose.msra.mxu0 0.0
  %4482 = vmatpush.xpose.msra.mxu0 %v4466
  %4483 = vmatpush.xpose.msra.mxu0 %v4464
  %4484 = vmatmul.f32.gmra.mxu0 %v4460
  %v4485 = vpop.f32.mrf.mxu0
  %v4486 = vadd.f32 0.0, %v4485
  %4487 = vmatmul.f32.gmra.mxu0 %v4462
  %v4488 = vpop.f32.mrf.mxu0
  %v4489 = vadd.f32 0.0, %v4488
  %4490 = vdwg.mxu0
  %v4491 = vsel %vm30, %v4486, -1e+30
  %v4492 = vsel %vm31, %v4489, -1e+30
  %v4493 = vsel %vm297, %v4491, -inf
  %4494 = vmax.xlane.f32.xlu0 %v4493
  %v4495 = vpop.xlane.xlu0 %4494
  %v4496 = vsel %vm297, %v4492, -inf
  %4497 = vmax.xlane.f32.xlu0 %v4496
  %v4498 = vpop.xlane.xlu0 %4497
  %v4499 = vsub.f32 %v4491, %v4495
  %v4500 = vsub.f32 %v4492, %v4498
  %v4501 = vmul.f32 %v4499, 1.442695
  %v4502 = vpow.pop %v4501
  %v4503 = vmul.f32 %v4500, 1.442695
  %v4504 = vpow.pop %v4503
  %v4505 = vsel %vm297, %v4502, 0.0
  %4506 = vadd.xlane.f32.xlu0 %v4505
  %v4507 = vpop.xlane.xlu0 %4506
  %v4508 = vsel %vm297, %v4504, 0.0
  %4509 = vadd.xlane.f32.xlu0 %v4508
  %v4510 = vpop.xlane.xlu0 %4509
  %v4511 = vrcp.pop %v4507
  %v4512 = vmul.f32 %v4507, %v4511
  %v4513 = vsub.f32 1.0, %v4512
  %v4514 = vmul.f32 %v4511, %v4513
  %v4515 = vadd.f32 %v4511, %v4514
  %vm4516 = vweird.f32 %v4507
  %vm4517 = vweird.f32 %v4511
  %vm4518 = vmor %vm4516, %vm4517
  %v4519 = vsel %vm4518, %v4511, %v4515
  %v4520 = vand.u32 2147483647, %v4507
  %vm4521 = vcmp.eq.f32.partialorder %v4520, 8.507059e+37
  %v4522 = vand.u32 %v4507, 2147483648
  %v4523 = vor.u32 1.1754944e-38, %v4522
  %v4524 = vsel %vm4521, %v4523, %v4519
  %v4525 = vmul.f32 %v4502, %v4524
  %v4526 = vrcp.pop %v4510
  %v4527 = vmul.f32 %v4510, %v4526
  %v4528 = vsub.f32 1.0, %v4527
  %v4529 = vmul.f32 %v4526, %v4528
  %v4530 = vadd.f32 %v4526, %v4529
  %vm4531 = vweird.f32 %v4510
  %vm4532 = vweird.f32 %v4526
  %vm4533 = vmor %vm4531, %vm4532
  %v4534 = vsel %vm4533, %v4526, %v4530
  %v4535 = vand.u32 2147483647, %v4510
  %vm4536 = vcmp.eq.f32.partialorder %v4535, 8.507059e+37
  %v4537 = vand.u32 %v4510, 2147483648
  %v4538 = vor.u32 1.1754944e-38, %v4537
  %v4539 = vsel %vm4536, %v4538, %v4534
  %v4540 = vmul.f32 %v4504, %v4539
  %4541 = vrot.lane.b32.xlu0 %v4077, 72
  %v4542 = vpop.permute.xlu0 %4541
  %4543 = vrot.lane.b32.xlu0 %v4080, 72
  %v4544 = vpop.permute.xlu0 %4543
  %v4548 = vsel %vm297, %v4525, 0
  %v4551 = vsel %vm297, %v4540, 0
  %4553 = vmatpush.msra.mxu0 0.0
  %4554 = vmatpush.msra.mxu0 0.0
  %4555 = vmatpush.msra.mxu0 0.0
  %4556 = vmatpush.msra.mxu0 0.0
  %4557 = vmatpush.msra.mxu0 0.0
  %4558 = vmatpush.msra.mxu0 0.0
  %4559 = vmatpush.msra.mxu0 0.0
  %4560 = vmatpush.msra.mxu0 0.0
  %4561 = vmatpush.msra.mxu0 0.0
  %4562 = vmatpush.msra.mxu0 0.0
  %4563 = vmatpush.msra.mxu0 0.0
  %4564 = vmatpush.msra.mxu0 0.0
  %4565 = vmatpush.msra.mxu0 0.0
  %4566 = vmatpush.msra.mxu0 0.0
  %4567 = vmatpush.msra.mxu0 %v4544
  %4568 = vmatpush.msra.mxu0 %v4542
  %4569 = vmatmul.f32.gmra.mxu0 %v4548
  %v4570 = vpop.f32.mrf.mxu0
  %v4571 = vadd.f32 0.0, %v4570
  %4572 = vmatmul.f32.gmra.mxu0 %v4551
  %v4573 = vpop.f32.mrf.mxu0
  %v4574 = vadd.f32 0.0, %v4573
  %4575 = vdwg.mxu0
  %4578 = vrot.lane.b32.xlu0 %v4323, 8
  %v4579 = vpop.permute.xlu0 %4578
  %4580 = vrot.lane.b32.xlu0 %v4326, 8
  %v4581 = vpop.permute.xlu0 %4580
  %4586 = vrot.lane.b32.xlu0 %v4447, 16
  %v4587 = vpop.permute.xlu0 %4586
  %4588 = vrot.lane.b32.xlu0 %v4450, 16
  %v4589 = vpop.permute.xlu0 %4588
  %4594 = vrot.lane.b32.xlu0 %v4571, 24
  %v4595 = vpop.permute.xlu0 %4594
  %4596 = vrot.lane.b32.xlu0 %v4574, 24
  %v4597 = vpop.permute.xlu0 %4596
  %v4600 = vsel %vm21, %v4199, %v4579
  %v4601 = vsel %vm21, %v4202, %v4581
  %v4602 = vsel %vm297, %v4600, %v4587
  %v4603 = vsel %vm297, %v4601, %v4589
  %v4604 = vsel %vm781, %v4602, %v4595
  %v4605 = vsel %vm781, %v4603, %v4597
  %v4606 = vperm.slane %v4014, 0
  %4607 = vrot.lane.b32.xlu0 %v4009, 32
  %v4608 = vpop.permute.xlu0 %4607
  %4609 = vrot.lane.b32.xlu0 %v4010, 32
  %v4610 = vpop.permute.xlu0 %4609
  %4611 = vrot.lane.b32.xlu0 %v4011, 32
  %v4612 = vpop.permute.xlu0 %4611
  %4613 = vrot.lane.b32.xlu0 %v4012, 32
  %v4614 = vpop.permute.xlu0 %4613
  %v4620 = vsel %vm71, %v4604, 0
  %v4623 = vsel %vm71, %v4605, 0
  %4625 = vmatpush.msra.mxu0 0.0
  %4626 = vmatpush.msra.mxu0 0.0
  %4627 = vmatpush.msra.mxu0 0.0
  %4628 = vmatpush.msra.mxu0 0.0
  %4629 = vmatpush.msra.mxu0 0.0
  %4630 = vmatpush.msra.mxu0 0.0
  %4631 = vmatpush.msra.mxu0 0.0
  %4632 = vmatpush.msra.mxu0 0.0
  %4633 = vmatpush.msra.mxu0 0.0
  %4634 = vmatpush.msra.mxu0 0.0
  %4635 = vmatpush.msra.mxu0 0.0
  %4636 = vmatpush.msra.mxu0 0.0
  %4637 = vmatpush.msra.mxu0 %v4614
  %4638 = vmatpush.msra.mxu0 %v4612
  %4639 = vmatpush.msra.mxu0 %v4610
  %4640 = vmatpush.msra.mxu0 %v4608
  %4641 = vmatmul.f32.gmra.mxu0 %v4620
  %v4642 = vpop.f32.mrf.mxu0
  %v4643 = vadd.f32 %v4606, %v4642
  %4644 = vmatmul.f32.gmra.mxu0 %v4623
  %v4645 = vpop.f32.mrf.mxu0
  %v4646 = vadd.f32 %v4606, %v4645
  %4647 = vdwg.mxu0
  %v4648 = vadd.f32 %v4643, %v2509
  %v4649 = vadd.f32 %v4646, %v2510
  %v4650 = vld [vmem:[%s3 + $0x22] sm:$0x1]
  %v4651 = vld [vmem:[%s3 + $0x23] sm:$0x1]
  %v4652 = vsel %vm71, %v4648, 0.0
  %4653 = vadd.xlane.f32.xlu0 %v4652
  %v4654 = vpop.xlane.xlu0 %4653
  %v4655 = vsel %vm71, %v4649, 0.0
  %4656 = vadd.xlane.f32.xlu0 %v4655
  %v4657 = vpop.xlane.xlu0 %4656
  %v4658 = vmul.f32 %v4654, %v136
  %v4659 = vmul.f32 %v4657, %v136
  %v4660 = vsub.f32 %v4648, %v4658
  %v4661 = vsub.f32 %v4649, %v4659
  %v4662 = vmul.f32 %v4660, %v4660
  %v4663 = vmul.f32 %v4661, %v4661
  %v4664 = vsel %vm71, %v4662, 0.0
  %4665 = vadd.xlane.f32.xlu0 %v4664
  %v4666 = vpop.xlane.xlu0 %4665
  %v4667 = vsel %vm71, %v4663, 0.0
  %4668 = vadd.xlane.f32.xlu0 %v4667
  %v4669 = vpop.xlane.xlu0 %4668
  %v4670 = vmul.f32 %v4666, %v136
  %v4671 = vmul.f32 %v4669, %v136
  %v4672 = vadd.f32 %v4670, 1e-05
  %v4673 = vadd.f32 %v4671, 1e-05
  %v4674 = vrsqrt.pop %v4672
  %v4675 = vmul.f32 %v4674, %v4672
  %v4676 = vmul.f32 %v4675, %v4674
  %v4677 = vmul.f32 0.5, %v4676
  %v4678 = vsub.f32 1.5, %v4677
  %v4679 = vmul.f32 %v4674, %v4678
  %vm4680 = vweird.f32 %v4672
  %vm4681 = vweird.f32 %v4674
  %vm4682 = vmor %vm4680, %vm4681
  %v4683 = vsel %vm4682, %v4674, %v4679
  %v4684 = vrsqrt.pop %v4673
  %v4685 = vmul.f32 %v4684, %v4673
  %v4686 = vmul.f32 %v4685, %v4684
  %v4687 = vmul.f32 0.5, %v4686
  %v4688 = vsub.f32 1.5, %v4687
  %v4689 = vmul.f32 %v4684, %v4688
  %vm4690 = vweird.f32 %v4673
  %vm4691 = vweird.f32 %v4684
  %vm4692 = vmor %vm4690, %vm4691
  %v4693 = vsel %vm4692, %v4684, %v4689
  %v4694 = vmul.f32 %v4660, %v4683
  %v4695 = vmul.f32 %v4661, %v4693
  %v4696 = vperm.slane %v4650, 0
  %v4697 = vmul.f32 %v4694, %v4696
  %v4698 = vmul.f32 %v4695, %v4696
  %v4699 = vperm.slane %v4651, 0
  %v4700 = vadd.f32 %v4697, %v4699
  %v4701 = vadd.f32 %v4698, %v4699
  %4704 = vrot.lane.b32.xlu0 %v4006, 32
  %v4705 = vpop.permute.xlu0 %4704
  %4706 = vrot.lane.b32.xlu0 %v4007, 32
  %v4707 = vpop.permute.xlu0 %4706
  %v4710 = vsel %vm71, %v4700, %v4705
  %v4711 = vsel %vm71, %v4701, %v4707
  %4712 = vst.msk [vmem:[%s4] sm:$0xff] %vm74, %v4710
  %4713 = vst.msk [vmem:[%s4 + $0x8] sm:$0xff] %vm74, %v4711
  // Predicated region
  $region18: #{timesformer_decoder.1} parent=0 // pred_check
    _
  $region19: #{timesformer_decoder.1} parent=0 // pred_check_branch
    %4715 = sbr.rel (0) target = $region21
  $region20: #{timesformer_decoder.1} parent=0 // pred_region
    _
  $region21: #{timesformer_decoder.1} parent=0 // pred_fallthru
    _
  // Predicated region
  $region22: #{timesformer_decoder.1} parent=0 // pred_check
    _
  $region23: #{timesformer_decoder.1} parent=0 // pred_check_branch
    %4717 = sbr.rel (0) target = $region25
  $region24: #{timesformer_decoder.1} parent=0 // pred_region
    _
  $region25: #{timesformer_decoder.1} parent=0 // pred_fallthru
    _

</llo_original>
